<compile_context>
chip_gen: v6e
topology: v6e:2x2x1
jax: 0.10.0
libtpu: 0.0.40
codegen_flags: <defaults>
</compile_context>

<pallas_src>
import functools

import jax
import jax.numpy as jnp
from jax import lax
from jax.experimental import pallas as pl
from jax.experimental.pallas import tpu as pltpu


# ---------------------------------------------------------------------------
# In-kernel helpers
# ---------------------------------------------------------------------------
def _conv3x3_k9(slab, w_bf16, nrows, W):
    """3x3 conv over a column-padded slab as ONE deep MXU matmul (K = 9*C).

    slab   : (nrows+2, W+2, C) f32 value (row/column halos already zero)
    w_bf16 : (9*C, C) bf16, K ordered (kh, kw, ci)
    returns: (nrows, W, C) f32
    """
    pieces = []
    for kh in range(3):
        for kw in range(3):
            pieces.append(slab[kh:kh + nrows, kw:kw + W, :])
    # One concat + one cast per stage (im2col hoisted out of the kh loop).
    patch = jnp.concatenate(pieces, axis=-1).astype(jnp.bfloat16)  # (nrows, W, 9C)
    return lax.dot_general(
        patch, w_bf16,
        dimension_numbers=(((2,), (0,)), ((), ())),
        preferred_element_type=jnp.float32)


def _fused_block_kernel(x_ref, w1_ref, w2_ref, b1_ref, b2_ref, o_ref,
                        slab_ref, *, H, W, TH, C, NR):
    """One grid step computes TH output rows of one image.

    x_ref   : (1, H, W, C)       f32   full image (resident across row tiles)
    w1_ref  : (9*C, C)           bf16  conv1 weights, BN1 scale folded
    w2_ref  : (9*C, C)           bf16  conv2 weights, BN2 scale folded
    b1_ref  : (1, C)             f32   BN1 shift
    b2_ref  : (1, C)             f32   BN2 shift
    o_ref   : (1, TH, W, C)      f32   output rows [r*TH, r*TH+TH)
    slab_ref: (TH+4, W+2, C)     f32   per-tile padded slab, reused for stage 2
    """
    r = pl.program_id(1)
    r0 = pl.multiple_of(r * TH, TH)
    f32 = jnp.float32

    # ---- per-step padded input slab (row/column zero halos) ---------------
    # slab row p <-> image row r0 - 2 + p ; columns 1..W hold image columns.
    slab_ref[:, 0:1, :] = jnp.zeros((TH + 4, 1, C), f32)
    slab_ref[:, W + 1:W + 2, :] = jnp.zeros((TH + 4, 1, C), f32)

    if NR == 1:
        slab_ref[0:2, 1:W + 1, :] = jnp.zeros((2, W, C), f32)
        slab_ref[TH + 2:TH + 4, 1:W + 1, :] = jnp.zeros((2, W, C), f32)
        slab_ref[2:TH + 2, 1:W + 1, :] = x_ref[0]
    else:
        @pl.when(r == 0)
        def _fill_top():
            slab_ref[0:2, 1:W + 1, :] = jnp.zeros((2, W, C), f32)
            slab_ref[2:TH + 4, 1:W + 1, :] = x_ref[0, 0:TH + 2, :, :]

        @pl.when(r == NR - 1)
        def _fill_bottom():
            slab_ref[TH + 2:TH + 4, 1:W + 1, :] = jnp.zeros((2, W, C), f32)
            slab_ref[0:TH + 2, 1:W + 1, :] = x_ref[0, H - TH - 2:H, :, :]

        if NR >= 3:
            @pl.when((r > 0) & (r < NR - 1))
            def _fill_interior():
                slab_ref[:, 1:W + 1, :] = x_ref[0, pl.ds(r0 - 2, TH + 4), :, :]

    # ---- stage 1: conv1 + folded-BN1 + ReLU for mid rows [r0-1, r0+TH+1) ---
    mid = jnp.maximum(
        _conv3x3_k9(slab_ref[...], w1_ref[...], TH + 2, W) + b1_ref[...], 0.0)

    # Reuse the slab for stage 2 (rows 0..TH+1); column halos are still zero.
    slab_ref[0:TH + 2, 1:W + 1, :] = mid

    # mid rows outside the image must be conv2's zero padding, not relu(b1).
    if NR == 1:
        slab_ref[0:1, 1:W + 1, :] = jnp.zeros((1, W, C), f32)
        slab_ref[TH + 1:TH + 2, 1:W + 1, :] = jnp.zeros((1, W, C), f32)
    else:
        @pl.when(r == 0)
        def _zero_top():
            slab_ref[0:1, 1:W + 1, :] = jnp.zeros((1, W, C), f32)

        @pl.when(r == NR - 1)
        def _zero_bottom():
            slab_ref[TH + 1:TH + 2, 1:W + 1, :] = jnp.zeros((1, W, C), f32)

    # ---- stage 2: conv2 + folded-BN2 + residual add + ReLU ------------------
    acc2 = _conv3x3_k9(slab_ref[0:TH + 2, :, :], w2_ref[...], TH, W)
    identity = x_ref[0, pl.ds(r0, TH), :, :]                       # residual, f32
    out = jnp.maximum(acc2 + b2_ref[...] + identity, 0.0)
    o_ref[0] = out.astype(o_ref.dtype)


# ---------------------------------------------------------------------------
# Wrapper
# ---------------------------------------------------------------------------
def _choose_row_tile(H, W, C, budget_bytes=24 << 20):
    """Largest divisor of H whose estimated VMEM footprint fits the budget."""
    def est(th):
        fixed = 2 * H * W * C * 4            # resident input block (double buffered)
        fixed += 2 * 2 * 9 * C * C * 2       # bf16 weights (x2 tensors, double buffered)
        fixed += 4 * 2 * C * 4               # biases
        per = 2 * th * W * C * 4             # output block (double buffered)
        per += (th + 4) * (W + 2) * C * 4    # slab scratch (f32)
        per += (th + 2) * W * 9 * C * 2      # im2col patch (bf16 value)
        per += (th + 2) * W * C * 4 * 2      # mid / accumulator values
        return fixed + per

    divs = [d for d in range(H, 0, -1) if H % d == 0]
    for d in divs:
        if (d == H or d >= 4) and est(d) <= budget_bytes:
            return d
    for d in reversed(divs):                 # fall back: smallest usable tile
        if d >= 4:
            return d
    return H


def basic_block_quant_forward(x_nchw, params, *, row_tile=None):
    """Forward pass of BasicBlockQuant (stride=1, downsample=None).

    x_nchw: (N, C, H, W) float32 (PyTorch layout). Returns (N, C, H, W).
    """
    x = jnp.transpose(x_nchw, (0, 2, 3, 1))                        # NHWC
    N, H, W, C = x.shape

    eps = 1e-5
    s1 = params["bn1_gamma"] / jnp.sqrt(params["bn1_var"] + eps)
    b1 = params["bn1_beta"] - params["bn1_mean"] * s1
    s2 = params["bn2_gamma"] / jnp.sqrt(params["bn2_var"] + eps)
    b2 = params["bn2_beta"] - params["bn2_mean"] * s2

    # Fold BN scale into the HWIO conv weights (per output channel) and flatten
    # (kh, kw, ci) into K = 9*Cin; cast to bf16 for the MXU.
    w1 = (params["w1"] * s1).reshape(9 * C, C).astype(jnp.bfloat16)
    w2 = (params["w2"] * s2).reshape(9 * C, C).astype(jnp.bfloat16)
    b1f = b1.reshape(1, C).astype(jnp.float32)
    b2f = b2.reshape(1, C).astype(jnp.float32)

    TH = row_tile if row_tile is not None else _choose_row_tile(H, W, C)
    assert H % TH == 0, "row tile must divide H"
    R = H // TH
    assert R == 1 or TH >= 4, "row tile too small for halo handling"

    kernel = functools.partial(_fused_block_kernel, H=H, W=W, TH=TH, C=C, NR=R)

    flops = 2 * (2 * 9 * C * C * H * W) * N                        # two conv stages
    bytes_accessed = int(2 * N * H * W * C * 4
                         + (w1.size + w2.size) * 2 + (b1f.size + b2f.size) * 4)

    out = pl.pallas_call(
        kernel,
        out_shape=jax.ShapeDtypeStruct((N, H, W, C), x.dtype),
        grid=(N, R),
        in_specs=[
            pl.BlockSpec((1, H, W, C), lambda n, r: (n, 0, 0, 0)),   # resident image
            pl.BlockSpec((9 * C, C), lambda n, r: (0, 0)),           # weights resident
            pl.BlockSpec((9 * C, C), lambda n, r: (0, 0)),
            pl.BlockSpec((1, C), lambda n, r: (0, 0)),
            pl.BlockSpec((1, C), lambda n, r: (0, 0)),
        ],
        out_specs=pl.BlockSpec((1, TH, W, C), lambda n, r: (n, r, 0, 0)),
        scratch_shapes=[
            pltpu.VMEM((TH + 4, W + 2, C), jnp.float32),             # per-tile slab
        ],
        compiler_params=pltpu.CompilerParams(
            dimension_semantics=("parallel", "parallel"),
            vmem_limit_bytes=40 * 1024 * 1024),
        cost_estimate=pl.CostEstimate(
            flops=flops, transcendentals=0, bytes_accessed=bytes_accessed),
    )(x, w1, w2, b1f, b2f)

    return jnp.transpose(out, (0, 3, 1, 2))                        # back to NCHW


# ---------------------------------------------------------------------------
# References for correctness checks
# ---------------------------------------------------------------------------
def _reference_f32(x_nchw, params, eps=1e-5):
    """Straightforward f32 reference of the module's forward."""
    x = jnp.transpose(x_nchw, (0, 2, 3, 1))

    def conv(inp, w):
        return lax.conv_general_dilated(
            inp, w, window_strides=(1, 1), padding=((1, 1), (1, 1)),
            dimension_numbers=("NHWC", "HWIO", "NHWC"),
            precision=lax.Precision.HIGHEST)

    def bn(t, g, b, m, v):
        return (t - m) / jnp.sqrt(v + eps) * g + b

    h = jnp.maximum(bn(conv(x, params["w1"]), params["bn1_gamma"],
                       params["bn1_beta"], params["bn1_mean"],
                       params["bn1_var"]), 0.0)
    h = bn(conv(h, params["w2"]), params["bn2_gamma"], params["bn2_beta"],
           params["bn2_mean"], params["bn2_var"])
    out = jnp.maximum(h + x, 0.0)
    return jnp.transpose(out, (0, 3, 1, 2))


def _reference_bf16_matched(x_nchw, params, eps=1e-5):
    """Same precision policy as the kernel: bf16 conv operands (activations and
    BN-folded weights), f32 accumulation/epilogue, stage-1 output rounded to
    bf16 before conv2, residual added in f32."""
    x = jnp.transpose(x_nchw, (0, 2, 3, 1))
    s1 = params["bn1_gamma"] / jnp.sqrt(params["bn1_var"] + eps)
    b1 = params["bn1_beta"] - params["bn1_mean"] * s1
    s2 = params["bn2_gamma"] / jnp.sqrt(params["bn2_var"] + eps)
    b2 = params["bn2_beta"] - params["bn2_mean"] * s2
    w1 = (params["w1"] * s1).astype(jnp.bfloat16)
    w2 = (params["w2"] * s2).astype(jnp.bfloat16)

    def conv(inp_bf16, w_bf16):
        return lax.conv_general_dilated(
            inp_bf16, w_bf16, window_strides=(1, 1), padding=((1, 1), (1, 1)),
            dimension_numbers=("NHWC", "HWIO", "NHWC"),
            preferred_element_type=jnp.float32)

    h = jnp.maximum(conv(x.astype(jnp.bfloat16), w1) + b1, 0.0)
    h = conv(h.astype(jnp.bfloat16), w2) + b2
    out = jnp.maximum(h + x, 0.0)
    return jnp.transpose(out, (0, 3, 1, 2))


# ---------------------------------------------------------------------------
if __name__ == "__main__":
    # Shapes implied by the module: inplanes == planes (no downsample), stride=1.
    N, C, H, W = 2, 4, 16, 16
    key = jax.random.PRNGKey(0)
    k = jax.random.split(key, 8)

    x = jax.random.normal(k[0], (N, C, H, W), jnp.float32)         # NCHW like PyTorch

    # Deterministic synthetic parameters (HWIO conv weights, per-channel BN).
    # TODO(synk): the PyTorch module's FloatFunctional/"Quant" path adds no
    # observers or int8 requantization here; ff.add is a plain float add.
    params = {
        "w1": jax.random.normal(k[1], (3, 3, C, C), jnp.float32) * 0.2,
        "w2": jax.random.normal(k[2], (3, 3, C, C), jnp.float32) * 0.2,
        "bn1_gamma": 1.0 + 0.1 * jax.random.normal(k[3], (C,), jnp.float32),
        "bn1_beta": 0.1 * jax.random.normal(k[4], (C,), jnp.float32),
        "bn1_mean": 0.05 * jax.random.normal(k[5], (C,), jnp.float32),
        "bn1_var": jnp.abs(1.0 + 0.1 * jax.random.normal(k[6], (C,), jnp.float32)),
        "bn2_gamma": 1.0 + 0.1 * jax.random.normal(k[7], (C,), jnp.float32),
        "bn2_beta": jnp.linspace(-0.1, 0.1, C, dtype=jnp.float32),
        "bn2_mean": jnp.linspace(-0.05, 0.05, C, dtype=jnp.float32),
        "bn2_var": jnp.linspace(0.9, 1.1, C, dtype=jnp.float32),
    }

    # Single-tile path (TH == H) and multi-tile path (TH < H) both exercised.
    out = jax.block_until_ready(basic_block_quant_forward(x, params))
    out_tiled = jax.block_until_ready(
        basic_block_quant_forward(x, params, row_tile=8))
    assert out.shape == (N, C, H, W)

    # Tight check vs a reference with the same bf16-operand / f32-accumulate policy.
    ref_m = jax.block_until_ready(_reference_bf16_matched(x, params))
    assert jnp.allclose(out, ref_m, atol=2e-3, rtol=2e-3), "mismatch (single tile)"
    assert jnp.allclose(out_tiled, ref_m, atol=2e-3, rtol=2e-3), "mismatch (row tiled)"

    # Loose sanity check vs a pure-f32 reference (bounds bf16 quantization error).
    ref_f = jax.block_until_ready(_reference_f32(x, params))
    assert jnp.allclose(out, ref_f, atol=1e-1, rtol=1e-1), "mismatch vs f32 reference"

    print("KERNEL_OK")
</pallas_src>

<mosaic_0001>
module attributes {stable_mosaic.version = 11 : i64} {
  func.func @_fused_block_kernel(%arg0: i32, %arg1: i32, %arg2: memref<1x16x16x4xf32, #tpu.memory_space<vmem>>, %arg3: memref<36x4xbf16, #tpu.memory_space<vmem>>, %arg4: memref<36x4xbf16, #tpu.memory_space<vmem>>, %arg5: memref<1x4xf32, #tpu.memory_space<vmem>>, %arg6: memref<1x4xf32, #tpu.memory_space<vmem>>, %arg7: memref<1x16x16x4xf32, #tpu.memory_space<vmem>>, %arg8: memref<20x18x4xf32, #tpu.memory_space<vmem>>) attributes {dimension_semantics = [#tpu.dimension_semantics<parallel>, #tpu.dimension_semantics<parallel>], iteration_bounds = array<i64: 2, 1>, scalar_prefetch = 0 : i64, scratch_operands = 1 : i64, tpu.core_type = #tpu.core_type<tc>, window_params = [{transform_indices = @transform_0, window_bounds = array<i64: 1, 16, 16, 4>}, {pipeline_mode = #tpu.pipeline_mode<synchronous>, transform_indices = @transform_1, window_bounds = array<i64: 36, 4>}, {pipeline_mode = #tpu.pipeline_mode<synchronous>, transform_indices = @transform_2, window_bounds = array<i64: 36, 4>}, {pipeline_mode = #tpu.pipeline_mode<synchronous>, transform_indices = @transform_3, window_bounds = array<i64: 1, 4>}, {pipeline_mode = #tpu.pipeline_mode<synchronous>, transform_indices = @transform_4, window_bounds = array<i64: 1, 4>}, {transform_indices = @transform_5, window_bounds = array<i64: 1, 16, 16, 4>}]} {
    %c16_i32 = arith.constant 16 : i32
    %0 = arith.muli %arg1, %c16_i32 : i32
    %1 = tpu.assume_multiple %0, 16 : i32
    %cst = arith.constant 0.000000e+00 : f32
    %2 = vector.broadcast %cst : f32 to vector<20x1x4xf32>
    %c0 = arith.constant 0 : index
    %c0_0 = arith.constant 0 : index
    %c0_1 = arith.constant 0 : index
    %3 = vector.load %arg8[%c0, %c0_0, %c0_1] : memref<20x18x4xf32, #tpu.memory_space<vmem>>, vector<20x1x4xf32>
    tpu.vector_store %arg8[%c0, %c0_0, %c0_1], %2 {strides = array<i32>} : memref<20x18x4xf32, #tpu.memory_space<vmem>>, vector<20x1x4xf32>,
    %cst_2 = arith.constant 0.000000e+00 : f32
    %4 = vector.broadcast %cst_2 : f32 to vector<20x1x4xf32>
    %c0_3 = arith.constant 0 : index
    %c17 = arith.constant 17 : index
    %c0_4 = arith.constant 0 : index
    %5 = vector.load %arg8[%c0_3, %c17, %c0_4] : memref<20x18x4xf32, #tpu.memory_space<vmem>>, vector<20x1x4xf32>
    tpu.vector_store %arg8[%c0_3, %c17, %c0_4], %4 {strides = array<i32>} : memref<20x18x4xf32, #tpu.memory_space<vmem>>, vector<20x1x4xf32>,
    %cst_5 = arith.constant 0.000000e+00 : f32
    %6 = vector.broadcast %cst_5 : f32 to vector<2x16x4xf32>
    %c0_6 = arith.constant 0 : index
    %c1 = arith.constant 1 : index
    %c0_7 = arith.constant 0 : index
    %7 = vector.load %arg8[%c0_6, %c1, %c0_7] : memref<20x18x4xf32, #tpu.memory_space<vmem>>, vector<2x16x4xf32>
    tpu.vector_store %arg8[%c0_6, %c1, %c0_7], %6 {strides = array<i32>} : memref<20x18x4xf32, #tpu.memory_space<vmem>>, vector<2x16x4xf32>,
    %cst_8 = arith.constant 0.000000e+00 : f32
    %8 = vector.broadcast %cst_8 : f32 to vector<2x16x4xf32>
    %c18 = arith.constant 18 : index
    %c1_9 = arith.constant 1 : index
    %c0_10 = arith.constant 0 : index
    %9 = vector.load %arg8[%c18, %c1_9, %c0_10] : memref<20x18x4xf32, #tpu.memory_space<vmem>>, vector<2x16x4xf32>
    tpu.vector_store %arg8[%c18, %c1_9, %c0_10], %8 {strides = array<i32>} : memref<20x18x4xf32, #tpu.memory_space<vmem>>, vector<2x16x4xf32>,
    %c0_11 = arith.constant 0 : index
    %c0_12 = arith.constant 0 : index
    %c0_13 = arith.constant 0 : index
    %c0_14 = arith.constant 0 : index
    %10 = vector.load %arg2[%c0_11, %c0_12, %c0_13, %c0_14] : memref<1x16x16x4xf32, #tpu.memory_space<vmem>>, vector<1x16x16x4xf32>
    %11 = vector.shape_cast %10 : vector<1x16x16x4xf32> to vector<16x16x4xf32>
    %c2 = arith.constant 2 : index
    %c1_15 = arith.constant 1 : index
    %c0_16 = arith.constant 0 : index
    %12 = vector.load %arg8[%c2, %c1_15, %c0_16] : memref<20x18x4xf32, #tpu.memory_space<vmem>>, vector<16x16x4xf32>
    tpu.vector_store %arg8[%c2, %c1_15, %c0_16], %11 {strides = array<i32>} : memref<20x18x4xf32, #tpu.memory_space<vmem>>, vector<16x16x4xf32>,
    %c0_17 = arith.constant 0 : index
    %c0_18 = arith.constant 0 : index
    %c0_19 = arith.constant 0 : index
    %13 = vector.load %arg8[%c0_17, %c0_18, %c0_19] : memref<20x18x4xf32, #tpu.memory_space<vmem>>, vector<20x18x4xf32>
    %c0_20 = arith.constant 0 : index
    %c0_21 = arith.constant 0 : index
    %14 = vector.load %arg3[%c0_20, %c0_21] : memref<36x4xbf16, #tpu.memory_space<vmem>>, vector<36x4xbf16>
    %15 = vector.extract_strided_slice %13 {offsets = [0, 0, 0], sizes = [18, 16, 4], strides = [1, 1, 1]} : vector<20x18x4xf32> to vector<18x16x4xf32>
    %16 = vector.extract_strided_slice %13 {offsets = [0, 1, 0], sizes = [18, 16, 4], strides = [1, 1, 1]} : vector<20x18x4xf32> to vector<18x16x4xf32>
    %17 = vector.extract_strided_slice %13 {offsets = [0, 2, 0], sizes = [18, 16, 4], strides = [1, 1, 1]} : vector<20x18x4xf32> to vector<18x16x4xf32>
    %18 = vector.extract_strided_slice %13 {offsets = [1, 0, 0], sizes = [18, 16, 4], strides = [1, 1, 1]} : vector<20x18x4xf32> to vector<18x16x4xf32>
    %19 = vector.extract_strided_slice %13 {offsets = [1, 1, 0], sizes = [18, 16, 4], strides = [1, 1, 1]} : vector<20x18x4xf32> to vector<18x16x4xf32>
    %20 = vector.extract_strided_slice %13 {offsets = [1, 2, 0], sizes = [18, 16, 4], strides = [1, 1, 1]} : vector<20x18x4xf32> to vector<18x16x4xf32>
    %21 = vector.extract_strided_slice %13 {offsets = [2, 0, 0], sizes = [18, 16, 4], strides = [1, 1, 1]} : vector<20x18x4xf32> to vector<18x16x4xf32>
    %22 = vector.extract_strided_slice %13 {offsets = [2, 1, 0], sizes = [18, 16, 4], strides = [1, 1, 1]} : vector<20x18x4xf32> to vector<18x16x4xf32>
    %23 = vector.extract_strided_slice %13 {offsets = [2, 2, 0], sizes = [18, 16, 4], strides = [1, 1, 1]} : vector<20x18x4xf32> to vector<18x16x4xf32>
    %24 = tpu.concatenate %15, %16, %17, %18, %19, %20, %21, %22, %23 in 2 : vector<18x16x4xf32>, vector<18x16x4xf32>, vector<18x16x4xf32>, vector<18x16x4xf32>, vector<18x16x4xf32>, vector<18x16x4xf32>, vector<18x16x4xf32>, vector<18x16x4xf32>, vector<18x16x4xf32> -> vector<18x16x36xf32>
    %25 = arith.truncf %24 : vector<18x16x36xf32> to vector<18x16x36xbf16>
    %cst_22 = arith.constant dense<0.000000e+00> : vector<18x16x4xf32>
    %26 = tpu.matmul %25, %14, %cst_22 {dimension_numbers = #tpu.dot_dimension_numbers<[2], [0], [0, 1], [1], [0, 0, 0, 1, 1, 1], [], []>} : vector<18x16x36xbf16>, vector<36x4xbf16>, vector<18x16x4xf32> -> vector<18x16x4xf32>
    %c0_23 = arith.constant 0 : index
    %c0_24 = arith.constant 0 : index
    %27 = vector.load %arg5[%c0_23, %c0_24] : memref<1x4xf32, #tpu.memory_space<vmem>>, vector<1x4xf32>
    %28 = vector.shape_cast %27 : vector<1x4xf32> to vector<1x1x4xf32>
    %29 = vector.broadcast %28 : vector<1x1x4xf32> to vector<18x16x4xf32>
    %30 = arith.addf %26, %29 : vector<18x16x4xf32>
    %cst_25 = arith.constant 0.000000e+00 : f32
    %31 = vector.broadcast %cst_25 : f32 to vector<18x16x4xf32>
    %32 = arith.maximumf %30, %31 : vector<18x16x4xf32>
    %c0_26 = arith.constant 0 : index
    %c1_27 = arith.constant 1 : index
    %c0_28 = arith.constant 0 : index
    %33 = vector.load %arg8[%c0_26, %c1_27, %c0_28] : memref<20x18x4xf32, #tpu.memory_space<vmem>>, vector<18x16x4xf32>
    tpu.vector_store %arg8[%c0_26, %c1_27, %c0_28], %32 {strides = array<i32>} : memref<20x18x4xf32, #tpu.memory_space<vmem>>, vector<18x16x4xf32>,
    %cst_29 = arith.constant 0.000000e+00 : f32
    %34 = vector.broadcast %cst_29 : f32 to vector<1x16x4xf32>
    %c0_30 = arith.constant 0 : index
    %c1_31 = arith.constant 1 : index
    %c0_32 = arith.constant 0 : index
    %35 = vector.load %arg8[%c0_30, %c1_31, %c0_32] : memref<20x18x4xf32, #tpu.memory_space<vmem>>, vector<1x16x4xf32>
    tpu.vector_store %arg8[%c0_30, %c1_31, %c0_32], %34 {strides = array<i32>} : memref<20x18x4xf32, #tpu.memory_space<vmem>>, vector<1x16x4xf32>,
    %cst_33 = arith.constant 0.000000e+00 : f32
    %36 = vector.broadcast %cst_33 : f32 to vector<1x16x4xf32>
    %c17_34 = arith.constant 17 : index
    %c1_35 = arith.constant 1 : index
    %c0_36 = arith.constant 0 : index
    %37 = vector.load %arg8[%c17_34, %c1_35, %c0_36] : memref<20x18x4xf32, #tpu.memory_space<vmem>>, vector<1x16x4xf32>
    tpu.vector_store %arg8[%c17_34, %c1_35, %c0_36], %36 {strides = array<i32>} : memref<20x18x4xf32, #tpu.memory_space<vmem>>, vector<1x16x4xf32>,
    %c0_37 = arith.constant 0 : index
    %c0_38 = arith.constant 0 : index
    %c0_39 = arith.constant 0 : index
    %38 = vector.load %arg8[%c0_37, %c0_38, %c0_39] : memref<20x18x4xf32, #tpu.memory_space<vmem>>, vector<18x18x4xf32>
    %c0_40 = arith.constant 0 : index
    %c0_41 = arith.constant 0 : index
    %39 = vector.load %arg4[%c0_40, %c0_41] : memref<36x4xbf16, #tpu.memory_space<vmem>>, vector<36x4xbf16>
    %40 = vector.extract_strided_slice %38 {offsets = [0, 0, 0], sizes = [16, 16, 4], strides = [1, 1, 1]} : vector<18x18x4xf32> to vector<16x16x4xf32>
    %41 = vector.extract_strided_slice %38 {offsets = [0, 1, 0], sizes = [16, 16, 4], strides = [1, 1, 1]} : vector<18x18x4xf32> to vector<16x16x4xf32>
    %42 = vector.extract_strided_slice %38 {offsets = [0, 2, 0], sizes = [16, 16, 4], strides = [1, 1, 1]} : vector<18x18x4xf32> to vector<16x16x4xf32>
    %43 = vector.extract_strided_slice %38 {offsets = [1, 0, 0], sizes = [16, 16, 4], strides = [1, 1, 1]} : vector<18x18x4xf32> to vector<16x16x4xf32>
    %44 = vector.extract_strided_slice %38 {offsets = [1, 1, 0], sizes = [16, 16, 4], strides = [1, 1, 1]} : vector<18x18x4xf32> to vector<16x16x4xf32>
    %45 = vector.extract_strided_slice %38 {offsets = [1, 2, 0], sizes = [16, 16, 4], strides = [1, 1, 1]} : vector<18x18x4xf32> to vector<16x16x4xf32>
    %46 = vector.extract_strided_slice %38 {offsets = [2, 0, 0], sizes = [16, 16, 4], strides = [1, 1, 1]} : vector<18x18x4xf32> to vector<16x16x4xf32>
    %47 = vector.extract_strided_slice %38 {offsets = [2, 1, 0], sizes = [16, 16, 4], strides = [1, 1, 1]} : vector<18x18x4xf32> to vector<16x16x4xf32>
    %48 = vector.extract_strided_slice %38 {offsets = [2, 2, 0], sizes = [16, 16, 4], strides = [1, 1, 1]} : vector<18x18x4xf32> to vector<16x16x4xf32>
    %49 = tpu.concatenate %40, %41, %42, %43, %44, %45, %46, %47, %48 in 2 : vector<16x16x4xf32>, vector<16x16x4xf32>, vector<16x16x4xf32>, vector<16x16x4xf32>, vector<16x16x4xf32>, vector<16x16x4xf32>, vector<16x16x4xf32>, vector<16x16x4xf32>, vector<16x16x4xf32> -> vector<16x16x36xf32>
    %50 = arith.truncf %49 : vector<16x16x36xf32> to vector<16x16x36xbf16>
    %cst_42 = arith.constant dense<0.000000e+00> : vector<16x16x4xf32>
    %51 = tpu.matmul %50, %39, %cst_42 {dimension_numbers = #tpu.dot_dimension_numbers<[2], [0], [0, 1], [1], [0, 0, 0, 1, 1, 1], [], []>} : vector<16x16x36xbf16>, vector<36x4xbf16>, vector<16x16x4xf32> -> vector<16x16x4xf32>
    %c0_43 = arith.constant 0 : index
    %52 = arith.index_cast %1 : i32 to index
    %c0_44 = arith.constant 0 : index
    %c0_45 = arith.constant 0 : index
    %53 = vector.load %arg2[%c0_43, %52, %c0_44, %c0_45] : memref<1x16x16x4xf32, #tpu.memory_space<vmem>>, vector<1x16x16x4xf32>
    %54 = vector.shape_cast %53 : vector<1x16x16x4xf32> to vector<16x16x4xf32>
    %c0_46 = arith.constant 0 : index
    %c0_47 = arith.constant 0 : index
    %55 = vector.load %arg6[%c0_46, %c0_47] : memref<1x4xf32, #tpu.memory_space<vmem>>, vector<1x4xf32>
    %56 = vector.shape_cast %55 : vector<1x4xf32> to vector<1x1x4xf32>
    %57 = vector.broadcast %56 : vector<1x1x4xf32> to vector<16x16x4xf32>
    %58 = arith.addf %51, %57 : vector<16x16x4xf32>
    %59 = arith.addf %58, %54 : vector<16x16x4xf32>
    %cst_48 = arith.constant 0.000000e+00 : f32
    %60 = vector.broadcast %cst_48 : f32 to vector<16x16x4xf32>
    %61 = arith.maximumf %59, %60 : vector<16x16x4xf32>
    %c0_49 = arith.constant 0 : index
    %c0_50 = arith.constant 0 : index
    %c0_51 = arith.constant 0 : index
    %c0_52 = arith.constant 0 : index
    %62 = vector.load %arg7[%c0_49, %c0_50, %c0_51, %c0_52] : memref<1x16x16x4xf32, #tpu.memory_space<vmem>>, vector<1x16x16x4xf32>
    %63 = vector.shape_cast %62 : vector<1x16x16x4xf32> to vector<16x16x4xf32>
    %64 = vector.shape_cast %61 : vector<16x16x4xf32> to vector<1x16x16x4xf32>
    tpu.vector_store %arg7[%c0_49, %c0_50, %c0_51, %c0_52], %64 {strides = array<i32>} : memref<1x16x16x4xf32, #tpu.memory_space<vmem>>, vector<1x16x16x4xf32>,
    return
  }
  func.func @transform_0(%arg0: i32, %arg1: i32) -> (i32, i32, i32, i32) {
    %c0_i32 = arith.constant 0 : i32
    %c0_i32_0 = arith.constant 0 : i32
    %c0_i32_1 = arith.constant 0 : i32
    %c0_i32_2 = arith.constant 0 : i32
    return %arg0, %c0_i32, %c0_i32_0, %c0_i32_1 : i32, i32, i32, i32
  }
  func.func @transform_1(%arg0: i32, %arg1: i32) -> (i32, i32) {
    %c0_i32 = arith.constant 0 : i32
    %c0_i32_0 = arith.constant 0 : i32
    %c0_i32_1 = arith.constant 0 : i32
    return %c0_i32, %c0_i32_0 : i32, i32
  }
  func.func @transform_2(%arg0: i32, %arg1: i32) -> (i32, i32) {
    %c0_i32 = arith.constant 0 : i32
    %c0_i32_0 = arith.constant 0 : i32
    %c0_i32_1 = arith.constant 0 : i32
    return %c0_i32, %c0_i32_0 : i32, i32
  }
  func.func @transform_3(%arg0: i32, %arg1: i32) -> (i32, i32) {
    %c0_i32 = arith.constant 0 : i32
    %c0_i32_0 = arith.constant 0 : i32
    %c0_i32_1 = arith.constant 0 : i32
    return %c0_i32, %c0_i32_0 : i32, i32
  }
  func.func @transform_4(%arg0: i32, %arg1: i32) -> (i32, i32) {
    %c0_i32 = arith.constant 0 : i32
    %c0_i32_0 = arith.constant 0 : i32
    %c0_i32_1 = arith.constant 0 : i32
    return %c0_i32, %c0_i32_0 : i32, i32
  }
  func.func @transform_5(%arg0: i32, %arg1: i32) -> (i32, i32, i32, i32) {
    %c0_i32 = arith.constant 0 : i32
    %c0_i32_0 = arith.constant 0 : i32
    %c0_i32_1 = arith.constant 0 : i32
    return %arg0, %arg1, %c0_i32, %c0_i32_0 : i32, i32, i32, i32
  }
}

</mosaic_0001>

<llo_original>
// kernel: tpu_custom_call.1
$region0: #{tpu_custom_call.1}
  #allocation0 [shape = 'u32[]', space=smem, size = 0x4, offset = 0x4, fixed_abs, tag = 'smem constant byte address 0x4 - core index']
  #allocation1 [shape = 'u32[144,128]{1,0:T(1,128)}', space=vmem, size = 0x12000, scoped, tag = 'internal scratch']
  #allocation2 [shape = 'f32[20,18,4]{2,1,0:T(8,128)}', space=vmem, size = 0x3c000, scoped, tag = 'scratch operand']
  %s0 = inlined_call_operand.vmem [shape: f32[2,16,16,4], index: 0, kind: input, shape index: {}]
  %s1 = inlined_call_operand.vmem [shape: bf16[36,4], index: 1, kind: input, shape index: {}]
  %s2 = inlined_call_operand.vmem [shape: bf16[36,4], index: 2, kind: input, shape index: {}]
  %s3 = inlined_call_operand.vmem [shape: f32[1,4], index: 3, kind: input, shape index: {}]
  %s4 = inlined_call_operand.vmem [shape: f32[1,4], index: 4, kind: input, shape index: {}]
  %s5 = inlined_call_operand.vmem [shape: f32[2,16,16,4], index: 5, kind: output, shape index: {}]
  %s6 = sld [smem:[#allocation0]]
  $region53: #{tpu_custom_call.1} parent=0
    _
  %s8 = ssub.s32 1, %s6
  %s9 = scalar_select 0, %s8, %s6
  loop: start=0, step=1, limit=4
  $region2: #{tpu_custom_call.1} parent=0 // loop_pre_header
    _
  $region3: #{tpu_custom_call.1} parent=0 // loop_header
    %s11 = sphi 0, %s15
    %p12 = scmp.ge.s32.totalorder %s11, 4
    %s18 = sphi 0, %s30
    %s19 = sphi 0, %s26
    %s20 = sphi 0, %s18
    %s21 = sphi 0, %s19
    %s22 = sphi 0, %s20
    %s23 = sphi 0, %s21
    %s33 = sphi 0, %s35
    %s36 = sphi 0, %s33
    %s37 = sphi 0, %s36
    %s53 = sphi 0, %s37
    %s57 = sphi 0, %s57
    %s59 = sphi 0, %s57
    %s60 = sphi 0, %s59
    %s74 = sphi 0, %s60
    %s78 = sphi 0, %s78
    %s80 = sphi 0, %s78
    %s81 = sphi 0, %s80
    %s95 = sphi 0, %s81
    %s99 = sphi 0, %s99
    %s101 = sphi 0, %s99
    %s102 = sphi 0, %s101
    %s116 = sphi 0, %s102
    %s120 = sphi 0, %s120
    %s122 = sphi 0, %s120
    %s123 = sphi 0, %s122
    %s137 = sphi 0, %s123
    %s145 = sphi 0, %s147
    %s148 = sphi 0, %s145
    %s149 = sphi 0, %s148
    %s165 = sphi 0, %s149
  $region4: #{tpu_custom_call.1} parent=0 // loop_header_branch
    %14 = sbr.rel (%p12) target = $region8
  $region5: #{tpu_custom_call.1} parent=0 // loop_body
    %s16 = ssub.s32 %s11, 1
    %s17 = ssub.s32 %s11, 2
    %s24 = sadd.s32 1, %s19
    %p25 = scmp.ge.s32.totalorder %s24, 1
    %s26 = scalar_select %p25, 0, %s24
    %s27 = sadd.s32 1, %s18
    %s28 = scalar_select %p25, %s27, %s18
    %p29 = scmp.ge.s32.totalorder %s28, 2
    %s30 = scalar_select %p29, 0, %s28
    %s31 = ssub.s32 %s18, %s30
    %p32 = scmp.eq.s32.totalorder %s31, 0
    %s34 = sadd.s32 %s33, 1
    %s35 = scalar_select %p32, %s33, %s34
    %p38 = pneg %p32
    %p39 = scmp.eq.s32.totalorder %s11, 1
    %p40 = por %p38, %p39
    %p41 = scmp.ne.s32.totalorder %s33, %s36
    %p42 = scmp.eq.s32.totalorder %s11, 0
    %p43 = por %p41, %p42
    %p44 = scmp.ne.s32.totalorder %s33, %s36
    %p45 = scmp.eq.s32.totalorder %s16, 1
    %p46 = por %p44, %p45
    %p47 = scmp.ne.s32.totalorder %s36, %s37
    %p48 = scmp.eq.s32.totalorder %s16, 0
    %p49 = por %p47, %p48
    %p50 = scmp.ne.s32.totalorder %s36, %s37
    %p51 = scmp.eq.s32.totalorder %s17, 1
    %p52 = por %p50, %p51
    %p54 = scmp.ne.s32.totalorder %s37, %s53
    %p55 = scmp.eq.s32.totalorder %s17, 0
    %p56 = por %p54, %p55
    %s58 = sadd.s32 %s57, 1
    %p61 = scmp.eq.s32.totalorder %s11, 1
    %p62 = scmp.ne.s32.totalorder %s57, %s59
    %p63 = scmp.eq.s32.totalorder %s11, 0
    %p64 = por %p62, %p63
    %p65 = scmp.ne.s32.totalorder %s57, %s59
    %p66 = scmp.eq.s32.totalorder %s16, 1
    %p67 = por %p65, %p66
    %p68 = scmp.ne.s32.totalorder %s59, %s60
    %p69 = scmp.eq.s32.totalorder %s16, 0
    %p70 = por %p68, %p69
    %p71 = scmp.ne.s32.totalorder %s59, %s60
    %p72 = scmp.eq.s32.totalorder %s17, 1
    %p73 = por %p71, %p72
    %p75 = scmp.ne.s32.totalorder %s60, %s74
    %p76 = scmp.eq.s32.totalorder %s17, 0
    %p77 = por %p75, %p76
    %s79 = sadd.s32 %s78, 1
    %p82 = scmp.eq.s32.totalorder %s11, 1
    %p83 = scmp.ne.s32.totalorder %s78, %s80
    %p84 = scmp.eq.s32.totalorder %s11, 0
    %p85 = por %p83, %p84
    %p86 = scmp.ne.s32.totalorder %s78, %s80
    %p87 = scmp.eq.s32.totalorder %s16, 1
    %p88 = por %p86, %p87
    %p89 = scmp.ne.s32.totalorder %s80, %s81
    %p90 = scmp.eq.s32.totalorder %s16, 0
    %p91 = por %p89, %p90
    %p92 = scmp.ne.s32.totalorder %s80, %s81
    %p93 = scmp.eq.s32.totalorder %s17, 1
    %p94 = por %p92, %p93
    %p96 = scmp.ne.s32.totalorder %s81, %s95
    %p97 = scmp.eq.s32.totalorder %s17, 0
    %p98 = por %p96, %p97
    %s100 = sadd.s32 %s99, 1
    %p103 = scmp.eq.s32.totalorder %s11, 1
    %p104 = scmp.ne.s32.totalorder %s99, %s101
    %p105 = scmp.eq.s32.totalorder %s11, 0
    %p106 = por %p104, %p105
    %p107 = scmp.ne.s32.totalorder %s99, %s101
    %p108 = scmp.eq.s32.totalorder %s16, 1
    %p109 = por %p107, %p108
    %p110 = scmp.ne.s32.totalorder %s101, %s102
    %p111 = scmp.eq.s32.totalorder %s16, 0
    %p112 = por %p110, %p111
    %p113 = scmp.ne.s32.totalorder %s101, %s102
    %p114 = scmp.eq.s32.totalorder %s17, 1
    %p115 = por %p113, %p114
    %p117 = scmp.ne.s32.totalorder %s102, %s116
    %p118 = scmp.eq.s32.totalorder %s17, 0
    %p119 = por %p117, %p118
    %s121 = sadd.s32 %s120, 1
    %p124 = scmp.eq.s32.totalorder %s11, 1
    %p125 = scmp.ne.s32.totalorder %s120, %s122
    %p126 = scmp.eq.s32.totalorder %s11, 0
    %p127 = por %p125, %p126
    %p128 = scmp.ne.s32.totalorder %s120, %s122
    %p129 = scmp.eq.s32.totalorder %s16, 1
    %p130 = por %p128, %p129
    %p131 = scmp.ne.s32.totalorder %s122, %s123
    %p132 = scmp.eq.s32.totalorder %s16, 0
    %p133 = por %p131, %p132
    %p134 = scmp.ne.s32.totalorder %s122, %s123
    %p135 = scmp.eq.s32.totalorder %s17, 1
    %p136 = por %p134, %p135
    %p138 = scmp.ne.s32.totalorder %s123, %s137
    %p139 = scmp.eq.s32.totalorder %s17, 0
    %p140 = por %p138, %p139
    %s141 = ssub.s32 %s18, %s30
    %s142 = ssub.s32 %s19, %s26
    %s143 = sor.u32 %s141, %s142
    %p144 = scmp.eq.s32.totalorder %s143, 0
    %s146 = sadd.s32 %s145, 1
    %s147 = scalar_select %p144, %s145, %s146
    %p150 = pneg %p144
    %p151 = scmp.eq.s32.totalorder %s11, 1
    %p152 = por %p150, %p151
    %p153 = scmp.ne.s32.totalorder %s145, %s148
    %p154 = scmp.eq.s32.totalorder %s11, 0
    %p155 = por %p153, %p154
    %p156 = scmp.ne.s32.totalorder %s145, %s148
    %p157 = scmp.eq.s32.totalorder %s16, 1
    %p158 = por %p156, %p157
    %p159 = scmp.ne.s32.totalorder %s148, %s149
    %p160 = scmp.eq.s32.totalorder %s16, 0
    %p161 = por %p159, %p160
    %p162 = scmp.ne.s32.totalorder %s148, %s149
    %p163 = scmp.eq.s32.totalorder %s17, 1
    %p164 = por %p162, %p163
    %p166 = scmp.ne.s32.totalorder %s149, %s165
    %p167 = scmp.eq.s32.totalorder %s17, 0
    %p168 = por %p166, %p167
    %p169 = scmp.le.s32.totalorder 1, %s11
    %p170 = scmp.lt.s32.totalorder %s11, 3
    %p171 = pnand %p169, %p170
    %p172 = pneg %p171
    // Predicated region
    $region9: #{tpu_custom_call.1} parent=5 // pred_check
      _
    $region10: #{tpu_custom_call.1} parent=5 // pred_check_branch
      %174 = sbr.rel (%p171) target = $region12
    $region11: #{tpu_custom_call.1} parent=5 // pred_region
      %s175 = ssub.s32 %s11, 1
      // Predicated region
      $region13: #{tpu_custom_call.1} parent=11 // pred_check
        %p176 = pneg %p70
      $region14: #{tpu_custom_call.1} parent=11 // pred_check_branch
        %178 = sbr.rel (%p176) target = $region16
      $region15: #{tpu_custom_call.1} parent=11 // pred_region
        _
      $region16: #{tpu_custom_call.1} parent=11 // pred_fallthru
        _
      // Predicated region
      $region17: #{tpu_custom_call.1} parent=11 // pred_check
        %p179 = pneg %p91
      $region18: #{tpu_custom_call.1} parent=11 // pred_check_branch
        %181 = sbr.rel (%p179) target = $region20
      $region19: #{tpu_custom_call.1} parent=11 // pred_region
        _
      $region20: #{tpu_custom_call.1} parent=11 // pred_fallthru
        _
      // Predicated region
      $region21: #{tpu_custom_call.1} parent=11 // pred_check
        %p182 = pneg %p112
      $region22: #{tpu_custom_call.1} parent=11 // pred_check_branch
        %184 = sbr.rel (%p182) target = $region24
      $region23: #{tpu_custom_call.1} parent=11 // pred_region
        _
      $region24: #{tpu_custom_call.1} parent=11 // pred_fallthru
        _
      // Predicated region
      $region25: #{tpu_custom_call.1} parent=11 // pred_check
        %p185 = pneg %p133
      $region26: #{tpu_custom_call.1} parent=11 // pred_check_branch
        %187 = sbr.rel (%p185) target = $region28
      $region27: #{tpu_custom_call.1} parent=11 // pred_region
        _
      $region28: #{tpu_custom_call.1} parent=11 // pred_fallthru
        _
    $region12: #{tpu_custom_call.1} parent=5 // pred_fallthru
      _
    %p188 = scmp.lt.s32.totalorder %s11, 2
    // Predicated region
    $region29: #{tpu_custom_call.1} parent=5 // pred_check
      %p189 = pneg %p188
    $region30: #{tpu_custom_call.1} parent=5 // pred_check_branch
      %191 = sbr.rel (%p189) target = $region32
    $region31: #{tpu_custom_call.1} parent=5 // pred_region
      // Predicated region
      $region33: #{tpu_custom_call.1} parent=31 // pred_check
        %p192 = pneg %p43
      $region34: #{tpu_custom_call.1} parent=31 // pred_check_branch
        %194 = sbr.rel (%p192) target = $region36
      $region35: #{tpu_custom_call.1} parent=31 // pred_region
        %p195 = scmp.lt.s32.totalorder %s18, 1
        %s196 = scalar_select %p195, %s18, 1
        %s197 = smul.addr %s196, 32
        %s198 = smul.addr %s197, 8
        %s199 = scalar_lea.vmem %s0, %s198
      $region36: #{tpu_custom_call.1} parent=31 // pred_fallthru
        _
    $region32: #{tpu_custom_call.1} parent=5 // pred_fallthru
      _
    %p200 = scmp.le.s32.totalorder 1, %s11
    %p201 = scmp.lt.s32.totalorder %s11, 3
    %p202 = pnand %p200, %p201
    %p203 = pneg %p202
    // Predicated region
    $region37: #{tpu_custom_call.1} parent=5 // pred_check
      _
    $region38: #{tpu_custom_call.1} parent=5 // pred_check_branch
      %205 = sbr.rel (%p202) target = $region40
    $region39: #{tpu_custom_call.1} parent=5 // pred_region
      %s206 = ssub.s32 %s11, 1
      %p207 = scmp.lt.s32.totalorder %s20, 1
      %s208 = scalar_select %p207, %s20, 1
      %s209 = smul.addr %s208, 32
      %s210 = smul.addr %s209, 8
      %s211 = scalar_lea.vmem %s0, %s210
      %p212 = pneg %p49
      %p213 = pneg %p46
      %p214 = pneg %p70
      %p215 = pneg %p67
      %p216 = pneg %p91
      %p217 = pneg %p88
      %p218 = pneg %p112
      %p219 = pneg %p109
      %p220 = pneg %p133
      %p221 = pneg %p130
      %p222 = pneg %p161
      %p223 = pneg %p158
      %s224 = smul.u32 16, %s21
      %p225 = scmp.lt.s32.totalorder %s20, 1
      %s226 = scalar_select %p225, %s20, 1
      %p227 = scmp.lt.s32.totalorder %s224, 15
      %s228 = scalar_select %p227, %s224, 15
      %s229 = smul.addr %s228, 2
      %s230 = smul.addr %s226, 32
      %s231 = sadd.s32 %s229, %s230
      %s232 = smul.addr %s231, 8
      %s233 = scalar_lea.vmem %s5, %s232
      %p234 = scmp.lt.s32.totalorder %s20, 1
      %s235 = scalar_select %p234, %s20, 1
      %s236 = smul.addr %s235, 32
      %s237 = smul.addr %s236, 8
      %s238 = scalar_lea.vmem %s0, %s237
      %s239 = smul.u32 16, %s21
      %p240 = scmp.lt.s32.totalorder %s20, 1
      %s241 = scalar_select %p240, %s20, 1
      %p242 = scmp.lt.s32.totalorder %s239, 15
      %s243 = scalar_select %p242, %s239, 15
      %s244 = smul.addr %s243, 2
      %s245 = smul.addr %s241, 32
      %s246 = sadd.s32 %s244, %s245
      %s247 = smul.addr %s246, 8
      %s248 = scalar_lea.vmem %s5, %s247
      %s249 = smul.u32 16, %s21
      %s251 = smul.u32 %s21, 16
      %vm252 = vcmask 24576
      %253 = vst.msk [vmem:[#allocation2] sm:$0x1] %vm252, 0.0
      %254 = vst.msk [vmem:[#allocation2 + $0x18] sm:$0x1] %vm252, 0.0
      %255 = vst.msk [vmem:[#allocation2 + $0x30] sm:$0x1] %vm252, 0.0
      %256 = vst.msk [vmem:[#allocation2 + $0x48] sm:$0x1] %vm252, 0.0
      %257 = vst.msk [vmem:[#allocation2 + $0x60] sm:$0x1] %vm252, 0.0
      %258 = vst.msk [vmem:[#allocation2 + $0x78] sm:$0x1] %vm252, 0.0
      %259 = vst.msk [vmem:[#allocation2 + $0x90] sm:$0x1] %vm252, 0.0
      %260 = vst.msk [vmem:[#allocation2 + $0xa8] sm:$0x1] %vm252, 0.0
      %261 = vst.msk [vmem:[#allocation2 + $0xc0] sm:$0x1] %vm252, 0.0
      %262 = vst.msk [vmem:[#allocation2 + $0xd8] sm:$0x1] %vm252, 0.0
      %263 = vst.msk [vmem:[#allocation2 + $0xf0] sm:$0x1] %vm252, 0.0
      %264 = vst.msk [vmem:[#allocation2 + $0x108] sm:$0x1] %vm252, 0.0
      %265 = vst.msk [vmem:[#allocation2 + $0x120] sm:$0x1] %vm252, 0.0
      %266 = vst.msk [vmem:[#allocation2 + $0x138] sm:$0x1] %vm252, 0.0
      %267 = vst.msk [vmem:[#allocation2 + $0x150] sm:$0x1] %vm252, 0.0
      %268 = vst.msk [vmem:[#allocation2 + $0x168] sm:$0x1] %vm252, 0.0
      %269 = vst.msk [vmem:[#allocation2 + $0x180] sm:$0x1] %vm252, 0.0
      %270 = vst.msk [vmem:[#allocation2 + $0x198] sm:$0x1] %vm252, 0.0
      %271 = vst.msk [vmem:[#allocation2 + $0x1b0] sm:$0x1] %vm252, 0.0
      %272 = vst.msk [vmem:[#allocation2 + $0x1c8] sm:$0x1] %vm252, 0.0
      %273 = vst.msk [vmem:[#allocation2 + $0x11] sm:$0x1] %vm252, 0.0
      %274 = vst.msk [vmem:[#allocation2 + $0x29] sm:$0x1] %vm252, 0.0
      %275 = vst.msk [vmem:[#allocation2 + $0x41] sm:$0x1] %vm252, 0.0
      %276 = vst.msk [vmem:[#allocation2 + $0x59] sm:$0x1] %vm252, 0.0
      %277 = vst.msk [vmem:[#allocation2 + $0x71] sm:$0x1] %vm252, 0.0
      %278 = vst.msk [vmem:[#allocation2 + $0x89] sm:$0x1] %vm252, 0.0
      %279 = vst.msk [vmem:[#allocation2 + $0xa1] sm:$0x1] %vm252, 0.0
      %280 = vst.msk [vmem:[#allocation2 + $0xb9] sm:$0x1] %vm252, 0.0
      %281 = vst.msk [vmem:[#allocation2 + $0xd1] sm:$0x1] %vm252, 0.0
      %282 = vst.msk [vmem:[#allocation2 + $0xe9] sm:$0x1] %vm252, 0.0
      %283 = vst.msk [vmem:[#allocation2 + $0x101] sm:$0x1] %vm252, 0.0
      %284 = vst.msk [vmem:[#allocation2 + $0x119] sm:$0x1] %vm252, 0.0
      %285 = vst.msk [vmem:[#allocation2 + $0x131] sm:$0x1] %vm252, 0.0
      %286 = vst.msk [vmem:[#allocation2 + $0x149] sm:$0x1] %vm252, 0.0
      %287 = vst.msk [vmem:[#allocation2 + $0x161] sm:$0x1] %vm252, 0.0
      %288 = vst.msk [vmem:[#allocation2 + $0x179] sm:$0x1] %vm252, 0.0
      %289 = vst.msk [vmem:[#allocation2 + $0x191] sm:$0x1] %vm252, 0.0
      %290 = vst.msk [vmem:[#allocation2 + $0x1a9] sm:$0x1] %vm252, 0.0
      %291 = vst.msk [vmem:[#allocation2 + $0x1c1] sm:$0x1] %vm252, 0.0
      %292 = vst.msk [vmem:[#allocation2 + $0x1d9] sm:$0x1] %vm252, 0.0
      %vm293 = vcmask 31744
      %294 = vst.msk [vmem:[#allocation2 + $0x1] sm:$0xff] %vm293, 0.0
      %295 = vst.msk [vmem:[#allocation2 + $0x9] sm:$0xff] %vm293, 0.0
      %296 = vst.msk [vmem:[#allocation2 + $0x19] sm:$0xff] %vm293, 0.0
      %297 = vst.msk [vmem:[#allocation2 + $0x21] sm:$0xff] %vm293, 0.0
      %s298 = scalar_lea.vmem [#allocation2], 432
      %299 = vst.msk [vmem:[%s298 + $0x1] sm:$0xff] %vm293, 0.0
      %300 = vst.msk [vmem:[%s298 + $0x9] sm:$0xff] %vm293, 0.0
      %301 = vst.msk [vmem:[%s298 + $0x19] sm:$0xff] %vm293, 0.0
      %302 = vst.msk [vmem:[%s298 + $0x21] sm:$0xff] %vm293, 0.0
      %v303 = vld [vmem:[%s238] sm:$0xff]
      %v304 = vld [vmem:[%s238 + $0x8] sm:$0xff]
      %v305 = vld [vmem:[%s238 + $0x10] sm:$0xff]
      %v306 = vld [vmem:[%s238 + $0x18] sm:$0xff]
      %v307 = vld [vmem:[%s238 + $0x20] sm:$0xff]
      %v308 = vld [vmem:[%s238 + $0x28] sm:$0xff]
      %v309 = vld [vmem:[%s238 + $0x30] sm:$0xff]
      %v310 = vld [vmem:[%s238 + $0x38] sm:$0xff]
      %v311 = vld [vmem:[%s238 + $0x40] sm:$0xff]
      %v312 = vld [vmem:[%s238 + $0x48] sm:$0xff]
      %v313 = vld [vmem:[%s238 + $0x50] sm:$0xff]
      %v314 = vld [vmem:[%s238 + $0x58] sm:$0xff]
      %v315 = vld [vmem:[%s238 + $0x60] sm:$0xff]
      %v316 = vld [vmem:[%s238 + $0x68] sm:$0xff]
      %v317 = vld [vmem:[%s238 + $0x70] sm:$0xff]
      %v318 = vld [vmem:[%s238 + $0x78] sm:$0xff]
      %v319 = vld [vmem:[%s238 + $0x80] sm:$0xff]
      %v320 = vld [vmem:[%s238 + $0x88] sm:$0xff]
      %v321 = vld [vmem:[%s238 + $0x90] sm:$0xff]
      %v322 = vld [vmem:[%s238 + $0x98] sm:$0xff]
      %v323 = vld [vmem:[%s238 + $0xa0] sm:$0xff]
      %v324 = vld [vmem:[%s238 + $0xa8] sm:$0xff]
      %v325 = vld [vmem:[%s238 + $0xb0] sm:$0xff]
      %v326 = vld [vmem:[%s238 + $0xb8] sm:$0xff]
      %v327 = vld [vmem:[%s238 + $0xc0] sm:$0xff]
      %v328 = vld [vmem:[%s238 + $0xc8] sm:$0xff]
      %v329 = vld [vmem:[%s238 + $0xd0] sm:$0xff]
      %v330 = vld [vmem:[%s238 + $0xd8] sm:$0xff]
      %v331 = vld [vmem:[%s238 + $0xe0] sm:$0xff]
      %v332 = vld [vmem:[%s238 + $0xe8] sm:$0xff]
      %v333 = vld [vmem:[%s238 + $0xf0] sm:$0xff]
      %v334 = vld [vmem:[%s238 + $0xf8] sm:$0xff]
      %s335 = scalar_lea.vmem [#allocation2], 48
      %336 = vst.msk [vmem:[%s335 + $0x1] sm:$0xff] %vm293, %v303
      %337 = vst.msk [vmem:[%s335 + $0x9] sm:$0xff] %vm293, %v304
      %338 = vst.msk [vmem:[%s335 + $0x19] sm:$0xff] %vm293, %v305
      %339 = vst.msk [vmem:[%s335 + $0x21] sm:$0xff] %vm293, %v306
      %340 = vst.msk [vmem:[%s335 + $0x31] sm:$0xff] %vm293, %v307
      %341 = vst.msk [vmem:[%s335 + $0x39] sm:$0xff] %vm293, %v308
      %342 = vst.msk [vmem:[%s335 + $0x49] sm:$0xff] %vm293, %v309
      %343 = vst.msk [vmem:[%s335 + $0x51] sm:$0xff] %vm293, %v310
      %344 = vst.msk [vmem:[%s335 + $0x61] sm:$0xff] %vm293, %v311
      %345 = vst.msk [vmem:[%s335 + $0x69] sm:$0xff] %vm293, %v312
      %346 = vst.msk [vmem:[%s335 + $0x79] sm:$0xff] %vm293, %v313
      %347 = vst.msk [vmem:[%s335 + $0x81] sm:$0xff] %vm293, %v314
      %348 = vst.msk [vmem:[%s335 + $0x91] sm:$0xff] %vm293, %v315
      %349 = vst.msk [vmem:[%s335 + $0x99] sm:$0xff] %vm293, %v316
      %350 = vst.msk [vmem:[%s335 + $0xa9] sm:$0xff] %vm293, %v317
      %351 = vst.msk [vmem:[%s335 + $0xb1] sm:$0xff] %vm293, %v318
      %352 = vst.msk [vmem:[%s335 + $0xc1] sm:$0xff] %vm293, %v319
      %353 = vst.msk [vmem:[%s335 + $0xc9] sm:$0xff] %vm293, %v320
      %354 = vst.msk [vmem:[%s335 + $0xd9] sm:$0xff] %vm293, %v321
      %355 = vst.msk [vmem:[%s335 + $0xe1] sm:$0xff] %vm293, %v322
      %356 = vst.msk [vmem:[%s335 + $0xf1] sm:$0xff] %vm293, %v323
      %357 = vst.msk [vmem:[%s335 + $0xf9] sm:$0xff] %vm293, %v324
      %358 = vst.msk [vmem:[%s335 + $0x109] sm:$0xff] %vm293, %v325
      %359 = vst.msk [vmem:[%s335 + $0x111] sm:$0xff] %vm293, %v326
      %360 = vst.msk [vmem:[%s335 + $0x121] sm:$0xff] %vm293, %v327
      %361 = vst.msk [vmem:[%s335 + $0x129] sm:$0xff] %vm293, %v328
      %362 = vst.msk [vmem:[%s335 + $0x139] sm:$0xff] %vm293, %v329
      %363 = vst.msk [vmem:[%s335 + $0x141] sm:$0xff] %vm293, %v330
      %364 = vst.msk [vmem:[%s335 + $0x151] sm:$0xff] %vm293, %v331
      %365 = vst.msk [vmem:[%s335 + $0x159] sm:$0xff] %vm293, %v332
      %366 = vst.msk [vmem:[%s335 + $0x169] sm:$0xff] %vm293, %v333
      %367 = vst.msk [vmem:[%s335 + $0x171] sm:$0xff] %vm293, %v334
      %v368 = vld [vmem:[#allocation2] sm:$0xff]
      %v369 = vld [vmem:[#allocation2 + $0x8] sm:$0xff]
      %v370 = vld [vmem:[#allocation2 + $0x10] sm:$0x3]
      %v371 = vld [vmem:[#allocation2 + $0x18] sm:$0xff]
      %v372 = vld [vmem:[#allocation2 + $0x20] sm:$0xff]
      %v373 = vld [vmem:[#allocation2 + $0x28] sm:$0x3]
      %v374 = vld [vmem:[#allocation2 + $0x30] sm:$0xff]
      %v375 = vld [vmem:[#allocation2 + $0x38] sm:$0xff]
      %v376 = vld [vmem:[#allocation2 + $0x40] sm:$0x3]
      %v377 = vld [vmem:[#allocation2 + $0x48] sm:$0xff]
      %v378 = vld [vmem:[#allocation2 + $0x50] sm:$0xff]
      %v379 = vld [vmem:[#allocation2 + $0x58] sm:$0x3]
      %v380 = vld [vmem:[#allocation2 + $0x60] sm:$0xff]
      %v381 = vld [vmem:[#allocation2 + $0x68] sm:$0xff]
      %v382 = vld [vmem:[#allocation2 + $0x70] sm:$0x3]
      %v383 = vld [vmem:[#allocation2 + $0x78] sm:$0xff]
      %v384 = vld [vmem:[#allocation2 + $0x80] sm:$0xff]
      %v385 = vld [vmem:[#allocation2 + $0x88] sm:$0x3]
      %v386 = vld [vmem:[#allocation2 + $0x90] sm:$0xff]
      %v387 = vld [vmem:[#allocation2 + $0x98] sm:$0xff]
      %v388 = vld [vmem:[#allocation2 + $0xa0] sm:$0x3]
      %v389 = vld [vmem:[#allocation2 + $0xa8] sm:$0xff]
      %v390 = vld [vmem:[#allocation2 + $0xb0] sm:$0xff]
      %v391 = vld [vmem:[#allocation2 + $0xb8] sm:$0x3]
      %v392 = vld [vmem:[#allocation2 + $0xc0] sm:$0xff]
      %v393 = vld [vmem:[#allocation2 + $0xc8] sm:$0xff]
      %v394 = vld [vmem:[#allocation2 + $0xd0] sm:$0x3]
      %v395 = vld [vmem:[#allocation2 + $0xd8] sm:$0xff]
      %v396 = vld [vmem:[#allocation2 + $0xe0] sm:$0xff]
      %v397 = vld [vmem:[#allocation2 + $0xe8] sm:$0x3]
      %v398 = vld [vmem:[#allocation2 + $0xf0] sm:$0xff]
      %v399 = vld [vmem:[#allocation2 + $0xf8] sm:$0xff]
      %v400 = vld [vmem:[#allocation2 + $0x100] sm:$0x3]
      %v401 = vld [vmem:[#allocation2 + $0x108] sm:$0xff]
      %v402 = vld [vmem:[#allocation2 + $0x110] sm:$0xff]
      %v403 = vld [vmem:[#allocation2 + $0x118] sm:$0x3]
      %v404 = vld [vmem:[#allocation2 + $0x120] sm:$0xff]
      %v405 = vld [vmem:[#allocation2 + $0x128] sm:$0xff]
      %v406 = vld [vmem:[#allocation2 + $0x130] sm:$0x3]
      %v407 = vld [vmem:[#allocation2 + $0x138] sm:$0xff]
      %v408 = vld [vmem:[#allocation2 + $0x140] sm:$0xff]
      %v409 = vld [vmem:[#allocation2 + $0x148] sm:$0x3]
      %v410 = vld [vmem:[#allocation2 + $0x150] sm:$0xff]
      %v411 = vld [vmem:[#allocation2 + $0x158] sm:$0xff]
      %v412 = vld [vmem:[#allocation2 + $0x160] sm:$0x3]
      %v413 = vld [vmem:[#allocation2 + $0x168] sm:$0xff]
      %v414 = vld [vmem:[#allocation2 + $0x170] sm:$0xff]
      %v415 = vld [vmem:[#allocation2 + $0x178] sm:$0x3]
      %v416 = vld [vmem:[#allocation2 + $0x180] sm:$0xff]
      %v417 = vld [vmem:[#allocation2 + $0x188] sm:$0xff]
      %v418 = vld [vmem:[#allocation2 + $0x190] sm:$0x3]
      %v419 = vld [vmem:[#allocation2 + $0x198] sm:$0xff]
      %v420 = vld [vmem:[#allocation2 + $0x1a0] sm:$0xff]
      %v421 = vld [vmem:[#allocation2 + $0x1a8] sm:$0x3]
      %v422 = vld [vmem:[#allocation2 + $0x1b0] sm:$0xff]
      %v423 = vld [vmem:[#allocation2 + $0x1b8] sm:$0xff]
      %v424 = vld [vmem:[#allocation2 + $0x1c0] sm:$0x3]
      %v425 = vld [vmem:[#allocation2 + $0x1c8] sm:$0xff]
      %v426 = vld [vmem:[#allocation2 + $0x1d0] sm:$0xff]
      %v427 = vld [vmem:[#allocation2 + $0x1d8] sm:$0x3]
      %v428 = vld [vmem:[%s1] sm:$0xf]
      %v429 = vld [vmem:[%s1 + $0x4] sm:$0xf]
      %v430 = vld [vmem:[%s1 + $0x8] sm:$0xf]
      %v431 = vld [vmem:[%s1 + $0xc] sm:$0xf]
      %v432 = vld [vmem:[%s1 + $0x10] sm:$0x3]
      %vm487 = vcmask 1046528
      %v488 = vrot.slane %v368, 1
      %v489 = vrot.slane %v369, 1
      %v490 = vsel %vm487, %v488, %v489
      %v491 = vrot.slane %v370, 1
      %v492 = vsel %vm487, %v489, %v491
      %v493 = vrot.slane %v371, 1
      %v494 = vrot.slane %v372, 1
      %v495 = vsel %vm487, %v493, %v494
      %v496 = vrot.slane %v373, 1
      %v497 = vsel %vm487, %v494, %v496
      %v498 = vrot.slane %v374, 1
      %v499 = vrot.slane %v375, 1
      %v500 = vsel %vm487, %v498, %v499
      %v501 = vrot.slane %v376, 1
      %v502 = vsel %vm487, %v499, %v501
      %v503 = vrot.slane %v377, 1
      %v504 = vrot.slane %v378, 1
      %v505 = vsel %vm487, %v503, %v504
      %v506 = vrot.slane %v379, 1
      %v507 = vsel %vm487, %v504, %v506
      %v508 = vrot.slane %v380, 1
      %v509 = vrot.slane %v381, 1
      %v510 = vsel %vm487, %v508, %v509
      %v511 = vrot.slane %v382, 1
      %v512 = vsel %vm487, %v509, %v511
      %v513 = vrot.slane %v383, 1
      %v514 = vrot.slane %v384, 1
      %v515 = vsel %vm487, %v513, %v514
      %v516 = vrot.slane %v385, 1
      %v517 = vsel %vm487, %v514, %v516
      %v518 = vrot.slane %v386, 1
      %v519 = vrot.slane %v387, 1
      %v520 = vsel %vm487, %v518, %v519
      %v521 = vrot.slane %v388, 1
      %v522 = vsel %vm487, %v519, %v521
      %v523 = vrot.slane %v389, 1
      %v524 = vrot.slane %v390, 1
      %v525 = vsel %vm487, %v523, %v524
      %v526 = vrot.slane %v391, 1
      %v527 = vsel %vm487, %v524, %v526
      %v528 = vrot.slane %v392, 1
      %v529 = vrot.slane %v393, 1
      %v530 = vsel %vm487, %v528, %v529
      %v531 = vrot.slane %v394, 1
      %v532 = vsel %vm487, %v529, %v531
      %v533 = vrot.slane %v395, 1
      %v534 = vrot.slane %v396, 1
      %v535 = vsel %vm487, %v533, %v534
      %v536 = vrot.slane %v397, 1
      %v537 = vsel %vm487, %v534, %v536
      %v538 = vrot.slane %v398, 1
      %v539 = vrot.slane %v399, 1
      %v540 = vsel %vm487, %v538, %v539
      %v541 = vrot.slane %v400, 1
      %v542 = vsel %vm487, %v539, %v541
      %v543 = vrot.slane %v401, 1
      %v544 = vrot.slane %v402, 1
      %v545 = vsel %vm487, %v543, %v544
      %v546 = vrot.slane %v403, 1
      %v547 = vsel %vm487, %v544, %v546
      %v548 = vrot.slane %v404, 1
      %v549 = vrot.slane %v405, 1
      %v550 = vsel %vm487, %v548, %v549
      %v551 = vrot.slane %v406, 1
      %v552 = vsel %vm487, %v549, %v551
      %v553 = vrot.slane %v407, 1
      %v554 = vrot.slane %v408, 1
      %v555 = vsel %vm487, %v553, %v554
      %v556 = vrot.slane %v409, 1
      %v557 = vsel %vm487, %v554, %v556
      %v558 = vrot.slane %v410, 1
      %v559 = vrot.slane %v411, 1
      %v560 = vsel %vm487, %v558, %v559
      %v561 = vrot.slane %v412, 1
      %v562 = vsel %vm487, %v559, %v561
      %v563 = vrot.slane %v413, 1
      %v564 = vrot.slane %v414, 1
      %v565 = vsel %vm487, %v563, %v564
      %v566 = vrot.slane %v415, 1
      %v567 = vsel %vm487, %v564, %v566
      %v568 = vrot.slane %v416, 1
      %v569 = vrot.slane %v417, 1
      %v570 = vsel %vm487, %v568, %v569
      %v571 = vrot.slane %v418, 1
      %v572 = vsel %vm487, %v569, %v571
      %v573 = vrot.slane %v419, 1
      %v574 = vrot.slane %v420, 1
      %v575 = vsel %vm487, %v573, %v574
      %v576 = vrot.slane %v421, 1
      %v577 = vsel %vm487, %v574, %v576
      %578 = vrot.lane.b32.xlu0 %v490, 4
      %v579 = vpop.permute.xlu0 %578
      %580 = vrot.lane.b32.xlu0 %v492, 4
      %v581 = vpop.permute.xlu0 %580
      %582 = vrot.lane.b32.xlu0 %v495, 4
      %v583 = vpop.permute.xlu0 %582
      %584 = vrot.lane.b32.xlu0 %v497, 4
      %v585 = vpop.permute.xlu0 %584
      %586 = vrot.lane.b32.xlu0 %v500, 4
      %v587 = vpop.permute.xlu0 %586
      %588 = vrot.lane.b32.xlu0 %v502, 4
      %v589 = vpop.permute.xlu0 %588
      %590 = vrot.lane.b32.xlu0 %v505, 4
      %v591 = vpop.permute.xlu0 %590
      %592 = vrot.lane.b32.xlu0 %v507, 4
      %v593 = vpop.permute.xlu0 %592
      %594 = vrot.lane.b32.xlu0 %v510, 4
      %v595 = vpop.permute.xlu0 %594
      %596 = vrot.lane.b32.xlu0 %v512, 4
      %v597 = vpop.permute.xlu0 %596
      %598 = vrot.lane.b32.xlu0 %v515, 4
      %v599 = vpop.permute.xlu0 %598
      %600 = vrot.lane.b32.xlu0 %v517, 4
      %v601 = vpop.permute.xlu0 %600
      %602 = vrot.lane.b32.xlu0 %v520, 4
      %v603 = vpop.permute.xlu0 %602
      %604 = vrot.lane.b32.xlu0 %v522, 4
      %v605 = vpop.permute.xlu0 %604
      %606 = vrot.lane.b32.xlu0 %v525, 4
      %v607 = vpop.permute.xlu0 %606
      %608 = vrot.lane.b32.xlu0 %v527, 4
      %v609 = vpop.permute.xlu0 %608
      %610 = vrot.lane.b32.xlu0 %v530, 4
      %v611 = vpop.permute.xlu0 %610
      %612 = vrot.lane.b32.xlu0 %v532, 4
      %v613 = vpop.permute.xlu0 %612
      %614 = vrot.lane.b32.xlu0 %v535, 4
      %v615 = vpop.permute.xlu0 %614
      %616 = vrot.lane.b32.xlu0 %v537, 4
      %v617 = vpop.permute.xlu0 %616
      %618 = vrot.lane.b32.xlu0 %v540, 4
      %v619 = vpop.permute.xlu0 %618
      %620 = vrot.lane.b32.xlu0 %v542, 4
      %v621 = vpop.permute.xlu0 %620
      %622 = vrot.lane.b32.xlu0 %v545, 4
      %v623 = vpop.permute.xlu0 %622
      %624 = vrot.lane.b32.xlu0 %v547, 4
      %v625 = vpop.permute.xlu0 %624
      %626 = vrot.lane.b32.xlu0 %v550, 4
      %v627 = vpop.permute.xlu0 %626
      %628 = vrot.lane.b32.xlu0 %v552, 4
      %v629 = vpop.permute.xlu0 %628
      %630 = vrot.lane.b32.xlu0 %v555, 4
      %v631 = vpop.permute.xlu0 %630
      %632 = vrot.lane.b32.xlu0 %v557, 4
      %v633 = vpop.permute.xlu0 %632
      %634 = vrot.lane.b32.xlu0 %v560, 4
      %v635 = vpop.permute.xlu0 %634
      %636 = vrot.lane.b32.xlu0 %v562, 4
      %v637 = vpop.permute.xlu0 %636
      %638 = vrot.lane.b32.xlu0 %v565, 4
      %v639 = vpop.permute.xlu0 %638
      %640 = vrot.lane.b32.xlu0 %v567, 4
      %v641 = vpop.permute.xlu0 %640
      %642 = vrot.lane.b32.xlu0 %v570, 4
      %v643 = vpop.permute.xlu0 %642
      %644 = vrot.lane.b32.xlu0 %v572, 4
      %v645 = vpop.permute.xlu0 %644
      %646 = vrot.lane.b32.xlu0 %v575, 4
      %v647 = vpop.permute.xlu0 %646
      %648 = vrot.lane.b32.xlu0 %v577, 4
      %v649 = vpop.permute.xlu0 %648
      %vm686 = vcmask 1045504
      %v687 = vrot.slane %v368, 2
      %v688 = vrot.slane %v369, 2
      %v689 = vsel %vm686, %v687, %v688
      %v690 = vrot.slane %v370, 2
      %v691 = vsel %vm686, %v688, %v690
      %v692 = vrot.slane %v371, 2
      %v693 = vrot.slane %v372, 2
      %v694 = vsel %vm686, %v692, %v693
      %v695 = vrot.slane %v373, 2
      %v696 = vsel %vm686, %v693, %v695
      %v697 = vrot.slane %v374, 2
      %v698 = vrot.slane %v375, 2
      %v699 = vsel %vm686, %v697, %v698
      %v700 = vrot.slane %v376, 2
      %v701 = vsel %vm686, %v698, %v700
      %v702 = vrot.slane %v377, 2
      %v703 = vrot.slane %v378, 2
      %v704 = vsel %vm686, %v702, %v703
      %v705 = vrot.slane %v379, 2
      %v706 = vsel %vm686, %v703, %v705
      %v707 = vrot.slane %v380, 2
      %v708 = vrot.slane %v381, 2
      %v709 = vsel %vm686, %v707, %v708
      %v710 = vrot.slane %v382, 2
      %v711 = vsel %vm686, %v708, %v710
      %v712 = vrot.slane %v383, 2
      %v713 = vrot.slane %v384, 2
      %v714 = vsel %vm686, %v712, %v713
      %v715 = vrot.slane %v385, 2
      %v716 = vsel %vm686, %v713, %v715
      %v717 = vrot.slane %v386, 2
      %v718 = vrot.slane %v387, 2
      %v719 = vsel %vm686, %v717, %v718
      %v720 = vrot.slane %v388, 2
      %v721 = vsel %vm686, %v718, %v720
      %v722 = vrot.slane %v389, 2
      %v723 = vrot.slane %v390, 2
      %v724 = vsel %vm686, %v722, %v723
      %v725 = vrot.slane %v391, 2
      %v726 = vsel %vm686, %v723, %v725
      %v727 = vrot.slane %v392, 2
      %v728 = vrot.slane %v393, 2
      %v729 = vsel %vm686, %v727, %v728
      %v730 = vrot.slane %v394, 2
      %v731 = vsel %vm686, %v728, %v730
      %v732 = vrot.slane %v395, 2
      %v733 = vrot.slane %v396, 2
      %v734 = vsel %vm686, %v732, %v733
      %v735 = vrot.slane %v397, 2
      %v736 = vsel %vm686, %v733, %v735
      %v737 = vrot.slane %v398, 2
      %v738 = vrot.slane %v399, 2
      %v739 = vsel %vm686, %v737, %v738
      %v740 = vrot.slane %v400, 2
      %v741 = vsel %vm686, %v738, %v740
      %v742 = vrot.slane %v401, 2
      %v743 = vrot.slane %v402, 2
      %v744 = vsel %vm686, %v742, %v743
      %v745 = vrot.slane %v403, 2
      %v746 = vsel %vm686, %v743, %v745
      %v747 = vrot.slane %v404, 2
      %v748 = vrot.slane %v405, 2
      %v749 = vsel %vm686, %v747, %v748
      %v750 = vrot.slane %v406, 2
      %v751 = vsel %vm686, %v748, %v750
      %v752 = vrot.slane %v407, 2
      %v753 = vrot.slane %v408, 2
      %v754 = vsel %vm686, %v752, %v753
      %v755 = vrot.slane %v409, 2
      %v756 = vsel %vm686, %v753, %v755
      %v757 = vrot.slane %v410, 2
      %v758 = vrot.slane %v411, 2
      %v759 = vsel %vm686, %v757, %v758
      %v760 = vrot.slane %v412, 2
      %v761 = vsel %vm686, %v758, %v760
      %v762 = vrot.slane %v413, 2
      %v763 = vrot.slane %v414, 2
      %v764 = vsel %vm686, %v762, %v763
      %v765 = vrot.slane %v415, 2
      %v766 = vsel %vm686, %v763, %v765
      %v767 = vrot.slane %v416, 2
      %v768 = vrot.slane %v417, 2
      %v769 = vsel %vm686, %v767, %v768
      %v770 = vrot.slane %v418, 2
      %v771 = vsel %vm686, %v768, %v770
      %v772 = vrot.slane %v419, 2
      %v773 = vrot.slane %v420, 2
      %v774 = vsel %vm686, %v772, %v773
      %v775 = vrot.slane %v421, 2
      %v776 = vsel %vm686, %v773, %v775
      %777 = vrot.lane.b32.xlu0 %v689, 8
      %v778 = vpop.permute.xlu0 %777
      %779 = vrot.lane.b32.xlu0 %v691, 8
      %v780 = vpop.permute.xlu0 %779
      %781 = vrot.lane.b32.xlu0 %v694, 8
      %v782 = vpop.permute.xlu0 %781
      %783 = vrot.lane.b32.xlu0 %v696, 8
      %v784 = vpop.permute.xlu0 %783
      %785 = vrot.lane.b32.xlu0 %v699, 8
      %v786 = vpop.permute.xlu0 %785
      %787 = vrot.lane.b32.xlu0 %v701, 8
      %v788 = vpop.permute.xlu0 %787
      %789 = vrot.lane.b32.xlu0 %v704, 8
      %v790 = vpop.permute.xlu0 %789
      %791 = vrot.lane.b32.xlu0 %v706, 8
      %v792 = vpop.permute.xlu0 %791
      %793 = vrot.lane.b32.xlu0 %v709, 8
      %v794 = vpop.permute.xlu0 %793
      %795 = vrot.lane.b32.xlu0 %v711, 8
      %v796 = vpop.permute.xlu0 %795
      %797 = vrot.lane.b32.xlu0 %v714, 8
      %v798 = vpop.permute.xlu0 %797
      %799 = vrot.lane.b32.xlu0 %v716, 8
      %v800 = vpop.permute.xlu0 %799
      %801 = vrot.lane.b32.xlu0 %v719, 8
      %v802 = vpop.permute.xlu0 %801
      %803 = vrot.lane.b32.xlu0 %v721, 8
      %v804 = vpop.permute.xlu0 %803
      %805 = vrot.lane.b32.xlu0 %v724, 8
      %v806 = vpop.permute.xlu0 %805
      %807 = vrot.lane.b32.xlu0 %v726, 8
      %v808 = vpop.permute.xlu0 %807
      %809 = vrot.lane.b32.xlu0 %v729, 8
      %v810 = vpop.permute.xlu0 %809
      %811 = vrot.lane.b32.xlu0 %v731, 8
      %v812 = vpop.permute.xlu0 %811
      %813 = vrot.lane.b32.xlu0 %v734, 8
      %v814 = vpop.permute.xlu0 %813
      %815 = vrot.lane.b32.xlu0 %v736, 8
      %v816 = vpop.permute.xlu0 %815
      %817 = vrot.lane.b32.xlu0 %v739, 8
      %v818 = vpop.permute.xlu0 %817
      %819 = vrot.lane.b32.xlu0 %v741, 8
      %v820 = vpop.permute.xlu0 %819
      %821 = vrot.lane.b32.xlu0 %v744, 8
      %v822 = vpop.permute.xlu0 %821
      %823 = vrot.lane.b32.xlu0 %v746, 8
      %v824 = vpop.permute.xlu0 %823
      %825 = vrot.lane.b32.xlu0 %v749, 8
      %v826 = vpop.permute.xlu0 %825
      %827 = vrot.lane.b32.xlu0 %v751, 8
      %v828 = vpop.permute.xlu0 %827
      %829 = vrot.lane.b32.xlu0 %v754, 8
      %v830 = vpop.permute.xlu0 %829
      %831 = vrot.lane.b32.xlu0 %v756, 8
      %v832 = vpop.permute.xlu0 %831
      %833 = vrot.lane.b32.xlu0 %v759, 8
      %v834 = vpop.permute.xlu0 %833
      %835 = vrot.lane.b32.xlu0 %v761, 8
      %v836 = vpop.permute.xlu0 %835
      %837 = vrot.lane.b32.xlu0 %v764, 8
      %v838 = vpop.permute.xlu0 %837
      %839 = vrot.lane.b32.xlu0 %v766, 8
      %v840 = vpop.permute.xlu0 %839
      %841 = vrot.lane.b32.xlu0 %v769, 8
      %v842 = vpop.permute.xlu0 %841
      %843 = vrot.lane.b32.xlu0 %v771, 8
      %v844 = vpop.permute.xlu0 %843
      %845 = vrot.lane.b32.xlu0 %v774, 8
      %v846 = vpop.permute.xlu0 %845
      %847 = vrot.lane.b32.xlu0 %v776, 8
      %v848 = vpop.permute.xlu0 %847
      %887 = vrot.lane.b32.xlu0 %v371, 12
      %v888 = vpop.permute.xlu0 %887
      %889 = vrot.lane.b32.xlu0 %v372, 12
      %v890 = vpop.permute.xlu0 %889
      %891 = vrot.lane.b32.xlu0 %v374, 12
      %v892 = vpop.permute.xlu0 %891
      %893 = vrot.lane.b32.xlu0 %v375, 12
      %v894 = vpop.permute.xlu0 %893
      %895 = vrot.lane.b32.xlu0 %v377, 12
      %v896 = vpop.permute.xlu0 %895
      %897 = vrot.lane.b32.xlu0 %v378, 12
      %v898 = vpop.permute.xlu0 %897
      %899 = vrot.lane.b32.xlu0 %v380, 12
      %v900 = vpop.permute.xlu0 %899
      %901 = vrot.lane.b32.xlu0 %v381, 12
      %v902 = vpop.permute.xlu0 %901
      %903 = vrot.lane.b32.xlu0 %v383, 12
      %v904 = vpop.permute.xlu0 %903
      %905 = vrot.lane.b32.xlu0 %v384, 12
      %v906 = vpop.permute.xlu0 %905
      %907 = vrot.lane.b32.xlu0 %v386, 12
      %v908 = vpop.permute.xlu0 %907
      %909 = vrot.lane.b32.xlu0 %v387, 12
      %v910 = vpop.permute.xlu0 %909
      %911 = vrot.lane.b32.xlu0 %v389, 12
      %v912 = vpop.permute.xlu0 %911
      %913 = vrot.lane.b32.xlu0 %v390, 12
      %v914 = vpop.permute.xlu0 %913
      %915 = vrot.lane.b32.xlu0 %v392, 12
      %v916 = vpop.permute.xlu0 %915
      %917 = vrot.lane.b32.xlu0 %v393, 12
      %v918 = vpop.permute.xlu0 %917
      %919 = vrot.lane.b32.xlu0 %v395, 12
      %v920 = vpop.permute.xlu0 %919
      %921 = vrot.lane.b32.xlu0 %v396, 12
      %v922 = vpop.permute.xlu0 %921
      %923 = vrot.lane.b32.xlu0 %v398, 12
      %v924 = vpop.permute.xlu0 %923
      %925 = vrot.lane.b32.xlu0 %v399, 12
      %v926 = vpop.permute.xlu0 %925
      %927 = vrot.lane.b32.xlu0 %v401, 12
      %v928 = vpop.permute.xlu0 %927
      %929 = vrot.lane.b32.xlu0 %v402, 12
      %v930 = vpop.permute.xlu0 %929
      %931 = vrot.lane.b32.xlu0 %v404, 12
      %v932 = vpop.permute.xlu0 %931
      %933 = vrot.lane.b32.xlu0 %v405, 12
      %v934 = vpop.permute.xlu0 %933
      %935 = vrot.lane.b32.xlu0 %v407, 12
      %v936 = vpop.permute.xlu0 %935
      %937 = vrot.lane.b32.xlu0 %v408, 12
      %v938 = vpop.permute.xlu0 %937
      %939 = vrot.lane.b32.xlu0 %v410, 12
      %v940 = vpop.permute.xlu0 %939
      %941 = vrot.lane.b32.xlu0 %v411, 12
      %v942 = vpop.permute.xlu0 %941
      %943 = vrot.lane.b32.xlu0 %v413, 12
      %v944 = vpop.permute.xlu0 %943
      %945 = vrot.lane.b32.xlu0 %v414, 12
      %v946 = vpop.permute.xlu0 %945
      %947 = vrot.lane.b32.xlu0 %v416, 12
      %v948 = vpop.permute.xlu0 %947
      %949 = vrot.lane.b32.xlu0 %v417, 12
      %v950 = vpop.permute.xlu0 %949
      %951 = vrot.lane.b32.xlu0 %v419, 12
      %v952 = vpop.permute.xlu0 %951
      %953 = vrot.lane.b32.xlu0 %v420, 12
      %v954 = vpop.permute.xlu0 %953
      %955 = vrot.lane.b32.xlu0 %v422, 12
      %v956 = vpop.permute.xlu0 %955
      %957 = vrot.lane.b32.xlu0 %v423, 12
      %v958 = vpop.permute.xlu0 %957
      %v996 = vrot.slane %v422, 1
      %v997 = vrot.slane %v423, 1
      %v998 = vsel %vm487, %v996, %v997
      %v999 = vrot.slane %v424, 1
      %v1000 = vsel %vm487, %v997, %v999
      %1001 = vrot.lane.b32.xlu0 %v495, 16
      %v1002 = vpop.permute.xlu0 %1001
      %1003 = vrot.lane.b32.xlu0 %v497, 16
      %v1004 = vpop.permute.xlu0 %1003
      %1005 = vrot.lane.b32.xlu0 %v500, 16
      %v1006 = vpop.permute.xlu0 %1005
      %1007 = vrot.lane.b32.xlu0 %v502, 16
      %v1008 = vpop.permute.xlu0 %1007
      %1009 = vrot.lane.b32.xlu0 %v505, 16
      %v1010 = vpop.permute.xlu0 %1009
      %1011 = vrot.lane.b32.xlu0 %v507, 16
      %v1012 = vpop.permute.xlu0 %1011
      %1013 = vrot.lane.b32.xlu0 %v510, 16
      %v1014 = vpop.permute.xlu0 %1013
      %1015 = vrot.lane.b32.xlu0 %v512, 16
      %v1016 = vpop.permute.xlu0 %1015
      %1017 = vrot.lane.b32.xlu0 %v515, 16
      %v1018 = vpop.permute.xlu0 %1017
      %1019 = vrot.lane.b32.xlu0 %v517, 16
      %v1020 = vpop.permute.xlu0 %1019
      %1021 = vrot.lane.b32.xlu0 %v520, 16
      %v1022 = vpop.permute.xlu0 %1021
      %1023 = vrot.lane.b32.xlu0 %v522, 16
      %v1024 = vpop.permute.xlu0 %1023
      %1025 = vrot.lane.b32.xlu0 %v525, 16
      %v1026 = vpop.permute.xlu0 %1025
      %1027 = vrot.lane.b32.xlu0 %v527, 16
      %v1028 = vpop.permute.xlu0 %1027
      %1029 = vrot.lane.b32.xlu0 %v530, 16
      %v1030 = vpop.permute.xlu0 %1029
      %1031 = vrot.lane.b32.xlu0 %v532, 16
      %v1032 = vpop.permute.xlu0 %1031
      %1033 = vrot.lane.b32.xlu0 %v535, 16
      %v1034 = vpop.permute.xlu0 %1033
      %1035 = vrot.lane.b32.xlu0 %v537, 16
      %v1036 = vpop.permute.xlu0 %1035
      %1037 = vrot.lane.b32.xlu0 %v540, 16
      %v1038 = vpop.permute.xlu0 %1037
      %1039 = vrot.lane.b32.xlu0 %v542, 16
      %v1040 = vpop.permute.xlu0 %1039
      %1041 = vrot.lane.b32.xlu0 %v545, 16
      %v1042 = vpop.permute.xlu0 %1041
      %1043 = vrot.lane.b32.xlu0 %v547, 16
      %v1044 = vpop.permute.xlu0 %1043
      %1045 = vrot.lane.b32.xlu0 %v550, 16
      %v1046 = vpop.permute.xlu0 %1045
      %1047 = vrot.lane.b32.xlu0 %v552, 16
      %v1048 = vpop.permute.xlu0 %1047
      %1049 = vrot.lane.b32.xlu0 %v555, 16
      %v1050 = vpop.permute.xlu0 %1049
      %1051 = vrot.lane.b32.xlu0 %v557, 16
      %v1052 = vpop.permute.xlu0 %1051
      %1053 = vrot.lane.b32.xlu0 %v560, 16
      %v1054 = vpop.permute.xlu0 %1053
      %1055 = vrot.lane.b32.xlu0 %v562, 16
      %v1056 = vpop.permute.xlu0 %1055
      %1057 = vrot.lane.b32.xlu0 %v565, 16
      %v1058 = vpop.permute.xlu0 %1057
      %1059 = vrot.lane.b32.xlu0 %v567, 16
      %v1060 = vpop.permute.xlu0 %1059
      %1061 = vrot.lane.b32.xlu0 %v570, 16
      %v1062 = vpop.permute.xlu0 %1061
      %1063 = vrot.lane.b32.xlu0 %v572, 16
      %v1064 = vpop.permute.xlu0 %1063
      %1065 = vrot.lane.b32.xlu0 %v575, 16
      %v1066 = vpop.permute.xlu0 %1065
      %1067 = vrot.lane.b32.xlu0 %v577, 16
      %v1068 = vpop.permute.xlu0 %1067
      %1069 = vrot.lane.b32.xlu0 %v998, 16
      %v1070 = vpop.permute.xlu0 %1069
      %1071 = vrot.lane.b32.xlu0 %v1000, 16
      %v1072 = vpop.permute.xlu0 %1071
      %v1109 = vrot.slane %v422, 2
      %v1110 = vrot.slane %v423, 2
      %v1111 = vsel %vm686, %v1109, %v1110
      %v1112 = vrot.slane %v424, 2
      %v1113 = vsel %vm686, %v1110, %v1112
      %1114 = vrot.lane.b32.xlu0 %v694, 20
      %v1115 = vpop.permute.xlu0 %1114
      %1116 = vrot.lane.b32.xlu0 %v696, 20
      %v1117 = vpop.permute.xlu0 %1116
      %1118 = vrot.lane.b32.xlu0 %v699, 20
      %v1119 = vpop.permute.xlu0 %1118
      %1120 = vrot.lane.b32.xlu0 %v701, 20
      %v1121 = vpop.permute.xlu0 %1120
      %1122 = vrot.lane.b32.xlu0 %v704, 20
      %v1123 = vpop.permute.xlu0 %1122
      %1124 = vrot.lane.b32.xlu0 %v706, 20
      %v1125 = vpop.permute.xlu0 %1124
      %1126 = vrot.lane.b32.xlu0 %v709, 20
      %v1127 = vpop.permute.xlu0 %1126
      %1128 = vrot.lane.b32.xlu0 %v711, 20
      %v1129 = vpop.permute.xlu0 %1128
      %1130 = vrot.lane.b32.xlu0 %v714, 20
      %v1131 = vpop.permute.xlu0 %1130
      %1132 = vrot.lane.b32.xlu0 %v716, 20
      %v1133 = vpop.permute.xlu0 %1132
      %1134 = vrot.lane.b32.xlu0 %v719, 20
      %v1135 = vpop.permute.xlu0 %1134
      %1136 = vrot.lane.b32.xlu0 %v721, 20
      %v1137 = vpop.permute.xlu0 %1136
      %1138 = vrot.lane.b32.xlu0 %v724, 20
      %v1139 = vpop.permute.xlu0 %1138
      %1140 = vrot.lane.b32.xlu0 %v726, 20
      %v1141 = vpop.permute.xlu0 %1140
      %1142 = vrot.lane.b32.xlu0 %v729, 20
      %v1143 = vpop.permute.xlu0 %1142
      %1144 = vrot.lane.b32.xlu0 %v731, 20
      %v1145 = vpop.permute.xlu0 %1144
      %1146 = vrot.lane.b32.xlu0 %v734, 20
      %v1147 = vpop.permute.xlu0 %1146
      %1148 = vrot.lane.b32.xlu0 %v736, 20
      %v1149 = vpop.permute.xlu0 %1148
      %1150 = vrot.lane.b32.xlu0 %v739, 20
      %v1151 = vpop.permute.xlu0 %1150
      %1152 = vrot.lane.b32.xlu0 %v741, 20
      %v1153 = vpop.permute.xlu0 %1152
      %1154 = vrot.lane.b32.xlu0 %v744, 20
      %v1155 = vpop.permute.xlu0 %1154
      %1156 = vrot.lane.b32.xlu0 %v746, 20
      %v1157 = vpop.permute.xlu0 %1156
      %1158 = vrot.lane.b32.xlu0 %v749, 20
      %v1159 = vpop.permute.xlu0 %1158
      %1160 = vrot.lane.b32.xlu0 %v751, 20
      %v1161 = vpop.permute.xlu0 %1160
      %1162 = vrot.lane.b32.xlu0 %v754, 20
      %v1163 = vpop.permute.xlu0 %1162
      %1164 = vrot.lane.b32.xlu0 %v756, 20
      %v1165 = vpop.permute.xlu0 %1164
      %1166 = vrot.lane.b32.xlu0 %v759, 20
      %v1167 = vpop.permute.xlu0 %1166
      %1168 = vrot.lane.b32.xlu0 %v761, 20
      %v1169 = vpop.permute.xlu0 %1168
      %1170 = vrot.lane.b32.xlu0 %v764, 20
      %v1171 = vpop.permute.xlu0 %1170
      %1172 = vrot.lane.b32.xlu0 %v766, 20
      %v1173 = vpop.permute.xlu0 %1172
      %1174 = vrot.lane.b32.xlu0 %v769, 20
      %v1175 = vpop.permute.xlu0 %1174
      %1176 = vrot.lane.b32.xlu0 %v771, 20
      %v1177 = vpop.permute.xlu0 %1176
      %1178 = vrot.lane.b32.xlu0 %v774, 20
      %v1179 = vpop.permute.xlu0 %1178
      %1180 = vrot.lane.b32.xlu0 %v776, 20
      %v1181 = vpop.permute.xlu0 %1180
      %1182 = vrot.lane.b32.xlu0 %v1111, 20
      %v1183 = vpop.permute.xlu0 %1182
      %1184 = vrot.lane.b32.xlu0 %v1113, 20
      %v1185 = vpop.permute.xlu0 %1184
      %1224 = vrot.lane.b32.xlu0 %v374, 24
      %v1225 = vpop.permute.xlu0 %1224
      %1226 = vrot.lane.b32.xlu0 %v375, 24
      %v1227 = vpop.permute.xlu0 %1226
      %1228 = vrot.lane.b32.xlu0 %v377, 24
      %v1229 = vpop.permute.xlu0 %1228
      %1230 = vrot.lane.b32.xlu0 %v378, 24
      %v1231 = vpop.permute.xlu0 %1230
      %1232 = vrot.lane.b32.xlu0 %v380, 24
      %v1233 = vpop.permute.xlu0 %1232
      %1234 = vrot.lane.b32.xlu0 %v381, 24
      %v1235 = vpop.permute.xlu0 %1234
      %1236 = vrot.lane.b32.xlu0 %v383, 24
      %v1237 = vpop.permute.xlu0 %1236
      %1238 = vrot.lane.b32.xlu0 %v384, 24
      %v1239 = vpop.permute.xlu0 %1238
      %1240 = vrot.lane.b32.xlu0 %v386, 24
      %v1241 = vpop.permute.xlu0 %1240
      %1242 = vrot.lane.b32.xlu0 %v387, 24
      %v1243 = vpop.permute.xlu0 %1242
      %1244 = vrot.lane.b32.xlu0 %v389, 24
      %v1245 = vpop.permute.xlu0 %1244
      %1246 = vrot.lane.b32.xlu0 %v390, 24
      %v1247 = vpop.permute.xlu0 %1246
      %1248 = vrot.lane.b32.xlu0 %v392, 24
      %v1249 = vpop.permute.xlu0 %1248
      %1250 = vrot.lane.b32.xlu0 %v393, 24
      %v1251 = vpop.permute.xlu0 %1250
      %1252 = vrot.lane.b32.xlu0 %v395, 24
      %v1253 = vpop.permute.xlu0 %1252
      %1254 = vrot.lane.b32.xlu0 %v396, 24
      %v1255 = vpop.permute.xlu0 %1254
      %1256 = vrot.lane.b32.xlu0 %v398, 24
      %v1257 = vpop.permute.xlu0 %1256
      %1258 = vrot.lane.b32.xlu0 %v399, 24
      %v1259 = vpop.permute.xlu0 %1258
      %1260 = vrot.lane.b32.xlu0 %v401, 24
      %v1261 = vpop.permute.xlu0 %1260
      %1262 = vrot.lane.b32.xlu0 %v402, 24
      %v1263 = vpop.permute.xlu0 %1262
      %1264 = vrot.lane.b32.xlu0 %v404, 24
      %v1265 = vpop.permute.xlu0 %1264
      %1266 = vrot.lane.b32.xlu0 %v405, 24
      %v1267 = vpop.permute.xlu0 %1266
      %1268 = vrot.lane.b32.xlu0 %v407, 24
      %v1269 = vpop.permute.xlu0 %1268
      %1270 = vrot.lane.b32.xlu0 %v408, 24
      %v1271 = vpop.permute.xlu0 %1270
      %1272 = vrot.lane.b32.xlu0 %v410, 24
      %v1273 = vpop.permute.xlu0 %1272
      %1274 = vrot.lane.b32.xlu0 %v411, 24
      %v1275 = vpop.permute.xlu0 %1274
      %1276 = vrot.lane.b32.xlu0 %v413, 24
      %v1277 = vpop.permute.xlu0 %1276
      %1278 = vrot.lane.b32.xlu0 %v414, 24
      %v1279 = vpop.permute.xlu0 %1278
      %1280 = vrot.lane.b32.xlu0 %v416, 24
      %v1281 = vpop.permute.xlu0 %1280
      %1282 = vrot.lane.b32.xlu0 %v417, 24
      %v1283 = vpop.permute.xlu0 %1282
      %1284 = vrot.lane.b32.xlu0 %v419, 24
      %v1285 = vpop.permute.xlu0 %1284
      %1286 = vrot.lane.b32.xlu0 %v420, 24
      %v1287 = vpop.permute.xlu0 %1286
      %1288 = vrot.lane.b32.xlu0 %v422, 24
      %v1289 = vpop.permute.xlu0 %1288
      %1290 = vrot.lane.b32.xlu0 %v423, 24
      %v1291 = vpop.permute.xlu0 %1290
      %1292 = vrot.lane.b32.xlu0 %v425, 24
      %v1293 = vpop.permute.xlu0 %1292
      %1294 = vrot.lane.b32.xlu0 %v426, 24
      %v1295 = vpop.permute.xlu0 %1294
      %v1333 = vrot.slane %v425, 1
      %v1334 = vrot.slane %v426, 1
      %v1335 = vsel %vm487, %v1333, %v1334
      %v1336 = vrot.slane %v427, 1
      %v1337 = vsel %vm487, %v1334, %v1336
      %1338 = vrot.lane.b32.xlu0 %v500, 28
      %v1339 = vpop.permute.xlu0 %1338
      %1340 = vrot.lane.b32.xlu0 %v502, 28
      %v1341 = vpop.permute.xlu0 %1340
      %1342 = vrot.lane.b32.xlu0 %v505, 28
      %v1343 = vpop.permute.xlu0 %1342
      %1344 = vrot.lane.b32.xlu0 %v507, 28
      %v1345 = vpop.permute.xlu0 %1344
      %1346 = vrot.lane.b32.xlu0 %v510, 28
      %v1347 = vpop.permute.xlu0 %1346
      %1348 = vrot.lane.b32.xlu0 %v512, 28
      %v1349 = vpop.permute.xlu0 %1348
      %1350 = vrot.lane.b32.xlu0 %v515, 28
      %v1351 = vpop.permute.xlu0 %1350
      %1352 = vrot.lane.b32.xlu0 %v517, 28
      %v1353 = vpop.permute.xlu0 %1352
      %1354 = vrot.lane.b32.xlu0 %v520, 28
      %v1355 = vpop.permute.xlu0 %1354
      %1356 = vrot.lane.b32.xlu0 %v522, 28
      %v1357 = vpop.permute.xlu0 %1356
      %1358 = vrot.lane.b32.xlu0 %v525, 28
      %v1359 = vpop.permute.xlu0 %1358
      %1360 = vrot.lane.b32.xlu0 %v527, 28
      %v1361 = vpop.permute.xlu0 %1360
      %1362 = vrot.lane.b32.xlu0 %v530, 28
      %v1363 = vpop.permute.xlu0 %1362
      %1364 = vrot.lane.b32.xlu0 %v532, 28
      %v1365 = vpop.permute.xlu0 %1364
      %1366 = vrot.lane.b32.xlu0 %v535, 28
      %v1367 = vpop.permute.xlu0 %1366
      %1368 = vrot.lane.b32.xlu0 %v537, 28
      %v1369 = vpop.permute.xlu0 %1368
      %1370 = vrot.lane.b32.xlu0 %v540, 28
      %v1371 = vpop.permute.xlu0 %1370
      %1372 = vrot.lane.b32.xlu0 %v542, 28
      %v1373 = vpop.permute.xlu0 %1372
      %1374 = vrot.lane.b32.xlu0 %v545, 28
      %v1375 = vpop.permute.xlu0 %1374
      %1376 = vrot.lane.b32.xlu0 %v547, 28
      %v1377 = vpop.permute.xlu0 %1376
      %1378 = vrot.lane.b32.xlu0 %v550, 28
      %v1379 = vpop.permute.xlu0 %1378
      %1380 = vrot.lane.b32.xlu0 %v552, 28
      %v1381 = vpop.permute.xlu0 %1380
      %1382 = vrot.lane.b32.xlu0 %v555, 28
      %v1383 = vpop.permute.xlu0 %1382
      %1384 = vrot.lane.b32.xlu0 %v557, 28
      %v1385 = vpop.permute.xlu0 %1384
      %1386 = vrot.lane.b32.xlu0 %v560, 28
      %v1387 = vpop.permute.xlu0 %1386
      %1388 = vrot.lane.b32.xlu0 %v562, 28
      %v1389 = vpop.permute.xlu0 %1388
      %1390 = vrot.lane.b32.xlu0 %v565, 28
      %v1391 = vpop.permute.xlu0 %1390
      %1392 = vrot.lane.b32.xlu0 %v567, 28
      %v1393 = vpop.permute.xlu0 %1392
      %1394 = vrot.lane.b32.xlu0 %v570, 28
      %v1395 = vpop.permute.xlu0 %1394
      %1396 = vrot.lane.b32.xlu0 %v572, 28
      %v1397 = vpop.permute.xlu0 %1396
      %1398 = vrot.lane.b32.xlu0 %v575, 28
      %v1399 = vpop.permute.xlu0 %1398
      %1400 = vrot.lane.b32.xlu0 %v577, 28
      %v1401 = vpop.permute.xlu0 %1400
      %1402 = vrot.lane.b32.xlu0 %v998, 28
      %v1403 = vpop.permute.xlu0 %1402
      %1404 = vrot.lane.b32.xlu0 %v1000, 28
      %v1405 = vpop.permute.xlu0 %1404
      %1406 = vrot.lane.b32.xlu0 %v1335, 28
      %v1407 = vpop.permute.xlu0 %1406
      %1408 = vrot.lane.b32.xlu0 %v1337, 28
      %v1409 = vpop.permute.xlu0 %1408
      %v1446 = vrot.slane %v425, 2
      %v1447 = vrot.slane %v426, 2
      %v1448 = vsel %vm686, %v1446, %v1447
      %v1449 = vrot.slane %v427, 2
      %v1450 = vsel %vm686, %v1447, %v1449
      %1451 = vrot.lane.b32.xlu0 %v699, 32
      %v1452 = vpop.permute.xlu0 %1451
      %1453 = vrot.lane.b32.xlu0 %v701, 32
      %v1454 = vpop.permute.xlu0 %1453
      %1455 = vrot.lane.b32.xlu0 %v704, 32
      %v1456 = vpop.permute.xlu0 %1455
      %1457 = vrot.lane.b32.xlu0 %v706, 32
      %v1458 = vpop.permute.xlu0 %1457
      %1459 = vrot.lane.b32.xlu0 %v709, 32
      %v1460 = vpop.permute.xlu0 %1459
      %1461 = vrot.lane.b32.xlu0 %v711, 32
      %v1462 = vpop.permute.xlu0 %1461
      %1463 = vrot.lane.b32.xlu0 %v714, 32
      %v1464 = vpop.permute.xlu0 %1463
      %1465 = vrot.lane.b32.xlu0 %v716, 32
      %v1466 = vpop.permute.xlu0 %1465
      %1467 = vrot.lane.b32.xlu0 %v719, 32
      %v1468 = vpop.permute.xlu0 %1467
      %1469 = vrot.lane.b32.xlu0 %v721, 32
      %v1470 = vpop.permute.xlu0 %1469
      %1471 = vrot.lane.b32.xlu0 %v724, 32
      %v1472 = vpop.permute.xlu0 %1471
      %1473 = vrot.lane.b32.xlu0 %v726, 32
      %v1474 = vpop.permute.xlu0 %1473
      %1475 = vrot.lane.b32.xlu0 %v729, 32
      %v1476 = vpop.permute.xlu0 %1475
      %1477 = vrot.lane.b32.xlu0 %v731, 32
      %v1478 = vpop.permute.xlu0 %1477
      %1479 = vrot.lane.b32.xlu0 %v734, 32
      %v1480 = vpop.permute.xlu0 %1479
      %1481 = vrot.lane.b32.xlu0 %v736, 32
      %v1482 = vpop.permute.xlu0 %1481
      %1483 = vrot.lane.b32.xlu0 %v739, 32
      %v1484 = vpop.permute.xlu0 %1483
      %1485 = vrot.lane.b32.xlu0 %v741, 32
      %v1486 = vpop.permute.xlu0 %1485
      %1487 = vrot.lane.b32.xlu0 %v744, 32
      %v1488 = vpop.permute.xlu0 %1487
      %1489 = vrot.lane.b32.xlu0 %v746, 32
      %v1490 = vpop.permute.xlu0 %1489
      %1491 = vrot.lane.b32.xlu0 %v749, 32
      %v1492 = vpop.permute.xlu0 %1491
      %1493 = vrot.lane.b32.xlu0 %v751, 32
      %v1494 = vpop.permute.xlu0 %1493
      %1495 = vrot.lane.b32.xlu0 %v754, 32
      %v1496 = vpop.permute.xlu0 %1495
      %1497 = vrot.lane.b32.xlu0 %v756, 32
      %v1498 = vpop.permute.xlu0 %1497
      %1499 = vrot.lane.b32.xlu0 %v759, 32
      %v1500 = vpop.permute.xlu0 %1499
      %1501 = vrot.lane.b32.xlu0 %v761, 32
      %v1502 = vpop.permute.xlu0 %1501
      %1503 = vrot.lane.b32.xlu0 %v764, 32
      %v1504 = vpop.permute.xlu0 %1503
      %1505 = vrot.lane.b32.xlu0 %v766, 32
      %v1506 = vpop.permute.xlu0 %1505
      %1507 = vrot.lane.b32.xlu0 %v769, 32
      %v1508 = vpop.permute.xlu0 %1507
      %1509 = vrot.lane.b32.xlu0 %v771, 32
      %v1510 = vpop.permute.xlu0 %1509
      %1511 = vrot.lane.b32.xlu0 %v774, 32
      %v1512 = vpop.permute.xlu0 %1511
      %1513 = vrot.lane.b32.xlu0 %v776, 32
      %v1514 = vpop.permute.xlu0 %1513
      %1515 = vrot.lane.b32.xlu0 %v1111, 32
      %v1516 = vpop.permute.xlu0 %1515
      %1517 = vrot.lane.b32.xlu0 %v1113, 32
      %v1518 = vpop.permute.xlu0 %1517
      %1519 = vrot.lane.b32.xlu0 %v1448, 32
      %v1520 = vpop.permute.xlu0 %1519
      %1521 = vrot.lane.b32.xlu0 %v1450, 32
      %v1522 = vpop.permute.xlu0 %1521
      %v1559 = vsel %vm293, %v368, %v579
      %v1560 = vsel %vm293, %v369, %v581
      %v1561 = vsel %vm293, %v371, %v583
      %v1562 = vsel %vm293, %v372, %v585
      %v1563 = vsel %vm293, %v374, %v587
      %v1564 = vsel %vm293, %v375, %v589
      %v1565 = vsel %vm293, %v377, %v591
      %v1566 = vsel %vm293, %v378, %v593
      %v1567 = vsel %vm293, %v380, %v595
      %v1568 = vsel %vm293, %v381, %v597
      %v1569 = vsel %vm293, %v383, %v599
      %v1570 = vsel %vm293, %v384, %v601
      %v1571 = vsel %vm293, %v386, %v603
      %v1572 = vsel %vm293, %v387, %v605
      %v1573 = vsel %vm293, %v389, %v607
      %v1574 = vsel %vm293, %v390, %v609
      %v1575 = vsel %vm293, %v392, %v611
      %v1576 = vsel %vm293, %v393, %v613
      %v1577 = vsel %vm293, %v395, %v615
      %v1578 = vsel %vm293, %v396, %v617
      %v1579 = vsel %vm293, %v398, %v619
      %v1580 = vsel %vm293, %v399, %v621
      %v1581 = vsel %vm293, %v401, %v623
      %v1582 = vsel %vm293, %v402, %v625
      %v1583 = vsel %vm293, %v404, %v627
      %v1584 = vsel %vm293, %v405, %v629
      %v1585 = vsel %vm293, %v407, %v631
      %v1586 = vsel %vm293, %v408, %v633
      %v1587 = vsel %vm293, %v410, %v635
      %v1588 = vsel %vm293, %v411, %v637
      %v1589 = vsel %vm293, %v413, %v639
      %v1590 = vsel %vm293, %v414, %v641
      %v1591 = vsel %vm293, %v416, %v643
      %v1592 = vsel %vm293, %v417, %v645
      %v1593 = vsel %vm293, %v419, %v647
      %v1594 = vsel %vm293, %v420, %v649
      %vm1595 = vcmask 64512
      %v1596 = vsel %vm1595, %v1559, %v778
      %v1597 = vsel %vm1595, %v1560, %v780
      %v1598 = vsel %vm1595, %v1561, %v782
      %v1599 = vsel %vm1595, %v1562, %v784
      %v1600 = vsel %vm1595, %v1563, %v786
      %v1601 = vsel %vm1595, %v1564, %v788
      %v1602 = vsel %vm1595, %v1565, %v790
      %v1603 = vsel %vm1595, %v1566, %v792
      %v1604 = vsel %vm1595, %v1567, %v794
      %v1605 = vsel %vm1595, %v1568, %v796
      %v1606 = vsel %vm1595, %v1569, %v798
      %v1607 = vsel %vm1595, %v1570, %v800
      %v1608 = vsel %vm1595, %v1571, %v802
      %v1609 = vsel %vm1595, %v1572, %v804
      %v1610 = vsel %vm1595, %v1573, %v806
      %v1611 = vsel %vm1595, %v1574, %v808
      %v1612 = vsel %vm1595, %v1575, %v810
      %v1613 = vsel %vm1595, %v1576, %v812
      %v1614 = vsel %vm1595, %v1577, %v814
      %v1615 = vsel %vm1595, %v1578, %v816
      %v1616 = vsel %vm1595, %v1579, %v818
      %v1617 = vsel %vm1595, %v1580, %v820
      %v1618 = vsel %vm1595, %v1581, %v822
      %v1619 = vsel %vm1595, %v1582, %v824
      %v1620 = vsel %vm1595, %v1583, %v826
      %v1621 = vsel %vm1595, %v1584, %v828
      %v1622 = vsel %vm1595, %v1585, %v830
      %v1623 = vsel %vm1595, %v1586, %v832
      %v1624 = vsel %vm1595, %v1587, %v834
      %v1625 = vsel %vm1595, %v1588, %v836
      %v1626 = vsel %vm1595, %v1589, %v838
      %v1627 = vsel %vm1595, %v1590, %v840
      %v1628 = vsel %vm1595, %v1591, %v842
      %v1629 = vsel %vm1595, %v1592, %v844
      %v1630 = vsel %vm1595, %v1593, %v846
      %v1631 = vsel %vm1595, %v1594, %v848
      %vm1632 = vcmask 97280
      %v1633 = vsel %vm1632, %v1596, %v888
      %v1634 = vsel %vm1632, %v1597, %v890
      %v1635 = vsel %vm1632, %v1598, %v892
      %v1636 = vsel %vm1632, %v1599, %v894
      %v1637 = vsel %vm1632, %v1600, %v896
      %v1638 = vsel %vm1632, %v1601, %v898
      %v1639 = vsel %vm1632, %v1602, %v900
      %v1640 = vsel %vm1632, %v1603, %v902
      %v1641 = vsel %vm1632, %v1604, %v904
      %v1642 = vsel %vm1632, %v1605, %v906
      %v1643 = vsel %vm1632, %v1606, %v908
      %v1644 = vsel %vm1632, %v1607, %v910
      %v1645 = vsel %vm1632, %v1608, %v912
      %v1646 = vsel %vm1632, %v1609, %v914
      %v1647 = vsel %vm1632, %v1610, %v916
      %v1648 = vsel %vm1632, %v1611, %v918
      %v1649 = vsel %vm1632, %v1612, %v920
      %v1650 = vsel %vm1632, %v1613, %v922
      %v1651 = vsel %vm1632, %v1614, %v924
      %v1652 = vsel %vm1632, %v1615, %v926
      %v1653 = vsel %vm1632, %v1616, %v928
      %v1654 = vsel %vm1632, %v1617, %v930
      %v1655 = vsel %vm1632, %v1618, %v932
      %v1656 = vsel %vm1632, %v1619, %v934
      %v1657 = vsel %vm1632, %v1620, %v936
      %v1658 = vsel %vm1632, %v1621, %v938
      %v1659 = vsel %vm1632, %v1622, %v940
      %v1660 = vsel %vm1632, %v1623, %v942
      %v1661 = vsel %vm1632, %v1624, %v944
      %v1662 = vsel %vm1632, %v1625, %v946
      %v1663 = vsel %vm1632, %v1626, %v948
      %v1664 = vsel %vm1632, %v1627, %v950
      %v1665 = vsel %vm1632, %v1628, %v952
      %v1666 = vsel %vm1632, %v1629, %v954
      %v1667 = vsel %vm1632, %v1630, %v956
      %v1668 = vsel %vm1632, %v1631, %v958
      %vm1669 = vcmask 130048
      %v1670 = vsel %vm1669, %v1633, %v1002
      %v1671 = vsel %vm1669, %v1634, %v1004
      %v1672 = vsel %vm1669, %v1635, %v1006
      %v1673 = vsel %vm1669, %v1636, %v1008
      %v1674 = vsel %vm1669, %v1637, %v1010
      %v1675 = vsel %vm1669, %v1638, %v1012
      %v1676 = vsel %vm1669, %v1639, %v1014
      %v1677 = vsel %vm1669, %v1640, %v1016
      %v1678 = vsel %vm1669, %v1641, %v1018
      %v1679 = vsel %vm1669, %v1642, %v1020
      %v1680 = vsel %vm1669, %v1643, %v1022
      %v1681 = vsel %vm1669, %v1644, %v1024
      %v1682 = vsel %vm1669, %v1645, %v1026
      %v1683 = vsel %vm1669, %v1646, %v1028
      %v1684 = vsel %vm1669, %v1647, %v1030
      %v1685 = vsel %vm1669, %v1648, %v1032
      %v1686 = vsel %vm1669, %v1649, %v1034
      %v1687 = vsel %vm1669, %v1650, %v1036
      %v1688 = vsel %vm1669, %v1651, %v1038
      %v1689 = vsel %vm1669, %v1652, %v1040
      %v1690 = vsel %vm1669, %v1653, %v1042
      %v1691 = vsel %vm1669, %v1654, %v1044
      %v1692 = vsel %vm1669, %v1655, %v1046
      %v1693 = vsel %vm1669, %v1656, %v1048
      %v1694 = vsel %vm1669, %v1657, %v1050
      %v1695 = vsel %vm1669, %v1658, %v1052
      %v1696 = vsel %vm1669, %v1659, %v1054
      %v1697 = vsel %vm1669, %v1660, %v1056
      %v1698 = vsel %vm1669, %v1661, %v1058
      %v1699 = vsel %vm1669, %v1662, %v1060
      %v1700 = vsel %vm1669, %v1663, %v1062
      %v1701 = vsel %vm1669, %v1664, %v1064
      %v1702 = vsel %vm1669, %v1665, %v1066
      %v1703 = vsel %vm1669, %v1666, %v1068
      %v1704 = vsel %vm1669, %v1667, %v1070
      %v1705 = vsel %vm1669, %v1668, %v1072
      %vm1706 = vcmask 162816
      %v1707 = vsel %vm1706, %v1670, %v1115
      %v1708 = vsel %vm1706, %v1671, %v1117
      %v1709 = vsel %vm1706, %v1672, %v1119
      %v1710 = vsel %vm1706, %v1673, %v1121
      %v1711 = vsel %vm1706, %v1674, %v1123
      %v1712 = vsel %vm1706, %v1675, %v1125
      %v1713 = vsel %vm1706, %v1676, %v1127
      %v1714 = vsel %vm1706, %v1677, %v1129
      %v1715 = vsel %vm1706, %v1678, %v1131
      %v1716 = vsel %vm1706, %v1679, %v1133
      %v1717 = vsel %vm1706, %v1680, %v1135
      %v1718 = vsel %vm1706, %v1681, %v1137
      %v1719 = vsel %vm1706, %v1682, %v1139
      %v1720 = vsel %vm1706, %v1683, %v1141
      %v1721 = vsel %vm1706, %v1684, %v1143
      %v1722 = vsel %vm1706, %v1685, %v1145
      %v1723 = vsel %vm1706, %v1686, %v1147
      %v1724 = vsel %vm1706, %v1687, %v1149
      %v1725 = vsel %vm1706, %v1688, %v1151
      %v1726 = vsel %vm1706, %v1689, %v1153
      %v1727 = vsel %vm1706, %v1690, %v1155
      %v1728 = vsel %vm1706, %v1691, %v1157
      %v1729 = vsel %vm1706, %v1692, %v1159
      %v1730 = vsel %vm1706, %v1693, %v1161
      %v1731 = vsel %vm1706, %v1694, %v1163
      %v1732 = vsel %vm1706, %v1695, %v1165
      %v1733 = vsel %vm1706, %v1696, %v1167
      %v1734 = vsel %vm1706, %v1697, %v1169
      %v1735 = vsel %vm1706, %v1698, %v1171
      %v1736 = vsel %vm1706, %v1699, %v1173
      %v1737 = vsel %vm1706, %v1700, %v1175
      %v1738 = vsel %vm1706, %v1701, %v1177
      %v1739 = vsel %vm1706, %v1702, %v1179
      %v1740 = vsel %vm1706, %v1703, %v1181
      %v1741 = vsel %vm1706, %v1704, %v1183
      %v1742 = vsel %vm1706, %v1705, %v1185
      %vm1743 = vcmask 195584
      %v1744 = vsel %vm1743, %v1707, %v1225
      %v1745 = vsel %vm1743, %v1708, %v1227
      %v1746 = vsel %vm1743, %v1709, %v1229
      %v1747 = vsel %vm1743, %v1710, %v1231
      %v1748 = vsel %vm1743, %v1711, %v1233
      %v1749 = vsel %vm1743, %v1712, %v1235
      %v1750 = vsel %vm1743, %v1713, %v1237
      %v1751 = vsel %vm1743, %v1714, %v1239
      %v1752 = vsel %vm1743, %v1715, %v1241
      %v1753 = vsel %vm1743, %v1716, %v1243
      %v1754 = vsel %vm1743, %v1717, %v1245
      %v1755 = vsel %vm1743, %v1718, %v1247
      %v1756 = vsel %vm1743, %v1719, %v1249
      %v1757 = vsel %vm1743, %v1720, %v1251
      %v1758 = vsel %vm1743, %v1721, %v1253
      %v1759 = vsel %vm1743, %v1722, %v1255
      %v1760 = vsel %vm1743, %v1723, %v1257
      %v1761 = vsel %vm1743, %v1724, %v1259
      %v1762 = vsel %vm1743, %v1725, %v1261
      %v1763 = vsel %vm1743, %v1726, %v1263
      %v1764 = vsel %vm1743, %v1727, %v1265
      %v1765 = vsel %vm1743, %v1728, %v1267
      %v1766 = vsel %vm1743, %v1729, %v1269
      %v1767 = vsel %vm1743, %v1730, %v1271
      %v1768 = vsel %vm1743, %v1731, %v1273
      %v1769 = vsel %vm1743, %v1732, %v1275
      %v1770 = vsel %vm1743, %v1733, %v1277
      %v1771 = vsel %vm1743, %v1734, %v1279
      %v1772 = vsel %vm1743, %v1735, %v1281
      %v1773 = vsel %vm1743, %v1736, %v1283
      %v1774 = vsel %vm1743, %v1737, %v1285
      %v1775 = vsel %vm1743, %v1738, %v1287
      %v1776 = vsel %vm1743, %v1739, %v1289
      %v1777 = vsel %vm1743, %v1740, %v1291
      %v1778 = vsel %vm1743, %v1741, %v1293
      %v1779 = vsel %vm1743, %v1742, %v1295
      %vm1780 = vcmask 228352
      %v1781 = vsel %vm1780, %v1744, %v1339
      %v1782 = vsel %vm1780, %v1745, %v1341
      %v1783 = vsel %vm1780, %v1746, %v1343
      %v1784 = vsel %vm1780, %v1747, %v1345
      %v1785 = vsel %vm1780, %v1748, %v1347
      %v1786 = vsel %vm1780, %v1749, %v1349
      %v1787 = vsel %vm1780, %v1750, %v1351
      %v1788 = vsel %vm1780, %v1751, %v1353
      %v1789 = vsel %vm1780, %v1752, %v1355
      %v1790 = vsel %vm1780, %v1753, %v1357
      %v1791 = vsel %vm1780, %v1754, %v1359
      %v1792 = vsel %vm1780, %v1755, %v1361
      %v1793 = vsel %vm1780, %v1756, %v1363
      %v1794 = vsel %vm1780, %v1757, %v1365
      %v1795 = vsel %vm1780, %v1758, %v1367
      %v1796 = vsel %vm1780, %v1759, %v1369
      %v1797 = vsel %vm1780, %v1760, %v1371
      %v1798 = vsel %vm1780, %v1761, %v1373
      %v1799 = vsel %vm1780, %v1762, %v1375
      %v1800 = vsel %vm1780, %v1763, %v1377
      %v1801 = vsel %vm1780, %v1764, %v1379
      %v1802 = vsel %vm1780, %v1765, %v1381
      %v1803 = vsel %vm1780, %v1766, %v1383
      %v1804 = vsel %vm1780, %v1767, %v1385
      %v1805 = vsel %vm1780, %v1768, %v1387
      %v1806 = vsel %vm1780, %v1769, %v1389
      %v1807 = vsel %vm1780, %v1770, %v1391
      %v1808 = vsel %vm1780, %v1771, %v1393
      %v1809 = vsel %vm1780, %v1772, %v1395
      %v1810 = vsel %vm1780, %v1773, %v1397
      %v1811 = vsel %vm1780, %v1774, %v1399
      %v1812 = vsel %vm1780, %v1775, %v1401
      %v1813 = vsel %vm1780, %v1776, %v1403
      %v1814 = vsel %vm1780, %v1777, %v1405
      %v1815 = vsel %vm1780, %v1778, %v1407
      %v1816 = vsel %vm1780, %v1779, %v1409
      %vm1817 = vcmask 261120
      %v1818 = vsel %vm1817, %v1781, %v1452
      %v1819 = vsel %vm1817, %v1782, %v1454
      %v1820 = vsel %vm1817, %v1783, %v1456
      %v1821 = vsel %vm1817, %v1784, %v1458
      %v1822 = vsel %vm1817, %v1785, %v1460
      %v1823 = vsel %vm1817, %v1786, %v1462
      %v1824 = vsel %vm1817, %v1787, %v1464
      %v1825 = vsel %vm1817, %v1788, %v1466
      %v1826 = vsel %vm1817, %v1789, %v1468
      %v1827 = vsel %vm1817, %v1790, %v1470
      %v1828 = vsel %vm1817, %v1791, %v1472
      %v1829 = vsel %vm1817, %v1792, %v1474
      %v1830 = vsel %vm1817, %v1793, %v1476
      %v1831 = vsel %vm1817, %v1794, %v1478
      %v1832 = vsel %vm1817, %v1795, %v1480
      %v1833 = vsel %vm1817, %v1796, %v1482
      %v1834 = vsel %vm1817, %v1797, %v1484
      %v1835 = vsel %vm1817, %v1798, %v1486
      %v1836 = vsel %vm1817, %v1799, %v1488
      %v1837 = vsel %vm1817, %v1800, %v1490
      %v1838 = vsel %vm1817, %v1801, %v1492
      %v1839 = vsel %vm1817, %v1802, %v1494
      %v1840 = vsel %vm1817, %v1803, %v1496
      %v1841 = vsel %vm1817, %v1804, %v1498
      %v1842 = vsel %vm1817, %v1805, %v1500
      %v1843 = vsel %vm1817, %v1806, %v1502
      %v1844 = vsel %vm1817, %v1807, %v1504
      %v1845 = vsel %vm1817, %v1808, %v1506
      %v1846 = vsel %vm1817, %v1809, %v1508
      %v1847 = vsel %vm1817, %v1810, %v1510
      %v1848 = vsel %vm1817, %v1811, %v1512
      %v1849 = vsel %vm1817, %v1812, %v1514
      %v1850 = vsel %vm1817, %v1813, %v1516
      %v1851 = vsel %vm1817, %v1814, %v1518
      %v1852 = vsel %vm1817, %v1815, %v1520
      %v1853 = vsel %vm1817, %v1816, %v1522
      %v1854 = vpack.c.bf16 %v1819, %v1818
      %v1855 = vpack.c.bf16 %v1821, %v1820
      %v1856 = vpack.c.bf16 %v1823, %v1822
      %v1857 = vpack.c.bf16 %v1825, %v1824
      %v1858 = vpack.c.bf16 %v1827, %v1826
      %v1859 = vpack.c.bf16 %v1829, %v1828
      %v1860 = vpack.c.bf16 %v1831, %v1830
      %v1861 = vpack.c.bf16 %v1833, %v1832
      %v1862 = vpack.c.bf16 %v1835, %v1834
      %v1863 = vpack.c.bf16 %v1837, %v1836
      %v1864 = vpack.c.bf16 %v1839, %v1838
      %v1865 = vpack.c.bf16 %v1841, %v1840
      %v1866 = vpack.c.bf16 %v1843, %v1842
      %v1867 = vpack.c.bf16 %v1845, %v1844
      %v1868 = vpack.c.bf16 %v1847, %v1846
      %v1869 = vpack.c.bf16 %v1849, %v1848
      %v1870 = vpack.c.bf16 %v1851, %v1850
      %v1871 = vpack.c.bf16 %v1853, %v1852
      %v1872 = vld [vmem:[%s3] sm:$0x1]
      %v1874 = vlaneseq
      %v1875 = vshrl.u32 %v1874, 7
      %v1876 = vsub.s32 0, %v1875
      %v1877 = vrot.slane %v1872, %v1876
      %v1884 = vunpack.c.l.b16 %v428
      %v1885 = vunpack.c.l.b16 %v429
      %v1886 = vunpack.c.l.b16 %v430
      %v1887 = vunpack.c.l.b16 %v431
      %v1888 = vunpack.c.l.b16 %v432
      %v1889 = vpack.c.b16 %v1885, %v1884
      %v1890 = vpack.c.b16 %v1887, %v1886
      %v1891 = vpack.c.b16 %v1888, %v1888
      %vm1894 = vcmask 293888
      %v1896 = vsel %vm1894, %v1854, 0
      %v1899 = vsel %vm1894, %v1855, 0
      %v1902 = vsel %vm1894, %v1856, 0
      %v1905 = vsel %vm1894, %v1857, 0
      %v1908 = vsel %vm1894, %v1858, 0
      %v1911 = vsel %vm1894, %v1859, 0
      %v1914 = vsel %vm1894, %v1860, 0
      %v1917 = vsel %vm1894, %v1861, 0
      %v1920 = vsel %vm1894, %v1862, 0
      %v1923 = vsel %vm1894, %v1863, 0
      %v1926 = vsel %vm1894, %v1864, 0
      %v1929 = vsel %vm1894, %v1865, 0
      %v1932 = vsel %vm1894, %v1866, 0
      %v1935 = vsel %vm1894, %v1867, 0
      %v1938 = vsel %vm1894, %v1868, 0
      %v1941 = vsel %vm1894, %v1869, 0
      %v1944 = vsel %vm1894, %v1870, 0
      %v1947 = vsel %vm1894, %v1871, 0
      %vm1949 = vcmask 1041408
      %v1951 = vsel %vm1949, %v1891, 0
      %1953 = vmatprep.subr.bf16.mxu0 0
      %1954 = vmatpush1.bf16.msra.mxu0 0
      %1955 = vmatprep.subr.bf16.mxu0 0
      %1956 = vmatpush1.bf16.msra.mxu0 0
      %1957 = vmatprep.subr.bf16.mxu0 0
      %1958 = vmatpush1.bf16.msra.mxu0 0
      %1959 = vmatprep.subr.bf16.mxu0 0
      %1960 = vmatpush1.bf16.msra.mxu0 0
      %1961 = vmatprep.subr.bf16.mxu0 0
      %1962 = vmatpush1.bf16.msra.mxu0 0
      %1963 = vmatprep.subr.bf16.mxu0 0
      %1964 = vmatpush1.bf16.msra.mxu0 %v1951
      %1965 = vmatprep.subr.bf16.mxu0 0
      %1966 = vmatpush1.bf16.msra.mxu0 %v1890
      %1967 = vmatprep.subr.bf16.mxu0 0
      %1968 = vmatpush1.bf16.msra.mxu0 %v1889
      %1969 = vmatprep.subr.bf16.mxu0 0
      %1970 = vmatpush2.bf16.msra.mxu0 0
      %1971 = vmatprep.subr.bf16.mxu0 0
      %1972 = vmatpush2.bf16.msra.mxu0 0
      %1973 = vmatprep.subr.bf16.mxu0 0
      %1974 = vmatpush2.bf16.msra.mxu0 0
      %1975 = vmatprep.subr.bf16.mxu0 0
      %1976 = vmatpush2.bf16.msra.mxu0 0
      %1977 = vmatprep.subr.bf16.mxu0 0
      %1978 = vmatpush2.bf16.msra.mxu0 0
      %1979 = vmatprep.subr.bf16.mxu0 0
      %1980 = vmatpush2.bf16.msra.mxu0 0
      %1981 = vmatprep.subr.bf16.mxu0 0
      %1982 = vmatpush2.bf16.msra.mxu0 0
      %1983 = vmatprep.subr.bf16.mxu0 0
      %1984 = vmatpush2.bf16.msra.mxu0 0
      %1985 = vmatprep.mubr.bf16.mxu0 0
      %1986 = vmatmul.mubr.bf16.gmra.mxu0 %v1896
      %v1987 = vpop.f32.mrf.mxu0
      %v1988 = vadd.f32 %v1877, %v1987
      %v1989 = vpop.f32.mrf.mxu0
      %v1990 = vpop.f32.mrf.mxu0
      %v1991 = vadd.f32 %v1877, %v1990
      %v1992 = vpop.f32.mrf.mxu0
      %1993 = vmatprep.mubr.bf16.mxu0 0
      %1994 = vmatmul.mubr.bf16.gmra.mxu0 %v1899
      %v1995 = vpop.f32.mrf.mxu0
      %v1996 = vadd.f32 %v1877, %v1995
      %v1997 = vpop.f32.mrf.mxu0
      %v1998 = vpop.f32.mrf.mxu0
      %v1999 = vadd.f32 %v1877, %v1998
      %v2000 = vpop.f32.mrf.mxu0
      %2001 = vmatprep.mubr.bf16.mxu0 0
      %2002 = vmatmul.mubr.bf16.gmra.mxu0 %v1902
      %v2003 = vpop.f32.mrf.mxu0
      %v2004 = vadd.f32 %v1877, %v2003
      %v2005 = vpop.f32.mrf.mxu0
      %v2006 = vpop.f32.mrf.mxu0
      %v2007 = vadd.f32 %v1877, %v2006
      %v2008 = vpop.f32.mrf.mxu0
      %2009 = vmatprep.mubr.bf16.mxu0 0
      %2010 = vmatmul.mubr.bf16.gmra.mxu0 %v1905
      %v2011 = vpop.f32.mrf.mxu0
      %v2012 = vadd.f32 %v1877, %v2011
      %v2013 = vpop.f32.mrf.mxu0
      %v2014 = vpop.f32.mrf.mxu0
      %v2015 = vadd.f32 %v1877, %v2014
      %v2016 = vpop.f32.mrf.mxu0
      %2017 = vmatprep.mubr.bf16.mxu0 0
      %2018 = vmatmul.mubr.bf16.gmra.mxu0 %v1908
      %v2019 = vpop.f32.mrf.mxu0
      %v2020 = vadd.f32 %v1877, %v2019
      %v2021 = vpop.f32.mrf.mxu0
      %v2022 = vpop.f32.mrf.mxu0
      %v2023 = vadd.f32 %v1877, %v2022
      %v2024 = vpop.f32.mrf.mxu0
      %2025 = vmatprep.mubr.bf16.mxu0 0
      %2026 = vmatmul.mubr.bf16.gmra.mxu0 %v1911
      %v2027 = vpop.f32.mrf.mxu0
      %v2028 = vadd.f32 %v1877, %v2027
      %v2029 = vpop.f32.mrf.mxu0
      %v2030 = vpop.f32.mrf.mxu0
      %v2031 = vadd.f32 %v1877, %v2030
      %v2032 = vpop.f32.mrf.mxu0
      %2033 = vmatprep.mubr.bf16.mxu0 0
      %2034 = vmatmul.mubr.bf16.gmra.mxu0 %v1914
      %v2035 = vpop.f32.mrf.mxu0
      %v2036 = vadd.f32 %v1877, %v2035
      %v2037 = vpop.f32.mrf.mxu0
      %v2038 = vpop.f32.mrf.mxu0
      %v2039 = vadd.f32 %v1877, %v2038
      %v2040 = vpop.f32.mrf.mxu0
      %2041 = vmatprep.mubr.bf16.mxu0 0
      %2042 = vmatmul.mubr.bf16.gmra.mxu0 %v1917
      %v2043 = vpop.f32.mrf.mxu0
      %v2044 = vadd.f32 %v1877, %v2043
      %v2045 = vpop.f32.mrf.mxu0
      %v2046 = vpop.f32.mrf.mxu0
      %v2047 = vadd.f32 %v1877, %v2046
      %v2048 = vpop.f32.mrf.mxu0
      %2049 = vmatprep.mubr.bf16.mxu0 0
      %2050 = vmatmul.mubr.bf16.gmra.mxu0 %v1920
      %v2051 = vpop.f32.mrf.mxu0
      %v2052 = vadd.f32 %v1877, %v2051
      %v2053 = vpop.f32.mrf.mxu0
      %v2054 = vpop.f32.mrf.mxu0
      %v2055 = vadd.f32 %v1877, %v2054
      %v2056 = vpop.f32.mrf.mxu0
      %2057 = vmatprep.mubr.bf16.mxu0 0
      %2058 = vmatmul.mubr.bf16.gmra.mxu0 %v1923
      %v2059 = vpop.f32.mrf.mxu0
      %v2060 = vadd.f32 %v1877, %v2059
      %v2061 = vpop.f32.mrf.mxu0
      %v2062 = vpop.f32.mrf.mxu0
      %v2063 = vadd.f32 %v1877, %v2062
      %v2064 = vpop.f32.mrf.mxu0
      %2065 = vmatprep.mubr.bf16.mxu0 0
      %2066 = vmatmul.mubr.bf16.gmra.mxu0 %v1926
      %v2067 = vpop.f32.mrf.mxu0
      %v2068 = vadd.f32 %v1877, %v2067
      %v2069 = vpop.f32.mrf.mxu0
      %v2070 = vpop.f32.mrf.mxu0
      %v2071 = vadd.f32 %v1877, %v2070
      %v2072 = vpop.f32.mrf.mxu0
      %2073 = vmatprep.mubr.bf16.mxu0 0
      %2074 = vmatmul.mubr.bf16.gmra.mxu0 %v1929
      %v2075 = vpop.f32.mrf.mxu0
      %v2076 = vadd.f32 %v1877, %v2075
      %v2077 = vpop.f32.mrf.mxu0
      %v2078 = vpop.f32.mrf.mxu0
      %v2079 = vadd.f32 %v1877, %v2078
      %v2080 = vpop.f32.mrf.mxu0
      %2081 = vmatprep.mubr.bf16.mxu0 0
      %2082 = vmatmul.mubr.bf16.gmra.mxu0 %v1932
      %v2083 = vpop.f32.mrf.mxu0
      %v2084 = vadd.f32 %v1877, %v2083
      %v2085 = vpop.f32.mrf.mxu0
      %v2086 = vpop.f32.mrf.mxu0
      %v2087 = vadd.f32 %v1877, %v2086
      %v2088 = vpop.f32.mrf.mxu0
      %2089 = vmatprep.mubr.bf16.mxu0 0
      %2090 = vmatmul.mubr.bf16.gmra.mxu0 %v1935
      %v2091 = vpop.f32.mrf.mxu0
      %v2092 = vadd.f32 %v1877, %v2091
      %v2093 = vpop.f32.mrf.mxu0
      %v2094 = vpop.f32.mrf.mxu0
      %v2095 = vadd.f32 %v1877, %v2094
      %v2096 = vpop.f32.mrf.mxu0
      %2097 = vmatprep.mubr.bf16.mxu0 0
      %2098 = vmatmul.mubr.bf16.gmra.mxu0 %v1938
      %v2099 = vpop.f32.mrf.mxu0
      %v2100 = vadd.f32 %v1877, %v2099
      %v2101 = vpop.f32.mrf.mxu0
      %v2102 = vpop.f32.mrf.mxu0
      %v2103 = vadd.f32 %v1877, %v2102
      %v2104 = vpop.f32.mrf.mxu0
      %2105 = vmatprep.mubr.bf16.mxu0 0
      %2106 = vmatmul.mubr.bf16.gmra.mxu0 %v1941
      %v2107 = vpop.f32.mrf.mxu0
      %v2108 = vadd.f32 %v1877, %v2107
      %v2109 = vpop.f32.mrf.mxu0
      %v2110 = vpop.f32.mrf.mxu0
      %v2111 = vadd.f32 %v1877, %v2110
      %v2112 = vpop.f32.mrf.mxu0
      %2113 = vmatprep.mubr.bf16.mxu0 0
      %2114 = vmatmul.mubr.bf16.gmra.mxu0 %v1944
      %v2115 = vpop.f32.mrf.mxu0
      %v2116 = vadd.f32 %v1877, %v2115
      %v2117 = vpop.f32.mrf.mxu0
      %v2118 = vpop.f32.mrf.mxu0
      %v2119 = vadd.f32 %v1877, %v2118
      %v2120 = vpop.f32.mrf.mxu0
      %2121 = vmatprep.mubr.bf16.mxu0 0
      %2122 = vmatmul.mubr.bf16.gmra.mxu0 %v1947
      %v2123 = vpop.f32.mrf.mxu0
      %v2124 = vadd.f32 %v1877, %v2123
      %v2125 = vpop.f32.mrf.mxu0
      %v2126 = vpop.f32.mrf.mxu0
      %v2127 = vadd.f32 %v1877, %v2126
      %v2128 = vpop.f32.mrf.mxu0
      %2129 = vdwg.mxu0
      %v2130 = vmax.f32 %v1988, 0.0
      %v2131 = vmax.f32 %v1991, 0.0
      %v2132 = vmax.f32 %v1996, 0.0
      %v2133 = vmax.f32 %v1999, 0.0
      %v2134 = vmax.f32 %v2004, 0.0
      %v2135 = vmax.f32 %v2007, 0.0
      %v2136 = vmax.f32 %v2012, 0.0
      %v2137 = vmax.f32 %v2015, 0.0
      %v2138 = vmax.f32 %v2020, 0.0
      %v2139 = vmax.f32 %v2023, 0.0
      %v2140 = vmax.f32 %v2028, 0.0
      %v2141 = vmax.f32 %v2031, 0.0
      %v2142 = vmax.f32 %v2036, 0.0
      %v2143 = vmax.f32 %v2039, 0.0
      %v2144 = vmax.f32 %v2044, 0.0
      %v2145 = vmax.f32 %v2047, 0.0
      %v2146 = vmax.f32 %v2052, 0.0
      %v2147 = vmax.f32 %v2055, 0.0
      %v2148 = vmax.f32 %v2060, 0.0
      %v2149 = vmax.f32 %v2063, 0.0
      %v2150 = vmax.f32 %v2068, 0.0
      %v2151 = vmax.f32 %v2071, 0.0
      %v2152 = vmax.f32 %v2076, 0.0
      %v2153 = vmax.f32 %v2079, 0.0
      %v2154 = vmax.f32 %v2084, 0.0
      %v2155 = vmax.f32 %v2087, 0.0
      %v2156 = vmax.f32 %v2092, 0.0
      %v2157 = vmax.f32 %v2095, 0.0
      %v2158 = vmax.f32 %v2100, 0.0
      %v2159 = vmax.f32 %v2103, 0.0
      %v2160 = vmax.f32 %v2108, 0.0
      %v2161 = vmax.f32 %v2111, 0.0
      %v2162 = vmax.f32 %v2116, 0.0
      %v2163 = vmax.f32 %v2119, 0.0
      %v2164 = vmax.f32 %v2124, 0.0
      %v2165 = vmax.f32 %v2127, 0.0
      %2166 = vst.msk [vmem:[#allocation2 + $0x1] sm:$0xff] %vm293, %v2130
      %2167 = vst.msk [vmem:[#allocation2 + $0x9] sm:$0xff] %vm293, %v2131
      %2168 = vst.msk [vmem:[#allocation2 + $0x19] sm:$0xff] %vm293, %v2132
      %2169 = vst.msk [vmem:[#allocation2 + $0x21] sm:$0xff] %vm293, %v2133
      %2170 = vst.msk [vmem:[#allocation2 + $0x31] sm:$0xff] %vm293, %v2134
      %2171 = vst.msk [vmem:[#allocation2 + $0x39] sm:$0xff] %vm293, %v2135
      %2172 = vst.msk [vmem:[#allocation2 + $0x49] sm:$0xff] %vm293, %v2136
      %2173 = vst.msk [vmem:[#allocation2 + $0x51] sm:$0xff] %vm293, %v2137
      %2174 = vst.msk [vmem:[#allocation2 + $0x61] sm:$0xff] %vm293, %v2138
      %2175 = vst.msk [vmem:[#allocation2 + $0x69] sm:$0xff] %vm293, %v2139
      %2176 = vst.msk [vmem:[#allocation2 + $0x79] sm:$0xff] %vm293, %v2140
      %2177 = vst.msk [vmem:[#allocation2 + $0x81] sm:$0xff] %vm293, %v2141
      %2178 = vst.msk [vmem:[#allocation2 + $0x91] sm:$0xff] %vm293, %v2142
      %2179 = vst.msk [vmem:[#allocation2 + $0x99] sm:$0xff] %vm293, %v2143
      %2180 = vst.msk [vmem:[#allocation2 + $0xa9] sm:$0xff] %vm293, %v2144
      %2181 = vst.msk [vmem:[#allocation2 + $0xb1] sm:$0xff] %vm293, %v2145
      %2182 = vst.msk [vmem:[#allocation2 + $0xc1] sm:$0xff] %vm293, %v2146
      %2183 = vst.msk [vmem:[#allocation2 + $0xc9] sm:$0xff] %vm293, %v2147
      %2184 = vst.msk [vmem:[#allocation2 + $0xd9] sm:$0xff] %vm293, %v2148
      %2185 = vst.msk [vmem:[#allocation2 + $0xe1] sm:$0xff] %vm293, %v2149
      %2186 = vst.msk [vmem:[#allocation2 + $0xf1] sm:$0xff] %vm293, %v2150
      %2187 = vst.msk [vmem:[#allocation2 + $0xf9] sm:$0xff] %vm293, %v2151
      %2188 = vst.msk [vmem:[#allocation2 + $0x109] sm:$0xff] %vm293, %v2152
      %2189 = vst.msk [vmem:[#allocation2 + $0x111] sm:$0xff] %vm293, %v2153
      %2190 = vst.msk [vmem:[#allocation2 + $0x121] sm:$0xff] %vm293, %v2154
      %2191 = vst.msk [vmem:[#allocation2 + $0x129] sm:$0xff] %vm293, %v2155
      %2192 = vst.msk [vmem:[#allocation2 + $0x139] sm:$0xff] %vm293, %v2156
      %2193 = vst.msk [vmem:[#allocation2 + $0x141] sm:$0xff] %vm293, %v2157
      %2194 = vst.msk [vmem:[#allocation2 + $0x151] sm:$0xff] %vm293, %v2158
      %2195 = vst.msk [vmem:[#allocation2 + $0x159] sm:$0xff] %vm293, %v2159
      %2196 = vst.msk [vmem:[#allocation2 + $0x169] sm:$0xff] %vm293, %v2160
      %2197 = vst.msk [vmem:[#allocation2 + $0x171] sm:$0xff] %vm293, %v2161
      %2198 = vst.msk [vmem:[#allocation2 + $0x181] sm:$0xff] %vm293, %v2162
      %2199 = vst.msk [vmem:[#allocation2 + $0x189] sm:$0xff] %vm293, %v2163
      %2200 = vst.msk [vmem:[#allocation2 + $0x199] sm:$0xff] %vm293, %v2164
      %2201 = vst.msk [vmem:[#allocation2 + $0x1a1] sm:$0xff] %vm293, %v2165
      %2202 = vst.msk [vmem:[#allocation2 + $0x1] sm:$0xff] %vm293, 0.0
      %2203 = vst.msk [vmem:[#allocation2 + $0x9] sm:$0xff] %vm293, 0.0
      %s2204 = scalar_lea.vmem [#allocation2], 408
      %2205 = vst.msk [vmem:[%s2204 + $0x1] sm:$0xff] %vm293, 0.0
      %2206 = vst.msk [vmem:[%s2204 + $0x9] sm:$0xff] %vm293, 0.0
      %v2207 = vld [vmem:[#allocation2] sm:$0xff]
      %v2208 = vld [vmem:[#allocation2 + $0x8] sm:$0xff]
      %v2209 = vld [vmem:[#allocation2 + $0x10] sm:$0x3]
      %v2210 = vld [vmem:[#allocation2 + $0x18] sm:$0xff]
      %v2211 = vld [vmem:[#allocation2 + $0x20] sm:$0xff]
      %v2212 = vld [vmem:[#allocation2 + $0x28] sm:$0x3]
      %v2213 = vld [vmem:[#allocation2 + $0x30] sm:$0xff]
      %v2214 = vld [vmem:[#allocation2 + $0x38] sm:$0xff]
      %v2215 = vld [vmem:[#allocation2 + $0x40] sm:$0x3]
      %v2216 = vld [vmem:[#allocation2 + $0x48] sm:$0xff]
      %v2217 = vld [vmem:[#allocation2 + $0x50] sm:$0xff]
      %v2218 = vld [vmem:[#allocation2 + $0x58] sm:$0x3]
      %v2219 = vld [vmem:[#allocation2 + $0x60] sm:$0xff]
      %v2220 = vld [vmem:[#allocation2 + $0x68] sm:$0xff]
      %v2221 = vld [vmem:[#allocation2 + $0x70] sm:$0x3]
      %v2222 = vld [vmem:[#allocation2 + $0x78] sm:$0xff]
      %v2223 = vld [vmem:[#allocation2 + $0x80] sm:$0xff]
      %v2224 = vld [vmem:[#allocation2 + $0x88] sm:$0x3]
      %v2225 = vld [vmem:[#allocation2 + $0x90] sm:$0xff]
      %v2226 = vld [vmem:[#allocation2 + $0x98] sm:$0xff]
      %v2227 = vld [vmem:[#allocation2 + $0xa0] sm:$0x3]
      %v2228 = vld [vmem:[#allocation2 + $0xa8] sm:$0xff]
      %v2229 = vld [vmem:[#allocation2 + $0xb0] sm:$0xff]
      %v2230 = vld [vmem:[#allocation2 + $0xb8] sm:$0x3]
      %v2231 = vld [vmem:[#allocation2 + $0xc0] sm:$0xff]
      %v2232 = vld [vmem:[#allocation2 + $0xc8] sm:$0xff]
      %v2233 = vld [vmem:[#allocation2 + $0xd0] sm:$0x3]
      %v2234 = vld [vmem:[#allocation2 + $0xd8] sm:$0xff]
      %v2235 = vld [vmem:[#allocation2 + $0xe0] sm:$0xff]
      %v2236 = vld [vmem:[#allocation2 + $0xe8] sm:$0x3]
      %v2237 = vld [vmem:[#allocation2 + $0xf0] sm:$0xff]
      %v2238 = vld [vmem:[#allocation2 + $0xf8] sm:$0xff]
      %v2239 = vld [vmem:[#allocation2 + $0x100] sm:$0x3]
      %v2240 = vld [vmem:[#allocation2 + $0x108] sm:$0xff]
      %v2241 = vld [vmem:[#allocation2 + $0x110] sm:$0xff]
      %v2242 = vld [vmem:[#allocation2 + $0x118] sm:$0x3]
      %v2243 = vld [vmem:[#allocation2 + $0x120] sm:$0xff]
      %v2244 = vld [vmem:[#allocation2 + $0x128] sm:$0xff]
      %v2245 = vld [vmem:[#allocation2 + $0x130] sm:$0x3]
      %v2246 = vld [vmem:[#allocation2 + $0x138] sm:$0xff]
      %v2247 = vld [vmem:[#allocation2 + $0x140] sm:$0xff]
      %v2248 = vld [vmem:[#allocation2 + $0x148] sm:$0x3]
      %v2249 = vld [vmem:[#allocation2 + $0x150] sm:$0xff]
      %v2250 = vld [vmem:[#allocation2 + $0x158] sm:$0xff]
      %v2251 = vld [vmem:[#allocation2 + $0x160] sm:$0x3]
      %v2252 = vld [vmem:[#allocation2 + $0x168] sm:$0xff]
      %v2253 = vld [vmem:[#allocation2 + $0x170] sm:$0xff]
      %v2254 = vld [vmem:[#allocation2 + $0x178] sm:$0x3]
      %v2255 = vld [vmem:[#allocation2 + $0x180] sm:$0xff]
      %v2256 = vld [vmem:[#allocation2 + $0x188] sm:$0xff]
      %v2257 = vld [vmem:[#allocation2 + $0x190] sm:$0x3]
      %v2258 = vld [vmem:[#allocation2 + $0x198] sm:$0xff]
      %v2259 = vld [vmem:[#allocation2 + $0x1a0] sm:$0xff]
      %v2260 = vld [vmem:[#allocation2 + $0x1a8] sm:$0x3]
      %v2261 = vld [vmem:[%s2] sm:$0xf]
      %v2262 = vld [vmem:[%s2 + $0x4] sm:$0xf]
      %v2263 = vld [vmem:[%s2 + $0x8] sm:$0xf]
      %v2264 = vld [vmem:[%s2 + $0xc] sm:$0xf]
      %v2265 = vld [vmem:[%s2 + $0x10] sm:$0x3]
      %v2314 = vrot.slane %v2207, 1
      %v2315 = vrot.slane %v2208, 1
      %v2316 = vsel %vm487, %v2314, %v2315
      %v2317 = vrot.slane %v2209, 1
      %v2318 = vsel %vm487, %v2315, %v2317
      %v2319 = vrot.slane %v2210, 1
      %v2320 = vrot.slane %v2211, 1
      %v2321 = vsel %vm487, %v2319, %v2320
      %v2322 = vrot.slane %v2212, 1
      %v2323 = vsel %vm487, %v2320, %v2322
      %v2324 = vrot.slane %v2213, 1
      %v2325 = vrot.slane %v2214, 1
      %v2326 = vsel %vm487, %v2324, %v2325
      %v2327 = vrot.slane %v2215, 1
      %v2328 = vsel %vm487, %v2325, %v2327
      %v2329 = vrot.slane %v2216, 1
      %v2330 = vrot.slane %v2217, 1
      %v2331 = vsel %vm487, %v2329, %v2330
      %v2332 = vrot.slane %v2218, 1
      %v2333 = vsel %vm487, %v2330, %v2332
      %v2334 = vrot.slane %v2219, 1
      %v2335 = vrot.slane %v2220, 1
      %v2336 = vsel %vm487, %v2334, %v2335
      %v2337 = vrot.slane %v2221, 1
      %v2338 = vsel %vm487, %v2335, %v2337
      %v2339 = vrot.slane %v2222, 1
      %v2340 = vrot.slane %v2223, 1
      %v2341 = vsel %vm487, %v2339, %v2340
      %v2342 = vrot.slane %v2224, 1
      %v2343 = vsel %vm487, %v2340, %v2342
      %v2344 = vrot.slane %v2225, 1
      %v2345 = vrot.slane %v2226, 1
      %v2346 = vsel %vm487, %v2344, %v2345
      %v2347 = vrot.slane %v2227, 1
      %v2348 = vsel %vm487, %v2345, %v2347
      %v2349 = vrot.slane %v2228, 1
      %v2350 = vrot.slane %v2229, 1
      %v2351 = vsel %vm487, %v2349, %v2350
      %v2352 = vrot.slane %v2230, 1
      %v2353 = vsel %vm487, %v2350, %v2352
      %v2354 = vrot.slane %v2231, 1
      %v2355 = vrot.slane %v2232, 1
      %v2356 = vsel %vm487, %v2354, %v2355
      %v2357 = vrot.slane %v2233, 1
      %v2358 = vsel %vm487, %v2355, %v2357
      %v2359 = vrot.slane %v2234, 1
      %v2360 = vrot.slane %v2235, 1
      %v2361 = vsel %vm487, %v2359, %v2360
      %v2362 = vrot.slane %v2236, 1
      %v2363 = vsel %vm487, %v2360, %v2362
      %v2364 = vrot.slane %v2237, 1
      %v2365 = vrot.slane %v2238, 1
      %v2366 = vsel %vm487, %v2364, %v2365
      %v2367 = vrot.slane %v2239, 1
      %v2368 = vsel %vm487, %v2365, %v2367
      %v2369 = vrot.slane %v2240, 1
      %v2370 = vrot.slane %v2241, 1
      %v2371 = vsel %vm487, %v2369, %v2370
      %v2372 = vrot.slane %v2242, 1
      %v2373 = vsel %vm487, %v2370, %v2372
      %v2374 = vrot.slane %v2243, 1
      %v2375 = vrot.slane %v2244, 1
      %v2376 = vsel %vm487, %v2374, %v2375
      %v2377 = vrot.slane %v2245, 1
      %v2378 = vsel %vm487, %v2375, %v2377
      %v2379 = vrot.slane %v2246, 1
      %v2380 = vrot.slane %v2247, 1
      %v2381 = vsel %vm487, %v2379, %v2380
      %v2382 = vrot.slane %v2248, 1
      %v2383 = vsel %vm487, %v2380, %v2382
      %v2384 = vrot.slane %v2249, 1
      %v2385 = vrot.slane %v2250, 1
      %v2386 = vsel %vm487, %v2384, %v2385
      %v2387 = vrot.slane %v2251, 1
      %v2388 = vsel %vm487, %v2385, %v2387
      %v2389 = vrot.slane %v2252, 1
      %v2390 = vrot.slane %v2253, 1
      %v2391 = vsel %vm487, %v2389, %v2390
      %v2392 = vrot.slane %v2254, 1
      %v2393 = vsel %vm487, %v2390, %v2392
      %2394 = vrot.lane.b32.xlu0 %v2316, 4
      %v2395 = vpop.permute.xlu0 %2394
      %2396 = vrot.lane.b32.xlu0 %v2318, 4
      %v2397 = vpop.permute.xlu0 %2396
      %2398 = vrot.lane.b32.xlu0 %v2321, 4
      %v2399 = vpop.permute.xlu0 %2398
      %2400 = vrot.lane.b32.xlu0 %v2323, 4
      %v2401 = vpop.permute.xlu0 %2400
      %2402 = vrot.lane.b32.xlu0 %v2326, 4
      %v2403 = vpop.permute.xlu0 %2402
      %2404 = vrot.lane.b32.xlu0 %v2328, 4
      %v2405 = vpop.permute.xlu0 %2404
      %2406 = vrot.lane.b32.xlu0 %v2331, 4
      %v2407 = vpop.permute.xlu0 %2406
      %2408 = vrot.lane.b32.xlu0 %v2333, 4
      %v2409 = vpop.permute.xlu0 %2408
      %2410 = vrot.lane.b32.xlu0 %v2336, 4
      %v2411 = vpop.permute.xlu0 %2410
      %2412 = vrot.lane.b32.xlu0 %v2338, 4
      %v2413 = vpop.permute.xlu0 %2412
      %2414 = vrot.lane.b32.xlu0 %v2341, 4
      %v2415 = vpop.permute.xlu0 %2414
      %2416 = vrot.lane.b32.xlu0 %v2343, 4
      %v2417 = vpop.permute.xlu0 %2416
      %2418 = vrot.lane.b32.xlu0 %v2346, 4
      %v2419 = vpop.permute.xlu0 %2418
      %2420 = vrot.lane.b32.xlu0 %v2348, 4
      %v2421 = vpop.permute.xlu0 %2420
      %2422 = vrot.lane.b32.xlu0 %v2351, 4
      %v2423 = vpop.permute.xlu0 %2422
      %2424 = vrot.lane.b32.xlu0 %v2353, 4
      %v2425 = vpop.permute.xlu0 %2424
      %2426 = vrot.lane.b32.xlu0 %v2356, 4
      %v2427 = vpop.permute.xlu0 %2426
      %2428 = vrot.lane.b32.xlu0 %v2358, 4
      %v2429 = vpop.permute.xlu0 %2428
      %2430 = vrot.lane.b32.xlu0 %v2361, 4
      %v2431 = vpop.permute.xlu0 %2430
      %2432 = vrot.lane.b32.xlu0 %v2363, 4
      %v2433 = vpop.permute.xlu0 %2432
      %2434 = vrot.lane.b32.xlu0 %v2366, 4
      %v2435 = vpop.permute.xlu0 %2434
      %2436 = vrot.lane.b32.xlu0 %v2368, 4
      %v2437 = vpop.permute.xlu0 %2436
      %2438 = vrot.lane.b32.xlu0 %v2371, 4
      %v2439 = vpop.permute.xlu0 %2438
      %2440 = vrot.lane.b32.xlu0 %v2373, 4
      %v2441 = vpop.permute.xlu0 %2440
      %2442 = vrot.lane.b32.xlu0 %v2376, 4
      %v2443 = vpop.permute.xlu0 %2442
      %2444 = vrot.lane.b32.xlu0 %v2378, 4
      %v2445 = vpop.permute.xlu0 %2444
      %2446 = vrot.lane.b32.xlu0 %v2381, 4
      %v2447 = vpop.permute.xlu0 %2446
      %2448 = vrot.lane.b32.xlu0 %v2383, 4
      %v2449 = vpop.permute.xlu0 %2448
      %2450 = vrot.lane.b32.xlu0 %v2386, 4
      %v2451 = vpop.permute.xlu0 %2450
      %2452 = vrot.lane.b32.xlu0 %v2388, 4
      %v2453 = vpop.permute.xlu0 %2452
      %2454 = vrot.lane.b32.xlu0 %v2391, 4
      %v2455 = vpop.permute.xlu0 %2454
      %2456 = vrot.lane.b32.xlu0 %v2393, 4
      %v2457 = vpop.permute.xlu0 %2456
      %v2490 = vrot.slane %v2207, 2
      %v2491 = vrot.slane %v2208, 2
      %v2492 = vsel %vm686, %v2490, %v2491
      %v2493 = vrot.slane %v2209, 2
      %v2494 = vsel %vm686, %v2491, %v2493
      %v2495 = vrot.slane %v2210, 2
      %v2496 = vrot.slane %v2211, 2
      %v2497 = vsel %vm686, %v2495, %v2496
      %v2498 = vrot.slane %v2212, 2
      %v2499 = vsel %vm686, %v2496, %v2498
      %v2500 = vrot.slane %v2213, 2
      %v2501 = vrot.slane %v2214, 2
      %v2502 = vsel %vm686, %v2500, %v2501
      %v2503 = vrot.slane %v2215, 2
      %v2504 = vsel %vm686, %v2501, %v2503
      %v2505 = vrot.slane %v2216, 2
      %v2506 = vrot.slane %v2217, 2
      %v2507 = vsel %vm686, %v2505, %v2506
      %v2508 = vrot.slane %v2218, 2
      %v2509 = vsel %vm686, %v2506, %v2508
      %v2510 = vrot.slane %v2219, 2
      %v2511 = vrot.slane %v2220, 2
      %v2512 = vsel %vm686, %v2510, %v2511
      %v2513 = vrot.slane %v2221, 2
      %v2514 = vsel %vm686, %v2511, %v2513
      %v2515 = vrot.slane %v2222, 2
      %v2516 = vrot.slane %v2223, 2
      %v2517 = vsel %vm686, %v2515, %v2516
      %v2518 = vrot.slane %v2224, 2
      %v2519 = vsel %vm686, %v2516, %v2518
      %v2520 = vrot.slane %v2225, 2
      %v2521 = vrot.slane %v2226, 2
      %v2522 = vsel %vm686, %v2520, %v2521
      %v2523 = vrot.slane %v2227, 2
      %v2524 = vsel %vm686, %v2521, %v2523
      %v2525 = vrot.slane %v2228, 2
      %v2526 = vrot.slane %v2229, 2
      %v2527 = vsel %vm686, %v2525, %v2526
      %v2528 = vrot.slane %v2230, 2
      %v2529 = vsel %vm686, %v2526, %v2528
      %v2530 = vrot.slane %v2231, 2
      %v2531 = vrot.slane %v2232, 2
      %v2532 = vsel %vm686, %v2530, %v2531
      %v2533 = vrot.slane %v2233, 2
      %v2534 = vsel %vm686, %v2531, %v2533
      %v2535 = vrot.slane %v2234, 2
      %v2536 = vrot.slane %v2235, 2
      %v2537 = vsel %vm686, %v2535, %v2536
      %v2538 = vrot.slane %v2236, 2
      %v2539 = vsel %vm686, %v2536, %v2538
      %v2540 = vrot.slane %v2237, 2
      %v2541 = vrot.slane %v2238, 2
      %v2542 = vsel %vm686, %v2540, %v2541
      %v2543 = vrot.slane %v2239, 2
      %v2544 = vsel %vm686, %v2541, %v2543
      %v2545 = vrot.slane %v2240, 2
      %v2546 = vrot.slane %v2241, 2
      %v2547 = vsel %vm686, %v2545, %v2546
      %v2548 = vrot.slane %v2242, 2
      %v2549 = vsel %vm686, %v2546, %v2548
      %v2550 = vrot.slane %v2243, 2
      %v2551 = vrot.slane %v2244, 2
      %v2552 = vsel %vm686, %v2550, %v2551
      %v2553 = vrot.slane %v2245, 2
      %v2554 = vsel %vm686, %v2551, %v2553
      %v2555 = vrot.slane %v2246, 2
      %v2556 = vrot.slane %v2247, 2
      %v2557 = vsel %vm686, %v2555, %v2556
      %v2558 = vrot.slane %v2248, 2
      %v2559 = vsel %vm686, %v2556, %v2558
      %v2560 = vrot.slane %v2249, 2
      %v2561 = vrot.slane %v2250, 2
      %v2562 = vsel %vm686, %v2560, %v2561
      %v2563 = vrot.slane %v2251, 2
      %v2564 = vsel %vm686, %v2561, %v2563
      %v2565 = vrot.slane %v2252, 2
      %v2566 = vrot.slane %v2253, 2
      %v2567 = vsel %vm686, %v2565, %v2566
      %v2568 = vrot.slane %v2254, 2
      %v2569 = vsel %vm686, %v2566, %v2568
      %2570 = vrot.lane.b32.xlu0 %v2492, 8
      %v2571 = vpop.permute.xlu0 %2570
      %2572 = vrot.lane.b32.xlu0 %v2494, 8
      %v2573 = vpop.permute.xlu0 %2572
      %2574 = vrot.lane.b32.xlu0 %v2497, 8
      %v2575 = vpop.permute.xlu0 %2574
      %2576 = vrot.lane.b32.xlu0 %v2499, 8
      %v2577 = vpop.permute.xlu0 %2576
      %2578 = vrot.lane.b32.xlu0 %v2502, 8
      %v2579 = vpop.permute.xlu0 %2578
      %2580 = vrot.lane.b32.xlu0 %v2504, 8
      %v2581 = vpop.permute.xlu0 %2580
      %2582 = vrot.lane.b32.xlu0 %v2507, 8
      %v2583 = vpop.permute.xlu0 %2582
      %2584 = vrot.lane.b32.xlu0 %v2509, 8
      %v2585 = vpop.permute.xlu0 %2584
      %2586 = vrot.lane.b32.xlu0 %v2512, 8
      %v2587 = vpop.permute.xlu0 %2586
      %2588 = vrot.lane.b32.xlu0 %v2514, 8
      %v2589 = vpop.permute.xlu0 %2588
      %2590 = vrot.lane.b32.xlu0 %v2517, 8
      %v2591 = vpop.permute.xlu0 %2590
      %2592 = vrot.lane.b32.xlu0 %v2519, 8
      %v2593 = vpop.permute.xlu0 %2592
      %2594 = vrot.lane.b32.xlu0 %v2522, 8
      %v2595 = vpop.permute.xlu0 %2594
      %2596 = vrot.lane.b32.xlu0 %v2524, 8
      %v2597 = vpop.permute.xlu0 %2596
      %2598 = vrot.lane.b32.xlu0 %v2527, 8
      %v2599 = vpop.permute.xlu0 %2598
      %2600 = vrot.lane.b32.xlu0 %v2529, 8
      %v2601 = vpop.permute.xlu0 %2600
      %2602 = vrot.lane.b32.xlu0 %v2532, 8
      %v2603 = vpop.permute.xlu0 %2602
      %2604 = vrot.lane.b32.xlu0 %v2534, 8
      %v2605 = vpop.permute.xlu0 %2604
      %2606 = vrot.lane.b32.xlu0 %v2537, 8
      %v2607 = vpop.permute.xlu0 %2606
      %2608 = vrot.lane.b32.xlu0 %v2539, 8
      %v2609 = vpop.permute.xlu0 %2608
      %2610 = vrot.lane.b32.xlu0 %v2542, 8
      %v2611 = vpop.permute.xlu0 %2610
      %2612 = vrot.lane.b32.xlu0 %v2544, 8
      %v2613 = vpop.permute.xlu0 %2612
      %2614 = vrot.lane.b32.xlu0 %v2547, 8
      %v2615 = vpop.permute.xlu0 %2614
      %2616 = vrot.lane.b32.xlu0 %v2549, 8
      %v2617 = vpop.permute.xlu0 %2616
      %2618 = vrot.lane.b32.xlu0 %v2552, 8
      %v2619 = vpop.permute.xlu0 %2618
      %2620 = vrot.lane.b32.xlu0 %v2554, 8
      %v2621 = vpop.permute.xlu0 %2620
      %2622 = vrot.lane.b32.xlu0 %v2557, 8
      %v2623 = vpop.permute.xlu0 %2622
      %2624 = vrot.lane.b32.xlu0 %v2559, 8
      %v2625 = vpop.permute.xlu0 %2624
      %2626 = vrot.lane.b32.xlu0 %v2562, 8
      %v2627 = vpop.permute.xlu0 %2626
      %2628 = vrot.lane.b32.xlu0 %v2564, 8
      %v2629 = vpop.permute.xlu0 %2628
      %2630 = vrot.lane.b32.xlu0 %v2567, 8
      %v2631 = vpop.permute.xlu0 %2630
      %2632 = vrot.lane.b32.xlu0 %v2569, 8
      %v2633 = vpop.permute.xlu0 %2632
      %2668 = vrot.lane.b32.xlu0 %v2210, 12
      %v2669 = vpop.permute.xlu0 %2668
      %2670 = vrot.lane.b32.xlu0 %v2211, 12
      %v2671 = vpop.permute.xlu0 %2670
      %2672 = vrot.lane.b32.xlu0 %v2213, 12
      %v2673 = vpop.permute.xlu0 %2672
      %2674 = vrot.lane.b32.xlu0 %v2214, 12
      %v2675 = vpop.permute.xlu0 %2674
      %2676 = vrot.lane.b32.xlu0 %v2216, 12
      %v2677 = vpop.permute.xlu0 %2676
      %2678 = vrot.lane.b32.xlu0 %v2217, 12
      %v2679 = vpop.permute.xlu0 %2678
      %2680 = vrot.lane.b32.xlu0 %v2219, 12
      %v2681 = vpop.permute.xlu0 %2680
      %2682 = vrot.lane.b32.xlu0 %v2220, 12
      %v2683 = vpop.permute.xlu0 %2682
      %2684 = vrot.lane.b32.xlu0 %v2222, 12
      %v2685 = vpop.permute.xlu0 %2684
      %2686 = vrot.lane.b32.xlu0 %v2223, 12
      %v2687 = vpop.permute.xlu0 %2686
      %2688 = vrot.lane.b32.xlu0 %v2225, 12
      %v2689 = vpop.permute.xlu0 %2688
      %2690 = vrot.lane.b32.xlu0 %v2226, 12
      %v2691 = vpop.permute.xlu0 %2690
      %2692 = vrot.lane.b32.xlu0 %v2228, 12
      %v2693 = vpop.permute.xlu0 %2692
      %2694 = vrot.lane.b32.xlu0 %v2229, 12
      %v2695 = vpop.permute.xlu0 %2694
      %2696 = vrot.lane.b32.xlu0 %v2231, 12
      %v2697 = vpop.permute.xlu0 %2696
      %2698 = vrot.lane.b32.xlu0 %v2232, 12
      %v2699 = vpop.permute.xlu0 %2698
      %2700 = vrot.lane.b32.xlu0 %v2234, 12
      %v2701 = vpop.permute.xlu0 %2700
      %2702 = vrot.lane.b32.xlu0 %v2235, 12
      %v2703 = vpop.permute.xlu0 %2702
      %2704 = vrot.lane.b32.xlu0 %v2237, 12
      %v2705 = vpop.permute.xlu0 %2704
      %2706 = vrot.lane.b32.xlu0 %v2238, 12
      %v2707 = vpop.permute.xlu0 %2706
      %2708 = vrot.lane.b32.xlu0 %v2240, 12
      %v2709 = vpop.permute.xlu0 %2708
      %2710 = vrot.lane.b32.xlu0 %v2241, 12
      %v2711 = vpop.permute.xlu0 %2710
      %2712 = vrot.lane.b32.xlu0 %v2243, 12
      %v2713 = vpop.permute.xlu0 %2712
      %2714 = vrot.lane.b32.xlu0 %v2244, 12
      %v2715 = vpop.permute.xlu0 %2714
      %2716 = vrot.lane.b32.xlu0 %v2246, 12
      %v2717 = vpop.permute.xlu0 %2716
      %2718 = vrot.lane.b32.xlu0 %v2247, 12
      %v2719 = vpop.permute.xlu0 %2718
      %2720 = vrot.lane.b32.xlu0 %v2249, 12
      %v2721 = vpop.permute.xlu0 %2720
      %2722 = vrot.lane.b32.xlu0 %v2250, 12
      %v2723 = vpop.permute.xlu0 %2722
      %2724 = vrot.lane.b32.xlu0 %v2252, 12
      %v2725 = vpop.permute.xlu0 %2724
      %2726 = vrot.lane.b32.xlu0 %v2253, 12
      %v2727 = vpop.permute.xlu0 %2726
      %2728 = vrot.lane.b32.xlu0 %v2255, 12
      %v2729 = vpop.permute.xlu0 %2728
      %2730 = vrot.lane.b32.xlu0 %v2256, 12
      %v2731 = vpop.permute.xlu0 %2730
      %v2765 = vrot.slane %v2255, 1
      %v2766 = vrot.slane %v2256, 1
      %v2767 = vsel %vm487, %v2765, %v2766
      %v2768 = vrot.slane %v2257, 1
      %v2769 = vsel %vm487, %v2766, %v2768
      %2770 = vrot.lane.b32.xlu0 %v2321, 16
      %v2771 = vpop.permute.xlu0 %2770
      %2772 = vrot.lane.b32.xlu0 %v2323, 16
      %v2773 = vpop.permute.xlu0 %2772
      %2774 = vrot.lane.b32.xlu0 %v2326, 16
      %v2775 = vpop.permute.xlu0 %2774
      %2776 = vrot.lane.b32.xlu0 %v2328, 16
      %v2777 = vpop.permute.xlu0 %2776
      %2778 = vrot.lane.b32.xlu0 %v2331, 16
      %v2779 = vpop.permute.xlu0 %2778
      %2780 = vrot.lane.b32.xlu0 %v2333, 16
      %v2781 = vpop.permute.xlu0 %2780
      %2782 = vrot.lane.b32.xlu0 %v2336, 16
      %v2783 = vpop.permute.xlu0 %2782
      %2784 = vrot.lane.b32.xlu0 %v2338, 16
      %v2785 = vpop.permute.xlu0 %2784
      %2786 = vrot.lane.b32.xlu0 %v2341, 16
      %v2787 = vpop.permute.xlu0 %2786
      %2788 = vrot.lane.b32.xlu0 %v2343, 16
      %v2789 = vpop.permute.xlu0 %2788
      %2790 = vrot.lane.b32.xlu0 %v2346, 16
      %v2791 = vpop.permute.xlu0 %2790
      %2792 = vrot.lane.b32.xlu0 %v2348, 16
      %v2793 = vpop.permute.xlu0 %2792
      %2794 = vrot.lane.b32.xlu0 %v2351, 16
      %v2795 = vpop.permute.xlu0 %2794
      %2796 = vrot.lane.b32.xlu0 %v2353, 16
      %v2797 = vpop.permute.xlu0 %2796
      %2798 = vrot.lane.b32.xlu0 %v2356, 16
      %v2799 = vpop.permute.xlu0 %2798
      %2800 = vrot.lane.b32.xlu0 %v2358, 16
      %v2801 = vpop.permute.xlu0 %2800
      %2802 = vrot.lane.b32.xlu0 %v2361, 16
      %v2803 = vpop.permute.xlu0 %2802
      %2804 = vrot.lane.b32.xlu0 %v2363, 16
      %v2805 = vpop.permute.xlu0 %2804
      %2806 = vrot.lane.b32.xlu0 %v2366, 16
      %v2807 = vpop.permute.xlu0 %2806
      %2808 = vrot.lane.b32.xlu0 %v2368, 16
      %v2809 = vpop.permute.xlu0 %2808
      %2810 = vrot.lane.b32.xlu0 %v2371, 16
      %v2811 = vpop.permute.xlu0 %2810
      %2812 = vrot.lane.b32.xlu0 %v2373, 16
      %v2813 = vpop.permute.xlu0 %2812
      %2814 = vrot.lane.b32.xlu0 %v2376, 16
      %v2815 = vpop.permute.xlu0 %2814
      %2816 = vrot.lane.b32.xlu0 %v2378, 16
      %v2817 = vpop.permute.xlu0 %2816
      %2818 = vrot.lane.b32.xlu0 %v2381, 16
      %v2819 = vpop.permute.xlu0 %2818
      %2820 = vrot.lane.b32.xlu0 %v2383, 16
      %v2821 = vpop.permute.xlu0 %2820
      %2822 = vrot.lane.b32.xlu0 %v2386, 16
      %v2823 = vpop.permute.xlu0 %2822
      %2824 = vrot.lane.b32.xlu0 %v2388, 16
      %v2825 = vpop.permute.xlu0 %2824
      %2826 = vrot.lane.b32.xlu0 %v2391, 16
      %v2827 = vpop.permute.xlu0 %2826
      %2828 = vrot.lane.b32.xlu0 %v2393, 16
      %v2829 = vpop.permute.xlu0 %2828
      %2830 = vrot.lane.b32.xlu0 %v2767, 16
      %v2831 = vpop.permute.xlu0 %2830
      %2832 = vrot.lane.b32.xlu0 %v2769, 16
      %v2833 = vpop.permute.xlu0 %2832
      %v2866 = vrot.slane %v2255, 2
      %v2867 = vrot.slane %v2256, 2
      %v2868 = vsel %vm686, %v2866, %v2867
      %v2869 = vrot.slane %v2257, 2
      %v2870 = vsel %vm686, %v2867, %v2869
      %2871 = vrot.lane.b32.xlu0 %v2497, 20
      %v2872 = vpop.permute.xlu0 %2871
      %2873 = vrot.lane.b32.xlu0 %v2499, 20
      %v2874 = vpop.permute.xlu0 %2873
      %2875 = vrot.lane.b32.xlu0 %v2502, 20
      %v2876 = vpop.permute.xlu0 %2875
      %2877 = vrot.lane.b32.xlu0 %v2504, 20
      %v2878 = vpop.permute.xlu0 %2877
      %2879 = vrot.lane.b32.xlu0 %v2507, 20
      %v2880 = vpop.permute.xlu0 %2879
      %2881 = vrot.lane.b32.xlu0 %v2509, 20
      %v2882 = vpop.permute.xlu0 %2881
      %2883 = vrot.lane.b32.xlu0 %v2512, 20
      %v2884 = vpop.permute.xlu0 %2883
      %2885 = vrot.lane.b32.xlu0 %v2514, 20
      %v2886 = vpop.permute.xlu0 %2885
      %2887 = vrot.lane.b32.xlu0 %v2517, 20
      %v2888 = vpop.permute.xlu0 %2887
      %2889 = vrot.lane.b32.xlu0 %v2519, 20
      %v2890 = vpop.permute.xlu0 %2889
      %2891 = vrot.lane.b32.xlu0 %v2522, 20
      %v2892 = vpop.permute.xlu0 %2891
      %2893 = vrot.lane.b32.xlu0 %v2524, 20
      %v2894 = vpop.permute.xlu0 %2893
      %2895 = vrot.lane.b32.xlu0 %v2527, 20
      %v2896 = vpop.permute.xlu0 %2895
      %2897 = vrot.lane.b32.xlu0 %v2529, 20
      %v2898 = vpop.permute.xlu0 %2897
      %2899 = vrot.lane.b32.xlu0 %v2532, 20
      %v2900 = vpop.permute.xlu0 %2899
      %2901 = vrot.lane.b32.xlu0 %v2534, 20
      %v2902 = vpop.permute.xlu0 %2901
      %2903 = vrot.lane.b32.xlu0 %v2537, 20
      %v2904 = vpop.permute.xlu0 %2903
      %2905 = vrot.lane.b32.xlu0 %v2539, 20
      %v2906 = vpop.permute.xlu0 %2905
      %2907 = vrot.lane.b32.xlu0 %v2542, 20
      %v2908 = vpop.permute.xlu0 %2907
      %2909 = vrot.lane.b32.xlu0 %v2544, 20
      %v2910 = vpop.permute.xlu0 %2909
      %2911 = vrot.lane.b32.xlu0 %v2547, 20
      %v2912 = vpop.permute.xlu0 %2911
      %2913 = vrot.lane.b32.xlu0 %v2549, 20
      %v2914 = vpop.permute.xlu0 %2913
      %2915 = vrot.lane.b32.xlu0 %v2552, 20
      %v2916 = vpop.permute.xlu0 %2915
      %2917 = vrot.lane.b32.xlu0 %v2554, 20
      %v2918 = vpop.permute.xlu0 %2917
      %2919 = vrot.lane.b32.xlu0 %v2557, 20
      %v2920 = vpop.permute.xlu0 %2919
      %2921 = vrot.lane.b32.xlu0 %v2559, 20
      %v2922 = vpop.permute.xlu0 %2921
      %2923 = vrot.lane.b32.xlu0 %v2562, 20
      %v2924 = vpop.permute.xlu0 %2923
      %2925 = vrot.lane.b32.xlu0 %v2564, 20
      %v2926 = vpop.permute.xlu0 %2925
      %2927 = vrot.lane.b32.xlu0 %v2567, 20
      %v2928 = vpop.permute.xlu0 %2927
      %2929 = vrot.lane.b32.xlu0 %v2569, 20
      %v2930 = vpop.permute.xlu0 %2929
      %2931 = vrot.lane.b32.xlu0 %v2868, 20
      %v2932 = vpop.permute.xlu0 %2931
      %2933 = vrot.lane.b32.xlu0 %v2870, 20
      %v2934 = vpop.permute.xlu0 %2933
      %2969 = vrot.lane.b32.xlu0 %v2213, 24
      %v2970 = vpop.permute.xlu0 %2969
      %2971 = vrot.lane.b32.xlu0 %v2214, 24
      %v2972 = vpop.permute.xlu0 %2971
      %2973 = vrot.lane.b32.xlu0 %v2216, 24
      %v2974 = vpop.permute.xlu0 %2973
      %2975 = vrot.lane.b32.xlu0 %v2217, 24
      %v2976 = vpop.permute.xlu0 %2975
      %2977 = vrot.lane.b32.xlu0 %v2219, 24
      %v2978 = vpop.permute.xlu0 %2977
      %2979 = vrot.lane.b32.xlu0 %v2220, 24
      %v2980 = vpop.permute.xlu0 %2979
      %2981 = vrot.lane.b32.xlu0 %v2222, 24
      %v2982 = vpop.permute.xlu0 %2981
      %2983 = vrot.lane.b32.xlu0 %v2223, 24
      %v2984 = vpop.permute.xlu0 %2983
      %2985 = vrot.lane.b32.xlu0 %v2225, 24
      %v2986 = vpop.permute.xlu0 %2985
      %2987 = vrot.lane.b32.xlu0 %v2226, 24
      %v2988 = vpop.permute.xlu0 %2987
      %2989 = vrot.lane.b32.xlu0 %v2228, 24
      %v2990 = vpop.permute.xlu0 %2989
      %2991 = vrot.lane.b32.xlu0 %v2229, 24
      %v2992 = vpop.permute.xlu0 %2991
      %2993 = vrot.lane.b32.xlu0 %v2231, 24
      %v2994 = vpop.permute.xlu0 %2993
      %2995 = vrot.lane.b32.xlu0 %v2232, 24
      %v2996 = vpop.permute.xlu0 %2995
      %2997 = vrot.lane.b32.xlu0 %v2234, 24
      %v2998 = vpop.permute.xlu0 %2997
      %2999 = vrot.lane.b32.xlu0 %v2235, 24
      %v3000 = vpop.permute.xlu0 %2999
      %3001 = vrot.lane.b32.xlu0 %v2237, 24
      %v3002 = vpop.permute.xlu0 %3001
      %3003 = vrot.lane.b32.xlu0 %v2238, 24
      %v3004 = vpop.permute.xlu0 %3003
      %3005 = vrot.lane.b32.xlu0 %v2240, 24
      %v3006 = vpop.permute.xlu0 %3005
      %3007 = vrot.lane.b32.xlu0 %v2241, 24
      %v3008 = vpop.permute.xlu0 %3007
      %3009 = vrot.lane.b32.xlu0 %v2243, 24
      %v3010 = vpop.permute.xlu0 %3009
      %3011 = vrot.lane.b32.xlu0 %v2244, 24
      %v3012 = vpop.permute.xlu0 %3011
      %3013 = vrot.lane.b32.xlu0 %v2246, 24
      %v3014 = vpop.permute.xlu0 %3013
      %3015 = vrot.lane.b32.xlu0 %v2247, 24
      %v3016 = vpop.permute.xlu0 %3015
      %3017 = vrot.lane.b32.xlu0 %v2249, 24
      %v3018 = vpop.permute.xlu0 %3017
      %3019 = vrot.lane.b32.xlu0 %v2250, 24
      %v3020 = vpop.permute.xlu0 %3019
      %3021 = vrot.lane.b32.xlu0 %v2252, 24
      %v3022 = vpop.permute.xlu0 %3021
      %3023 = vrot.lane.b32.xlu0 %v2253, 24
      %v3024 = vpop.permute.xlu0 %3023
      %3025 = vrot.lane.b32.xlu0 %v2255, 24
      %v3026 = vpop.permute.xlu0 %3025
      %3027 = vrot.lane.b32.xlu0 %v2256, 24
      %v3028 = vpop.permute.xlu0 %3027
      %3029 = vrot.lane.b32.xlu0 %v2258, 24
      %v3030 = vpop.permute.xlu0 %3029
      %3031 = vrot.lane.b32.xlu0 %v2259, 24
      %v3032 = vpop.permute.xlu0 %3031
      %v3066 = vrot.slane %v2258, 1
      %v3067 = vrot.slane %v2259, 1
      %v3068 = vsel %vm487, %v3066, %v3067
      %v3069 = vrot.slane %v2260, 1
      %v3070 = vsel %vm487, %v3067, %v3069
      %3071 = vrot.lane.b32.xlu0 %v2326, 28
      %v3072 = vpop.permute.xlu0 %3071
      %3073 = vrot.lane.b32.xlu0 %v2328, 28
      %v3074 = vpop.permute.xlu0 %3073
      %3075 = vrot.lane.b32.xlu0 %v2331, 28
      %v3076 = vpop.permute.xlu0 %3075
      %3077 = vrot.lane.b32.xlu0 %v2333, 28
      %v3078 = vpop.permute.xlu0 %3077
      %3079 = vrot.lane.b32.xlu0 %v2336, 28
      %v3080 = vpop.permute.xlu0 %3079
      %3081 = vrot.lane.b32.xlu0 %v2338, 28
      %v3082 = vpop.permute.xlu0 %3081
      %3083 = vrot.lane.b32.xlu0 %v2341, 28
      %v3084 = vpop.permute.xlu0 %3083
      %3085 = vrot.lane.b32.xlu0 %v2343, 28
      %v3086 = vpop.permute.xlu0 %3085
      %3087 = vrot.lane.b32.xlu0 %v2346, 28
      %v3088 = vpop.permute.xlu0 %3087
      %3089 = vrot.lane.b32.xlu0 %v2348, 28
      %v3090 = vpop.permute.xlu0 %3089
      %3091 = vrot.lane.b32.xlu0 %v2351, 28
      %v3092 = vpop.permute.xlu0 %3091
      %3093 = vrot.lane.b32.xlu0 %v2353, 28
      %v3094 = vpop.permute.xlu0 %3093
      %3095 = vrot.lane.b32.xlu0 %v2356, 28
      %v3096 = vpop.permute.xlu0 %3095
      %3097 = vrot.lane.b32.xlu0 %v2358, 28
      %v3098 = vpop.permute.xlu0 %3097
      %3099 = vrot.lane.b32.xlu0 %v2361, 28
      %v3100 = vpop.permute.xlu0 %3099
      %3101 = vrot.lane.b32.xlu0 %v2363, 28
      %v3102 = vpop.permute.xlu0 %3101
      %3103 = vrot.lane.b32.xlu0 %v2366, 28
      %v3104 = vpop.permute.xlu0 %3103
      %3105 = vrot.lane.b32.xlu0 %v2368, 28
      %v3106 = vpop.permute.xlu0 %3105
      %3107 = vrot.lane.b32.xlu0 %v2371, 28
      %v3108 = vpop.permute.xlu0 %3107
      %3109 = vrot.lane.b32.xlu0 %v2373, 28
      %v3110 = vpop.permute.xlu0 %3109
      %3111 = vrot.lane.b32.xlu0 %v2376, 28
      %v3112 = vpop.permute.xlu0 %3111
      %3113 = vrot.lane.b32.xlu0 %v2378, 28
      %v3114 = vpop.permute.xlu0 %3113
      %3115 = vrot.lane.b32.xlu0 %v2381, 28
      %v3116 = vpop.permute.xlu0 %3115
      %3117 = vrot.lane.b32.xlu0 %v2383, 28
      %v3118 = vpop.permute.xlu0 %3117
      %3119 = vrot.lane.b32.xlu0 %v2386, 28
      %v3120 = vpop.permute.xlu0 %3119
      %3121 = vrot.lane.b32.xlu0 %v2388, 28
      %v3122 = vpop.permute.xlu0 %3121
      %3123 = vrot.lane.b32.xlu0 %v2391, 28
      %v3124 = vpop.permute.xlu0 %3123
      %3125 = vrot.lane.b32.xlu0 %v2393, 28
      %v3126 = vpop.permute.xlu0 %3125
      %3127 = vrot.lane.b32.xlu0 %v2767, 28
      %v3128 = vpop.permute.xlu0 %3127
      %3129 = vrot.lane.b32.xlu0 %v2769, 28
      %v3130 = vpop.permute.xlu0 %3129
      %3131 = vrot.lane.b32.xlu0 %v3068, 28
      %v3132 = vpop.permute.xlu0 %3131
      %3133 = vrot.lane.b32.xlu0 %v3070, 28
      %v3134 = vpop.permute.xlu0 %3133
      %v3167 = vrot.slane %v2258, 2
      %v3168 = vrot.slane %v2259, 2
      %v3169 = vsel %vm686, %v3167, %v3168
      %v3170 = vrot.slane %v2260, 2
      %v3171 = vsel %vm686, %v3168, %v3170
      %3172 = vrot.lane.b32.xlu0 %v2502, 32
      %v3173 = vpop.permute.xlu0 %3172
      %3174 = vrot.lane.b32.xlu0 %v2504, 32
      %v3175 = vpop.permute.xlu0 %3174
      %3176 = vrot.lane.b32.xlu0 %v2507, 32
      %v3177 = vpop.permute.xlu0 %3176
      %3178 = vrot.lane.b32.xlu0 %v2509, 32
      %v3179 = vpop.permute.xlu0 %3178
      %3180 = vrot.lane.b32.xlu0 %v2512, 32
      %v3181 = vpop.permute.xlu0 %3180
      %3182 = vrot.lane.b32.xlu0 %v2514, 32
      %v3183 = vpop.permute.xlu0 %3182
      %3184 = vrot.lane.b32.xlu0 %v2517, 32
      %v3185 = vpop.permute.xlu0 %3184
      %3186 = vrot.lane.b32.xlu0 %v2519, 32
      %v3187 = vpop.permute.xlu0 %3186
      %3188 = vrot.lane.b32.xlu0 %v2522, 32
      %v3189 = vpop.permute.xlu0 %3188
      %3190 = vrot.lane.b32.xlu0 %v2524, 32
      %v3191 = vpop.permute.xlu0 %3190
      %3192 = vrot.lane.b32.xlu0 %v2527, 32
      %v3193 = vpop.permute.xlu0 %3192
      %3194 = vrot.lane.b32.xlu0 %v2529, 32
      %v3195 = vpop.permute.xlu0 %3194
      %3196 = vrot.lane.b32.xlu0 %v2532, 32
      %v3197 = vpop.permute.xlu0 %3196
      %3198 = vrot.lane.b32.xlu0 %v2534, 32
      %v3199 = vpop.permute.xlu0 %3198
      %3200 = vrot.lane.b32.xlu0 %v2537, 32
      %v3201 = vpop.permute.xlu0 %3200
      %3202 = vrot.lane.b32.xlu0 %v2539, 32
      %v3203 = vpop.permute.xlu0 %3202
      %3204 = vrot.lane.b32.xlu0 %v2542, 32
      %v3205 = vpop.permute.xlu0 %3204
      %3206 = vrot.lane.b32.xlu0 %v2544, 32
      %v3207 = vpop.permute.xlu0 %3206
      %3208 = vrot.lane.b32.xlu0 %v2547, 32
      %v3209 = vpop.permute.xlu0 %3208
      %3210 = vrot.lane.b32.xlu0 %v2549, 32
      %v3211 = vpop.permute.xlu0 %3210
      %3212 = vrot.lane.b32.xlu0 %v2552, 32
      %v3213 = vpop.permute.xlu0 %3212
      %3214 = vrot.lane.b32.xlu0 %v2554, 32
      %v3215 = vpop.permute.xlu0 %3214
      %3216 = vrot.lane.b32.xlu0 %v2557, 32
      %v3217 = vpop.permute.xlu0 %3216
      %3218 = vrot.lane.b32.xlu0 %v2559, 32
      %v3219 = vpop.permute.xlu0 %3218
      %3220 = vrot.lane.b32.xlu0 %v2562, 32
      %v3221 = vpop.permute.xlu0 %3220
      %3222 = vrot.lane.b32.xlu0 %v2564, 32
      %v3223 = vpop.permute.xlu0 %3222
      %3224 = vrot.lane.b32.xlu0 %v2567, 32
      %v3225 = vpop.permute.xlu0 %3224
      %3226 = vrot.lane.b32.xlu0 %v2569, 32
      %v3227 = vpop.permute.xlu0 %3226
      %3228 = vrot.lane.b32.xlu0 %v2868, 32
      %v3229 = vpop.permute.xlu0 %3228
      %3230 = vrot.lane.b32.xlu0 %v2870, 32
      %v3231 = vpop.permute.xlu0 %3230
      %3232 = vrot.lane.b32.xlu0 %v3169, 32
      %v3233 = vpop.permute.xlu0 %3232
      %3234 = vrot.lane.b32.xlu0 %v3171, 32
      %v3235 = vpop.permute.xlu0 %3234
      %v3268 = vsel %vm293, %v2207, %v2395
      %v3269 = vsel %vm293, %v2208, %v2397
      %v3270 = vsel %vm293, %v2210, %v2399
      %v3271 = vsel %vm293, %v2211, %v2401
      %v3272 = vsel %vm293, %v2213, %v2403
      %v3273 = vsel %vm293, %v2214, %v2405
      %v3274 = vsel %vm293, %v2216, %v2407
      %v3275 = vsel %vm293, %v2217, %v2409
      %v3276 = vsel %vm293, %v2219, %v2411
      %v3277 = vsel %vm293, %v2220, %v2413
      %v3278 = vsel %vm293, %v2222, %v2415
      %v3279 = vsel %vm293, %v2223, %v2417
      %v3280 = vsel %vm293, %v2225, %v2419
      %v3281 = vsel %vm293, %v2226, %v2421
      %v3282 = vsel %vm293, %v2228, %v2423
      %v3283 = vsel %vm293, %v2229, %v2425
      %v3284 = vsel %vm293, %v2231, %v2427
      %v3285 = vsel %vm293, %v2232, %v2429
      %v3286 = vsel %vm293, %v2234, %v2431
      %v3287 = vsel %vm293, %v2235, %v2433
      %v3288 = vsel %vm293, %v2237, %v2435
      %v3289 = vsel %vm293, %v2238, %v2437
      %v3290 = vsel %vm293, %v2240, %v2439
      %v3291 = vsel %vm293, %v2241, %v2441
      %v3292 = vsel %vm293, %v2243, %v2443
      %v3293 = vsel %vm293, %v2244, %v2445
      %v3294 = vsel %vm293, %v2246, %v2447
      %v3295 = vsel %vm293, %v2247, %v2449
      %v3296 = vsel %vm293, %v2249, %v2451
      %v3297 = vsel %vm293, %v2250, %v2453
      %v3298 = vsel %vm293, %v2252, %v2455
      %v3299 = vsel %vm293, %v2253, %v2457
      %v3300 = vsel %vm1595, %v3268, %v2571
      %v3301 = vsel %vm1595, %v3269, %v2573
      %v3302 = vsel %vm1595, %v3270, %v2575
      %v3303 = vsel %vm1595, %v3271, %v2577
      %v3304 = vsel %vm1595, %v3272, %v2579
      %v3305 = vsel %vm1595, %v3273, %v2581
      %v3306 = vsel %vm1595, %v3274, %v2583
      %v3307 = vsel %vm1595, %v3275, %v2585
      %v3308 = vsel %vm1595, %v3276, %v2587
      %v3309 = vsel %vm1595, %v3277, %v2589
      %v3310 = vsel %vm1595, %v3278, %v2591
      %v3311 = vsel %vm1595, %v3279, %v2593
      %v3312 = vsel %vm1595, %v3280, %v2595
      %v3313 = vsel %vm1595, %v3281, %v2597
      %v3314 = vsel %vm1595, %v3282, %v2599
      %v3315 = vsel %vm1595, %v3283, %v2601
      %v3316 = vsel %vm1595, %v3284, %v2603
      %v3317 = vsel %vm1595, %v3285, %v2605
      %v3318 = vsel %vm1595, %v3286, %v2607
      %v3319 = vsel %vm1595, %v3287, %v2609
      %v3320 = vsel %vm1595, %v3288, %v2611
      %v3321 = vsel %vm1595, %v3289, %v2613
      %v3322 = vsel %vm1595, %v3290, %v2615
      %v3323 = vsel %vm1595, %v3291, %v2617
      %v3324 = vsel %vm1595, %v3292, %v2619
      %v3325 = vsel %vm1595, %v3293, %v2621
      %v3326 = vsel %vm1595, %v3294, %v2623
      %v3327 = vsel %vm1595, %v3295, %v2625
      %v3328 = vsel %vm1595, %v3296, %v2627
      %v3329 = vsel %vm1595, %v3297, %v2629
      %v3330 = vsel %vm1595, %v3298, %v2631
      %v3331 = vsel %vm1595, %v3299, %v2633
      %v3332 = vsel %vm1632, %v3300, %v2669
      %v3333 = vsel %vm1632, %v3301, %v2671
      %v3334 = vsel %vm1632, %v3302, %v2673
      %v3335 = vsel %vm1632, %v3303, %v2675
      %v3336 = vsel %vm1632, %v3304, %v2677
      %v3337 = vsel %vm1632, %v3305, %v2679
      %v3338 = vsel %vm1632, %v3306, %v2681
      %v3339 = vsel %vm1632, %v3307, %v2683
      %v3340 = vsel %vm1632, %v3308, %v2685
      %v3341 = vsel %vm1632, %v3309, %v2687
      %v3342 = vsel %vm1632, %v3310, %v2689
      %v3343 = vsel %vm1632, %v3311, %v2691
      %v3344 = vsel %vm1632, %v3312, %v2693
      %v3345 = vsel %vm1632, %v3313, %v2695
      %v3346 = vsel %vm1632, %v3314, %v2697
      %v3347 = vsel %vm1632, %v3315, %v2699
      %v3348 = vsel %vm1632, %v3316, %v2701
      %v3349 = vsel %vm1632, %v3317, %v2703
      %v3350 = vsel %vm1632, %v3318, %v2705
      %v3351 = vsel %vm1632, %v3319, %v2707
      %v3352 = vsel %vm1632, %v3320, %v2709
      %v3353 = vsel %vm1632, %v3321, %v2711
      %v3354 = vsel %vm1632, %v3322, %v2713
      %v3355 = vsel %vm1632, %v3323, %v2715
      %v3356 = vsel %vm1632, %v3324, %v2717
      %v3357 = vsel %vm1632, %v3325, %v2719
      %v3358 = vsel %vm1632, %v3326, %v2721
      %v3359 = vsel %vm1632, %v3327, %v2723
      %v3360 = vsel %vm1632, %v3328, %v2725
      %v3361 = vsel %vm1632, %v3329, %v2727
      %v3362 = vsel %vm1632, %v3330, %v2729
      %v3363 = vsel %vm1632, %v3331, %v2731
      %v3364 = vsel %vm1669, %v3332, %v2771
      %v3365 = vsel %vm1669, %v3333, %v2773
      %v3366 = vsel %vm1669, %v3334, %v2775
      %v3367 = vsel %vm1669, %v3335, %v2777
      %v3368 = vsel %vm1669, %v3336, %v2779
      %v3369 = vsel %vm1669, %v3337, %v2781
      %v3370 = vsel %vm1669, %v3338, %v2783
      %v3371 = vsel %vm1669, %v3339, %v2785
      %v3372 = vsel %vm1669, %v3340, %v2787
      %v3373 = vsel %vm1669, %v3341, %v2789
      %v3374 = vsel %vm1669, %v3342, %v2791
      %v3375 = vsel %vm1669, %v3343, %v2793
      %v3376 = vsel %vm1669, %v3344, %v2795
      %v3377 = vsel %vm1669, %v3345, %v2797
      %v3378 = vsel %vm1669, %v3346, %v2799
      %v3379 = vsel %vm1669, %v3347, %v2801
      %v3380 = vsel %vm1669, %v3348, %v2803
      %v3381 = vsel %vm1669, %v3349, %v2805
      %v3382 = vsel %vm1669, %v3350, %v2807
      %v3383 = vsel %vm1669, %v3351, %v2809
      %v3384 = vsel %vm1669, %v3352, %v2811
      %v3385 = vsel %vm1669, %v3353, %v2813
      %v3386 = vsel %vm1669, %v3354, %v2815
      %v3387 = vsel %vm1669, %v3355, %v2817
      %v3388 = vsel %vm1669, %v3356, %v2819
      %v3389 = vsel %vm1669, %v3357, %v2821
      %v3390 = vsel %vm1669, %v3358, %v2823
      %v3391 = vsel %vm1669, %v3359, %v2825
      %v3392 = vsel %vm1669, %v3360, %v2827
      %v3393 = vsel %vm1669, %v3361, %v2829
      %v3394 = vsel %vm1669, %v3362, %v2831
      %v3395 = vsel %vm1669, %v3363, %v2833
      %v3396 = vsel %vm1706, %v3364, %v2872
      %v3397 = vsel %vm1706, %v3365, %v2874
      %v3398 = vsel %vm1706, %v3366, %v2876
      %v3399 = vsel %vm1706, %v3367, %v2878
      %v3400 = vsel %vm1706, %v3368, %v2880
      %v3401 = vsel %vm1706, %v3369, %v2882
      %v3402 = vsel %vm1706, %v3370, %v2884
      %v3403 = vsel %vm1706, %v3371, %v2886
      %v3404 = vsel %vm1706, %v3372, %v2888
      %v3405 = vsel %vm1706, %v3373, %v2890
      %v3406 = vsel %vm1706, %v3374, %v2892
      %v3407 = vsel %vm1706, %v3375, %v2894
      %v3408 = vsel %vm1706, %v3376, %v2896
      %v3409 = vsel %vm1706, %v3377, %v2898
      %v3410 = vsel %vm1706, %v3378, %v2900
      %v3411 = vsel %vm1706, %v3379, %v2902
      %v3412 = vsel %vm1706, %v3380, %v2904
      %v3413 = vsel %vm1706, %v3381, %v2906
      %v3414 = vsel %vm1706, %v3382, %v2908
      %v3415 = vsel %vm1706, %v3383, %v2910
      %v3416 = vsel %vm1706, %v3384, %v2912
      %v3417 = vsel %vm1706, %v3385, %v2914
      %v3418 = vsel %vm1706, %v3386, %v2916
      %v3419 = vsel %vm1706, %v3387, %v2918
      %v3420 = vsel %vm1706, %v3388, %v2920
      %v3421 = vsel %vm1706, %v3389, %v2922
      %v3422 = vsel %vm1706, %v3390, %v2924
      %v3423 = vsel %vm1706, %v3391, %v2926
      %v3424 = vsel %vm1706, %v3392, %v2928
      %v3425 = vsel %vm1706, %v3393, %v2930
      %v3426 = vsel %vm1706, %v3394, %v2932
      %v3427 = vsel %vm1706, %v3395, %v2934
      %v3428 = vsel %vm1743, %v3396, %v2970
      %v3429 = vsel %vm1743, %v3397, %v2972
      %v3430 = vsel %vm1743, %v3398, %v2974
      %v3431 = vsel %vm1743, %v3399, %v2976
      %v3432 = vsel %vm1743, %v3400, %v2978
      %v3433 = vsel %vm1743, %v3401, %v2980
      %v3434 = vsel %vm1743, %v3402, %v2982
      %v3435 = vsel %vm1743, %v3403, %v2984
      %v3436 = vsel %vm1743, %v3404, %v2986
      %v3437 = vsel %vm1743, %v3405, %v2988
      %v3438 = vsel %vm1743, %v3406, %v2990
      %v3439 = vsel %vm1743, %v3407, %v2992
      %v3440 = vsel %vm1743, %v3408, %v2994
      %v3441 = vsel %vm1743, %v3409, %v2996
      %v3442 = vsel %vm1743, %v3410, %v2998
      %v3443 = vsel %vm1743, %v3411, %v3000
      %v3444 = vsel %vm1743, %v3412, %v3002
      %v3445 = vsel %vm1743, %v3413, %v3004
      %v3446 = vsel %vm1743, %v3414, %v3006
      %v3447 = vsel %vm1743, %v3415, %v3008
      %v3448 = vsel %vm1743, %v3416, %v3010
      %v3449 = vsel %vm1743, %v3417, %v3012
      %v3450 = vsel %vm1743, %v3418, %v3014
      %v3451 = vsel %vm1743, %v3419, %v3016
      %v3452 = vsel %vm1743, %v3420, %v3018
      %v3453 = vsel %vm1743, %v3421, %v3020
      %v3454 = vsel %vm1743, %v3422, %v3022
      %v3455 = vsel %vm1743, %v3423, %v3024
      %v3456 = vsel %vm1743, %v3424, %v3026
      %v3457 = vsel %vm1743, %v3425, %v3028
      %v3458 = vsel %vm1743, %v3426, %v3030
      %v3459 = vsel %vm1743, %v3427, %v3032
      %v3460 = vsel %vm1780, %v3428, %v3072
      %v3461 = vsel %vm1780, %v3429, %v3074
      %v3462 = vsel %vm1780, %v3430, %v3076
      %v3463 = vsel %vm1780, %v3431, %v3078
      %v3464 = vsel %vm1780, %v3432, %v3080
      %v3465 = vsel %vm1780, %v3433, %v3082
      %v3466 = vsel %vm1780, %v3434, %v3084
      %v3467 = vsel %vm1780, %v3435, %v3086
      %v3468 = vsel %vm1780, %v3436, %v3088
      %v3469 = vsel %vm1780, %v3437, %v3090
      %v3470 = vsel %vm1780, %v3438, %v3092
      %v3471 = vsel %vm1780, %v3439, %v3094
      %v3472 = vsel %vm1780, %v3440, %v3096
      %v3473 = vsel %vm1780, %v3441, %v3098
      %v3474 = vsel %vm1780, %v3442, %v3100
      %v3475 = vsel %vm1780, %v3443, %v3102
      %v3476 = vsel %vm1780, %v3444, %v3104
      %v3477 = vsel %vm1780, %v3445, %v3106
      %v3478 = vsel %vm1780, %v3446, %v3108
      %v3479 = vsel %vm1780, %v3447, %v3110
      %v3480 = vsel %vm1780, %v3448, %v3112
      %v3481 = vsel %vm1780, %v3449, %v3114
      %v3482 = vsel %vm1780, %v3450, %v3116
      %v3483 = vsel %vm1780, %v3451, %v3118
      %v3484 = vsel %vm1780, %v3452, %v3120
      %v3485 = vsel %vm1780, %v3453, %v3122
      %v3486 = vsel %vm1780, %v3454, %v3124
      %v3487 = vsel %vm1780, %v3455, %v3126
      %v3488 = vsel %vm1780, %v3456, %v3128
      %v3489 = vsel %vm1780, %v3457, %v3130
      %v3490 = vsel %vm1780, %v3458, %v3132
      %v3491 = vsel %vm1780, %v3459, %v3134
      %v3492 = vsel %vm1817, %v3460, %v3173
      %v3493 = vsel %vm1817, %v3461, %v3175
      %v3494 = vsel %vm1817, %v3462, %v3177
      %v3495 = vsel %vm1817, %v3463, %v3179
      %v3496 = vsel %vm1817, %v3464, %v3181
      %v3497 = vsel %vm1817, %v3465, %v3183
      %v3498 = vsel %vm1817, %v3466, %v3185
      %v3499 = vsel %vm1817, %v3467, %v3187
      %v3500 = vsel %vm1817, %v3468, %v3189
      %v3501 = vsel %vm1817, %v3469, %v3191
      %v3502 = vsel %vm1817, %v3470, %v3193
      %v3503 = vsel %vm1817, %v3471, %v3195
      %v3504 = vsel %vm1817, %v3472, %v3197
      %v3505 = vsel %vm1817, %v3473, %v3199
      %v3506 = vsel %vm1817, %v3474, %v3201
      %v3507 = vsel %vm1817, %v3475, %v3203
      %v3508 = vsel %vm1817, %v3476, %v3205
      %v3509 = vsel %vm1817, %v3477, %v3207
      %v3510 = vsel %vm1817, %v3478, %v3209
      %v3511 = vsel %vm1817, %v3479, %v3211
      %v3512 = vsel %vm1817, %v3480, %v3213
      %v3513 = vsel %vm1817, %v3481, %v3215
      %v3514 = vsel %vm1817, %v3482, %v3217
      %v3515 = vsel %vm1817, %v3483, %v3219
      %v3516 = vsel %vm1817, %v3484, %v3221
      %v3517 = vsel %vm1817, %v3485, %v3223
      %v3518 = vsel %vm1817, %v3486, %v3225
      %v3519 = vsel %vm1817, %v3487, %v3227
      %v3520 = vsel %vm1817, %v3488, %v3229
      %v3521 = vsel %vm1817, %v3489, %v3231
      %v3522 = vsel %vm1817, %v3490, %v3233
      %v3523 = vsel %vm1817, %v3491, %v3235
      %v3524 = vpack.c.bf16 %v3493, %v3492
      %v3525 = vpack.c.bf16 %v3495, %v3494
      %v3526 = vpack.c.bf16 %v3497, %v3496
      %v3527 = vpack.c.bf16 %v3499, %v3498
      %v3528 = vpack.c.bf16 %v3501, %v3500
      %v3529 = vpack.c.bf16 %v3503, %v3502
      %v3530 = vpack.c.bf16 %v3505, %v3504
      %v3531 = vpack.c.bf16 %v3507, %v3506
      %v3532 = vpack.c.bf16 %v3509, %v3508
      %v3533 = vpack.c.bf16 %v3511, %v3510
      %v3534 = vpack.c.bf16 %v3513, %v3512
      %v3535 = vpack.c.bf16 %v3515, %v3514
      %v3536 = vpack.c.bf16 %v3517, %v3516
      %v3537 = vpack.c.bf16 %v3519, %v3518
      %v3538 = vpack.c.bf16 %v3521, %v3520
      %v3539 = vpack.c.bf16 %v3523, %v3522
      %s3540 = smul.u32 %s251, 16
      %s3541 = scalar_lea.vmem %s238, %s3540
      %v3542 = vld [vmem:[%s3541] sm:$0xff]
      %v3543 = vld [vmem:[%s3541 + $0x8] sm:$0xff]
      %v3544 = vld [vmem:[%s3541 + $0x10] sm:$0xff]
      %v3545 = vld [vmem:[%s3541 + $0x18] sm:$0xff]
      %v3546 = vld [vmem:[%s3541 + $0x20] sm:$0xff]
      %v3547 = vld [vmem:[%s3541 + $0x28] sm:$0xff]
      %v3548 = vld [vmem:[%s3541 + $0x30] sm:$0xff]
      %v3549 = vld [vmem:[%s3541 + $0x38] sm:$0xff]
      %v3550 = vld [vmem:[%s3541 + $0x40] sm:$0xff]
      %v3551 = vld [vmem:[%s3541 + $0x48] sm:$0xff]
      %v3552 = vld [vmem:[%s3541 + $0x50] sm:$0xff]
      %v3553 = vld [vmem:[%s3541 + $0x58] sm:$0xff]
      %v3554 = vld [vmem:[%s3541 + $0x60] sm:$0xff]
      %v3555 = vld [vmem:[%s3541 + $0x68] sm:$0xff]
      %v3556 = vld [vmem:[%s3541 + $0x70] sm:$0xff]
      %v3557 = vld [vmem:[%s3541 + $0x78] sm:$0xff]
      %v3558 = vld [vmem:[%s3541 + $0x80] sm:$0xff]
      %v3559 = vld [vmem:[%s3541 + $0x88] sm:$0xff]
      %v3560 = vld [vmem:[%s3541 + $0x90] sm:$0xff]
      %v3561 = vld [vmem:[%s3541 + $0x98] sm:$0xff]
      %v3562 = vld [vmem:[%s3541 + $0xa0] sm:$0xff]
      %v3563 = vld [vmem:[%s3541 + $0xa8] sm:$0xff]
      %v3564 = vld [vmem:[%s3541 + $0xb0] sm:$0xff]
      %v3565 = vld [vmem:[%s3541 + $0xb8] sm:$0xff]
      %v3566 = vld [vmem:[%s3541 + $0xc0] sm:$0xff]
      %v3567 = vld [vmem:[%s3541 + $0xc8] sm:$0xff]
      %v3568 = vld [vmem:[%s3541 + $0xd0] sm:$0xff]
      %v3569 = vld [vmem:[%s3541 + $0xd8] sm:$0xff]
      %v3570 = vld [vmem:[%s3541 + $0xe0] sm:$0xff]
      %v3571 = vld [vmem:[%s3541 + $0xe8] sm:$0xff]
      %v3572 = vld [vmem:[%s3541 + $0xf0] sm:$0xff]
      %v3573 = vld [vmem:[%s3541 + $0xf8] sm:$0xff]
      %v3574 = vld [vmem:[%s4] sm:$0x1]
      %v3576 = vlaneseq
      %v3577 = vshrl.u32 %v3576, 7
      %v3578 = vsub.s32 0, %v3577
      %v3579 = vrot.slane %v3574, %v3578
      %v3586 = vunpack.c.l.b16 %v2261
      %v3587 = vunpack.c.l.b16 %v2262
      %v3588 = vunpack.c.l.b16 %v2263
      %v3589 = vunpack.c.l.b16 %v2264
      %v3590 = vunpack.c.l.b16 %v2265
      %v3591 = vpack.c.b16 %v3587, %v3586
      %v3592 = vpack.c.b16 %v3589, %v3588
      %v3593 = vpack.c.b16 %v3590, %v3590
      %v3597 = vsel %vm1894, %v3524, 0
      %v3600 = vsel %vm1894, %v3525, 0
      %v3603 = vsel %vm1894, %v3526, 0
      %v3606 = vsel %vm1894, %v3527, 0
      %v3609 = vsel %vm1894, %v3528, 0
      %v3612 = vsel %vm1894, %v3529, 0
      %v3615 = vsel %vm1894, %v3530, 0
      %v3618 = vsel %vm1894, %v3531, 0
      %v3621 = vsel %vm1894, %v3532, 0
      %v3624 = vsel %vm1894, %v3533, 0
      %v3627 = vsel %vm1894, %v3534, 0
      %v3630 = vsel %vm1894, %v3535, 0
      %v3633 = vsel %vm1894, %v3536, 0
      %v3636 = vsel %vm1894, %v3537, 0
      %v3639 = vsel %vm1894, %v3538, 0
      %v3642 = vsel %vm1894, %v3539, 0
      %v3645 = vsel %vm1949, %v3593, 0
      %3647 = vmatprep.subr.bf16.mxu0 0
      %3648 = vmatpush1.bf16.msra.mxu0 0
      %3649 = vmatprep.subr.bf16.mxu0 0
      %3650 = vmatpush1.bf16.msra.mxu0 0
      %3651 = vmatprep.subr.bf16.mxu0 0
      %3652 = vmatpush1.bf16.msra.mxu0 0
      %3653 = vmatprep.subr.bf16.mxu0 0
      %3654 = vmatpush1.bf16.msra.mxu0 0
      %3655 = vmatprep.subr.bf16.mxu0 0
      %3656 = vmatpush1.bf16.msra.mxu0 0
      %3657 = vmatprep.subr.bf16.mxu0 0
      %3658 = vmatpush1.bf16.msra.mxu0 %v3645
      %3659 = vmatprep.subr.bf16.mxu0 0
      %3660 = vmatpush1.bf16.msra.mxu0 %v3592
      %3661 = vmatprep.subr.bf16.mxu0 0
      %3662 = vmatpush1.bf16.msra.mxu0 %v3591
      %3663 = vmatprep.subr.bf16.mxu0 0
      %3664 = vmatpush2.bf16.msra.mxu0 0
      %3665 = vmatprep.subr.bf16.mxu0 0
      %3666 = vmatpush2.bf16.msra.mxu0 0
      %3667 = vmatprep.subr.bf16.mxu0 0
      %3668 = vmatpush2.bf16.msra.mxu0 0
      %3669 = vmatprep.subr.bf16.mxu0 0
      %3670 = vmatpush2.bf16.msra.mxu0 0
      %3671 = vmatprep.subr.bf16.mxu0 0
      %3672 = vmatpush2.bf16.msra.mxu0 0
      %3673 = vmatprep.subr.bf16.mxu0 0
      %3674 = vmatpush2.bf16.msra.mxu0 0
      %3675 = vmatprep.subr.bf16.mxu0 0
      %3676 = vmatpush2.bf16.msra.mxu0 0
      %3677 = vmatprep.subr.bf16.mxu0 0
      %3678 = vmatpush2.bf16.msra.mxu0 0
      %3679 = vmatprep.mubr.bf16.mxu0 0
      %3680 = vmatmul.mubr.bf16.gmra.mxu0 %v3597
      %v3681 = vpop.f32.mrf.mxu0
      %v3682 = vadd.f32 %v3579, %v3681
      %v3683 = vpop.f32.mrf.mxu0
      %v3684 = vpop.f32.mrf.mxu0
      %v3685 = vadd.f32 %v3579, %v3684
      %v3686 = vpop.f32.mrf.mxu0
      %3687 = vmatprep.mubr.bf16.mxu0 0
      %3688 = vmatmul.mubr.bf16.gmra.mxu0 %v3600
      %v3689 = vpop.f32.mrf.mxu0
      %v3690 = vadd.f32 %v3579, %v3689
      %v3691 = vpop.f32.mrf.mxu0
      %v3692 = vpop.f32.mrf.mxu0
      %v3693 = vadd.f32 %v3579, %v3692
      %v3694 = vpop.f32.mrf.mxu0
      %3695 = vmatprep.mubr.bf16.mxu0 0
      %3696 = vmatmul.mubr.bf16.gmra.mxu0 %v3603
      %v3697 = vpop.f32.mrf.mxu0
      %v3698 = vadd.f32 %v3579, %v3697
      %v3699 = vpop.f32.mrf.mxu0
      %v3700 = vpop.f32.mrf.mxu0
      %v3701 = vadd.f32 %v3579, %v3700
      %v3702 = vpop.f32.mrf.mxu0
      %3703 = vmatprep.mubr.bf16.mxu0 0
      %3704 = vmatmul.mubr.bf16.gmra.mxu0 %v3606
      %v3705 = vpop.f32.mrf.mxu0
      %v3706 = vadd.f32 %v3579, %v3705
      %v3707 = vpop.f32.mrf.mxu0
      %v3708 = vpop.f32.mrf.mxu0
      %v3709 = vadd.f32 %v3579, %v3708
      %v3710 = vpop.f32.mrf.mxu0
      %3711 = vmatprep.mubr.bf16.mxu0 0
      %3712 = vmatmul.mubr.bf16.gmra.mxu0 %v3609
      %v3713 = vpop.f32.mrf.mxu0
      %v3714 = vadd.f32 %v3579, %v3713
      %v3715 = vpop.f32.mrf.mxu0
      %v3716 = vpop.f32.mrf.mxu0
      %v3717 = vadd.f32 %v3579, %v3716
      %v3718 = vpop.f32.mrf.mxu0
      %3719 = vmatprep.mubr.bf16.mxu0 0
      %3720 = vmatmul.mubr.bf16.gmra.mxu0 %v3612
      %v3721 = vpop.f32.mrf.mxu0
      %v3722 = vadd.f32 %v3579, %v3721
      %v3723 = vpop.f32.mrf.mxu0
      %v3724 = vpop.f32.mrf.mxu0
      %v3725 = vadd.f32 %v3579, %v3724
      %v3726 = vpop.f32.mrf.mxu0
      %3727 = vmatprep.mubr.bf16.mxu0 0
      %3728 = vmatmul.mubr.bf16.gmra.mxu0 %v3615
      %v3729 = vpop.f32.mrf.mxu0
      %v3730 = vadd.f32 %v3579, %v3729
      %v3731 = vpop.f32.mrf.mxu0
      %v3732 = vpop.f32.mrf.mxu0
      %v3733 = vadd.f32 %v3579, %v3732
      %v3734 = vpop.f32.mrf.mxu0
      %3735 = vmatprep.mubr.bf16.mxu0 0
      %3736 = vmatmul.mubr.bf16.gmra.mxu0 %v3618
      %v3737 = vpop.f32.mrf.mxu0
      %v3738 = vadd.f32 %v3579, %v3737
      %v3739 = vpop.f32.mrf.mxu0
      %v3740 = vpop.f32.mrf.mxu0
      %v3741 = vadd.f32 %v3579, %v3740
      %v3742 = vpop.f32.mrf.mxu0
      %3743 = vmatprep.mubr.bf16.mxu0 0
      %3744 = vmatmul.mubr.bf16.gmra.mxu0 %v3621
      %v3745 = vpop.f32.mrf.mxu0
      %v3746 = vadd.f32 %v3579, %v3745
      %v3747 = vpop.f32.mrf.mxu0
      %v3748 = vpop.f32.mrf.mxu0
      %v3749 = vadd.f32 %v3579, %v3748
      %v3750 = vpop.f32.mrf.mxu0
      %3751 = vmatprep.mubr.bf16.mxu0 0
      %3752 = vmatmul.mubr.bf16.gmra.mxu0 %v3624
      %v3753 = vpop.f32.mrf.mxu0
      %v3754 = vadd.f32 %v3579, %v3753
      %v3755 = vpop.f32.mrf.mxu0
      %v3756 = vpop.f32.mrf.mxu0
      %v3757 = vadd.f32 %v3579, %v3756
      %v3758 = vpop.f32.mrf.mxu0
      %3759 = vmatprep.mubr.bf16.mxu0 0
      %3760 = vmatmul.mubr.bf16.gmra.mxu0 %v3627
      %v3761 = vpop.f32.mrf.mxu0
      %v3762 = vadd.f32 %v3579, %v3761
      %v3763 = vpop.f32.mrf.mxu0
      %v3764 = vpop.f32.mrf.mxu0
      %v3765 = vadd.f32 %v3579, %v3764
      %v3766 = vpop.f32.mrf.mxu0
      %3767 = vmatprep.mubr.bf16.mxu0 0
      %3768 = vmatmul.mubr.bf16.gmra.mxu0 %v3630
      %v3769 = vpop.f32.mrf.mxu0
      %v3770 = vadd.f32 %v3579, %v3769
      %v3771 = vpop.f32.mrf.mxu0
      %v3772 = vpop.f32.mrf.mxu0
      %v3773 = vadd.f32 %v3579, %v3772
      %v3774 = vpop.f32.mrf.mxu0
      %3775 = vmatprep.mubr.bf16.mxu0 0
      %3776 = vmatmul.mubr.bf16.gmra.mxu0 %v3633
      %v3777 = vpop.f32.mrf.mxu0
      %v3778 = vadd.f32 %v3579, %v3777
      %v3779 = vpop.f32.mrf.mxu0
      %v3780 = vpop.f32.mrf.mxu0
      %v3781 = vadd.f32 %v3579, %v3780
      %v3782 = vpop.f32.mrf.mxu0
      %3783 = vmatprep.mubr.bf16.mxu0 0
      %3784 = vmatmul.mubr.bf16.gmra.mxu0 %v3636
      %v3785 = vpop.f32.mrf.mxu0
      %v3786 = vadd.f32 %v3579, %v3785
      %v3787 = vpop.f32.mrf.mxu0
      %v3788 = vpop.f32.mrf.mxu0
      %v3789 = vadd.f32 %v3579, %v3788
      %v3790 = vpop.f32.mrf.mxu0
      %3791 = vmatprep.mubr.bf16.mxu0 0
      %3792 = vmatmul.mubr.bf16.gmra.mxu0 %v3639
      %v3793 = vpop.f32.mrf.mxu0
      %v3794 = vadd.f32 %v3579, %v3793
      %v3795 = vpop.f32.mrf.mxu0
      %v3796 = vpop.f32.mrf.mxu0
      %v3797 = vadd.f32 %v3579, %v3796
      %v3798 = vpop.f32.mrf.mxu0
      %3799 = vmatprep.mubr.bf16.mxu0 0
      %3800 = vmatmul.mubr.bf16.gmra.mxu0 %v3642
      %v3801 = vpop.f32.mrf.mxu0
      %v3802 = vadd.f32 %v3579, %v3801
      %v3803 = vpop.f32.mrf.mxu0
      %v3804 = vpop.f32.mrf.mxu0
      %v3805 = vadd.f32 %v3579, %v3804
      %v3806 = vpop.f32.mrf.mxu0
      %3807 = vdwg.mxu0
      %v3808 = vadd.f32 %v3682, %v3542
      %v3809 = vadd.f32 %v3685, %v3543
      %v3810 = vadd.f32 %v3690, %v3544
      %v3811 = vadd.f32 %v3693, %v3545
      %v3812 = vadd.f32 %v3698, %v3546
      %v3813 = vadd.f32 %v3701, %v3547
      %v3814 = vadd.f32 %v3706, %v3548
      %v3815 = vadd.f32 %v3709, %v3549
      %v3816 = vadd.f32 %v3714, %v3550
      %v3817 = vadd.f32 %v3717, %v3551
      %v3818 = vadd.f32 %v3722, %v3552
      %v3819 = vadd.f32 %v3725, %v3553
      %v3820 = vadd.f32 %v3730, %v3554
      %v3821 = vadd.f32 %v3733, %v3555
      %v3822 = vadd.f32 %v3738, %v3556
      %v3823 = vadd.f32 %v3741, %v3557
      %v3824 = vadd.f32 %v3746, %v3558
      %v3825 = vadd.f32 %v3749, %v3559
      %v3826 = vadd.f32 %v3754, %v3560
      %v3827 = vadd.f32 %v3757, %v3561
      %v3828 = vadd.f32 %v3762, %v3562
      %v3829 = vadd.f32 %v3765, %v3563
      %v3830 = vadd.f32 %v3770, %v3564
      %v3831 = vadd.f32 %v3773, %v3565
      %v3832 = vadd.f32 %v3778, %v3566
      %v3833 = vadd.f32 %v3781, %v3567
      %v3834 = vadd.f32 %v3786, %v3568
      %v3835 = vadd.f32 %v3789, %v3569
      %v3836 = vadd.f32 %v3794, %v3570
      %v3837 = vadd.f32 %v3797, %v3571
      %v3838 = vadd.f32 %v3802, %v3572
      %v3839 = vadd.f32 %v3805, %v3573
      %v3840 = vmax.f32 %v3808, 0.0
      %v3841 = vmax.f32 %v3809, 0.0
      %v3842 = vmax.f32 %v3810, 0.0
      %v3843 = vmax.f32 %v3811, 0.0
      %v3844 = vmax.f32 %v3812, 0.0
      %v3845 = vmax.f32 %v3813, 0.0
      %v3846 = vmax.f32 %v3814, 0.0
      %v3847 = vmax.f32 %v3815, 0.0
      %v3848 = vmax.f32 %v3816, 0.0
      %v3849 = vmax.f32 %v3817, 0.0
      %v3850 = vmax.f32 %v3818, 0.0
      %v3851 = vmax.f32 %v3819, 0.0
      %v3852 = vmax.f32 %v3820, 0.0
      %v3853 = vmax.f32 %v3821, 0.0
      %v3854 = vmax.f32 %v3822, 0.0
      %v3855 = vmax.f32 %v3823, 0.0
      %v3856 = vmax.f32 %v3824, 0.0
      %v3857 = vmax.f32 %v3825, 0.0
      %v3858 = vmax.f32 %v3826, 0.0
      %v3859 = vmax.f32 %v3827, 0.0
      %v3860 = vmax.f32 %v3828, 0.0
      %v3861 = vmax.f32 %v3829, 0.0
      %v3862 = vmax.f32 %v3830, 0.0
      %v3863 = vmax.f32 %v3831, 0.0
      %v3864 = vmax.f32 %v3832, 0.0
      %v3865 = vmax.f32 %v3833, 0.0
      %v3866 = vmax.f32 %v3834, 0.0
      %v3867 = vmax.f32 %v3835, 0.0
      %v3868 = vmax.f32 %v3836, 0.0
      %v3869 = vmax.f32 %v3837, 0.0
      %v3870 = vmax.f32 %v3838, 0.0
      %v3871 = vmax.f32 %v3839, 0.0
      %3872 = vst.msk [vmem:[%s248] sm:$0xff] %vm293, %v3840
      %3873 = vst.msk [vmem:[%s248 + $0x8] sm:$0xff] %vm293, %v3841
      %3874 = vst.msk [vmem:[%s248 + $0x10] sm:$0xff] %vm293, %v3842
      %3875 = vst.msk [vmem:[%s248 + $0x18] sm:$0xff] %vm293, %v3843
      %3876 = vst.msk [vmem:[%s248 + $0x20] sm:$0xff] %vm293, %v3844
      %3877 = vst.msk [vmem:[%s248 + $0x28] sm:$0xff] %vm293, %v3845
      %3878 = vst.msk [vmem:[%s248 + $0x30] sm:$0xff] %vm293, %v3846
      %3879 = vst.msk [vmem:[%s248 + $0x38] sm:$0xff] %vm293, %v3847
      %3880 = vst.msk [vmem:[%s248 + $0x40] sm:$0xff] %vm293, %v3848
      %3881 = vst.msk [vmem:[%s248 + $0x48] sm:$0xff] %vm293, %v3849
      %3882 = vst.msk [vmem:[%s248 + $0x50] sm:$0xff] %vm293, %v3850
      %3883 = vst.msk [vmem:[%s248 + $0x58] sm:$0xff] %vm293, %v3851
      %3884 = vst.msk [vmem:[%s248 + $0x60] sm:$0xff] %vm293, %v3852
      %3885 = vst.msk [vmem:[%s248 + $0x68] sm:$0xff] %vm293, %v3853
      %3886 = vst.msk [vmem:[%s248 + $0x70] sm:$0xff] %vm293, %v3854
      %3887 = vst.msk [vmem:[%s248 + $0x78] sm:$0xff] %vm293, %v3855
      %3888 = vst.msk [vmem:[%s248 + $0x80] sm:$0xff] %vm293, %v3856
      %3889 = vst.msk [vmem:[%s248 + $0x88] sm:$0xff] %vm293, %v3857
      %3890 = vst.msk [vmem:[%s248 + $0x90] sm:$0xff] %vm293, %v3858
      %3891 = vst.msk [vmem:[%s248 + $0x98] sm:$0xff] %vm293, %v3859
      %3892 = vst.msk [vmem:[%s248 + $0xa0] sm:$0xff] %vm293, %v3860
      %3893 = vst.msk [vmem:[%s248 + $0xa8] sm:$0xff] %vm293, %v3861
      %3894 = vst.msk [vmem:[%s248 + $0xb0] sm:$0xff] %vm293, %v3862
      %3895 = vst.msk [vmem:[%s248 + $0xb8] sm:$0xff] %vm293, %v3863
      %3896 = vst.msk [vmem:[%s248 + $0xc0] sm:$0xff] %vm293, %v3864
      %3897 = vst.msk [vmem:[%s248 + $0xc8] sm:$0xff] %vm293, %v3865
      %3898 = vst.msk [vmem:[%s248 + $0xd0] sm:$0xff] %vm293, %v3866
      %3899 = vst.msk [vmem:[%s248 + $0xd8] sm:$0xff] %vm293, %v3867
      %3900 = vst.msk [vmem:[%s248 + $0xe0] sm:$0xff] %vm293, %v3868
      %3901 = vst.msk [vmem:[%s248 + $0xe8] sm:$0xff] %vm293, %v3869
      %3902 = vst.msk [vmem:[%s248 + $0xf0] sm:$0xff] %vm293, %v3870
      %3903 = vst.msk [vmem:[%s248 + $0xf8] sm:$0xff] %vm293, %v3871
      %s3904 = smul.u32 16, %s21
      %p3905 = scmp.lt.s32.totalorder %s20, 1
      %s3906 = scalar_select %p3905, %s20, 1
      %p3907 = scmp.lt.s32.totalorder %s3904, 15
      %s3908 = scalar_select %p3907, %s3904, 15
      %s3909 = smul.addr %s3908, 2
      %s3910 = smul.addr %s3906, 32
      %s3911 = sadd.s32 %s3909, %s3910
      %s3912 = smul.addr %s3911, 8
      %s3913 = scalar_lea.vmem %s5, %s3912
      // Predicated region
      $region41: #{tpu_custom_call.1} parent=39 // pred_check
        %p3914 = pneg %p158
      $region42: #{tpu_custom_call.1} parent=39 // pred_check_branch
        %3916 = sbr.rel (%p3914) target = $region44
      $region43: #{tpu_custom_call.1} parent=39 // pred_region
        %s3917 = smul.u32 16, %s21
      $region44: #{tpu_custom_call.1} parent=39 // pred_fallthru
        _
    $region40: #{tpu_custom_call.1} parent=5 // pred_fallthru
      _
    %p3918 = scmp.le.s32.totalorder 2, %s11
    // Predicated region
    $region45: #{tpu_custom_call.1} parent=5 // pred_check
      %p3919 = pneg %p3918
    $region46: #{tpu_custom_call.1} parent=5 // pred_check_branch
      %3921 = sbr.rel (%p3919) target = $region48
    $region47: #{tpu_custom_call.1} parent=5 // pred_region
      %s3922 = ssub.s32 %s11, 2
      // Predicated region
      $region49: #{tpu_custom_call.1} parent=47 // pred_check
        %p3923 = pneg %p164
      $region50: #{tpu_custom_call.1} parent=47 // pred_check_branch
        %3925 = sbr.rel (%p3923) target = $region52
      $region51: #{tpu_custom_call.1} parent=47 // pred_region
        %s3926 = smul.u32 16, %s23
        %p3927 = scmp.lt.s32.totalorder %s22, 1
        %s3928 = scalar_select %p3927, %s22, 1
        %p3929 = scmp.lt.s32.totalorder %s3926, 15
        %s3930 = scalar_select %p3929, %s3926, 15
        %s3931 = smul.addr %s3930, 2
        %s3932 = smul.addr %s3928, 32
        %s3933 = sadd.s32 %s3931, %s3932
        %s3934 = smul.addr %s3933, 8
        %s3935 = scalar_lea.vmem %s5, %s3934
      $region52: #{tpu_custom_call.1} parent=47 // pred_fallthru
        _
    $region48: #{tpu_custom_call.1} parent=5 // pred_fallthru
      _
  $region6: #{tpu_custom_call.1} parent=0 // loop_footer
    %s15 = sadd.s32 1, %s11
  $region7: #{tpu_custom_call.1} parent=0 // loop_footer_branch
    %10 = sbr.rel target = $region3
  $region8: #{tpu_custom_call.1} parent=0 // loop_exit
    _

</llo_original>
